<compile_context>
chip_gen: v7x
topology: tpu7x:2x2x1
jax: 0.10.0
libtpu: 0.0.40
codegen_flags: <defaults>
</compile_context>

<pallas_src>
import jax
import jax.numpy as jnp
from jax.experimental import pallas as pl
from jax.experimental.pallas import tpu as pltpu

HIDDEN = 128                           # fixed by the PyTorch module
_LANE = 128                            # TPU lane width (last-dim alignment)
_SUBLANE = 8                           # f32 sublane height
_MAX_TM = 1024                         # per-step batch-tile cap
_VMEM_SOFT_BUDGET = 24 * 1024 * 1024   # headroom under the 32 MiB scoped limit


def autoencoder_kernel(x_ref,
                       w1_ref, b1_ref,
                       w2_ref, b2_ref,
                       w3_ref, b3_ref,
                       w4_ref, b4_ref,
                       out_ref):
    # All dots run on the MXU in bf16 with f32 accumulation; bias-add + ReLU
    # stay f32; each hidden activation is materialized directly in bf16.
    x = x_ref[...].astype(jnp.bfloat16)

    # encoder_hidden_layer + relu     [TM, IN] @ [IN, 128]
    h = jnp.dot(x, w1_ref[...], preferred_element_type=jnp.float32) + b1_ref[...]
    h = jnp.maximum(h, 0.0).astype(jnp.bfloat16)

    # encoder_output_layer + relu     [TM, 128] @ [128, 128]
    c = jnp.dot(h, w2_ref[...], preferred_element_type=jnp.float32) + b2_ref[...]
    c = jnp.maximum(c, 0.0).astype(jnp.bfloat16)

    # decoder_hidden_layer + relu     [TM, 128] @ [128, 128]
    d = jnp.dot(c, w3_ref[...], preferred_element_type=jnp.float32) + b3_ref[...]
    d = jnp.maximum(d, 0.0).astype(jnp.bfloat16)

    # decoder_output_layer + relu     [TM, 128] @ [128, IN]
    y = jnp.dot(d, w4_ref[...], preferred_element_type=jnp.float32) + b4_ref[...]
    out_ref[...] = jnp.maximum(y, 0.0).astype(out_ref.dtype)


def _round_up(x, m):
    return (x + m - 1) // m * m


def _tile_vmem_bytes(tm, in_feat):
    act = 2 * 2 * tm * in_feat * 4                   # double-buffered f32 x / out tiles
    inter = 3 * tm * HIDDEN * 2 + tm * in_feat * 4   # bf16 hiddens + f32 pre-store y
    wgt = 2 * (2 * in_feat * HIDDEN + 2 * HIDDEN * HIDDEN) + 4 * (3 * HIDDEN + in_feat)
    return act + inter + wgt


def _pick_tm(batch, in_feat):
    """Largest 128-multiple tile keeping >= 4 grid steps and fitting VMEM."""
    for cand in (1024, 512, 256, 128):
        if batch >= 4 * cand and _tile_vmem_bytes(cand, in_feat) <= _VMEM_SOFT_BUDGET:
            return cand
    # Small batch: a single sublane-aligned tile.
    return min(_round_up(max(batch, _SUBLANE), _SUBLANE), _MAX_TM)


def _build_call(tm, grid, batch_pad, in_pad, single_buffer_weights, cost):
    act_spec = pl.BlockSpec((tm, in_pad), lambda i: (i, 0))

    def resident(shape):
        # Grid-invariant operand: constant block index -> stays resident in
        # VMEM; one pipeline buffer is enough.
        if single_buffer_weights:
            return pl.BlockSpec(shape, lambda i: (0, 0),
                                pipeline_mode=pl.Buffered(1))
        return pl.BlockSpec(shape, lambda i: (0, 0))

    return pl.pallas_call(
        autoencoder_kernel,
        out_shape=jax.ShapeDtypeStruct((batch_pad, in_pad), jnp.float32),
        grid=grid,
        in_specs=[
            act_spec,
            resident((in_pad, HIDDEN)), resident((1, HIDDEN)),
            resident((HIDDEN, HIDDEN)), resident((1, HIDDEN)),
            resident((HIDDEN, HIDDEN)), resident((1, HIDDEN)),
            resident((HIDDEN, in_pad)), resident((1, in_pad)),
        ],
        out_specs=act_spec,
        compiler_params=pltpu.CompilerParams(
            dimension_semantics=("parallel",),
            vmem_limit_bytes=32 * 1024 * 1024),
        cost_estimate=cost,
    )


def autoencoder_forward(x, params):
    """x: [batch, input_shape] f32.  params: bf16 weights ([in,out]), f32 biases."""
    batch, in_feat = x.shape
    in_pad = _round_up(max(in_feat, _LANE), _LANE)
    tm = _pick_tm(batch, in_pad)
    batch_pad = _round_up(batch, tm)
    grid = (batch_pad // tm,)

    w1, b1 = params["w1"], params["b1"]
    w2, b2 = params["w2"], params["b2"]
    w3, b3 = params["w3"], params["b3"]
    w4, b4 = params["w4"], params["b4"]

    # Zero-pad feature axis to a lane-dense multiple of 128 (padded x columns /
    # w1 rows are zero => no contribution; padded w4/b4 columns are sliced off).
    if in_pad != in_feat:
        pf = in_pad - in_feat
        x = jnp.pad(x, ((0, 0), (0, pf)))
        w1 = jnp.pad(w1, ((0, pf), (0, 0)))
        w4 = jnp.pad(w4, ((0, 0), (0, pf)))
        b4 = jnp.pad(b4, ((0, 0), (0, pf)))
    if batch_pad != batch:
        x = jnp.pad(x, ((0, batch_pad - batch), (0, 0)))

    flops = 2 * batch_pad * (2 * in_pad * HIDDEN + 2 * HIDDEN * HIDDEN)
    bytes_accessed = (2 * (2 * in_pad * HIDDEN + 2 * HIDDEN * HIDDEN)   # bf16 weights
                      + 4 * (3 * HIDDEN + in_pad)                       # f32 biases
                      + 4 * 2 * batch_pad * in_pad)                     # f32 x + out
    cost = pl.CostEstimate(flops=flops, transcendentals=0,
                           bytes_accessed=bytes_accessed)

    args = (x, w1, b1, w2, b2, w3, b3, w4, b4)
    try:
        out = _build_call(tm, grid, batch_pad, in_pad, True, cost)(*args)
    except Exception:
        # Fallback if this JAX build rejects pipeline_mode / Buffered(1).
        out = _build_call(tm, grid, batch_pad, in_pad, False, cost)(*args)

    return out[:batch, :in_feat]


def init_params(key, input_shape):
    """Deterministic init. Weights stored as [in, out] (PyTorch W.T), bf16."""
    ks = jax.random.split(key, 8)

    def lin(kw, kb, fan_in, fan_out):
        # mimic PyTorch's uniform(-1/sqrt(fan_in), 1/sqrt(fan_in)) init
        bound = 1.0 / jnp.sqrt(jnp.float32(fan_in))
        w = jax.random.uniform(kw, (fan_in, fan_out), jnp.float32, -bound, bound)
        b = jax.random.uniform(kb, (1, fan_out), jnp.float32, -bound, bound)
        return w.astype(jnp.bfloat16), b  # bf16 weights, f32 biases

    w1, b1 = lin(ks[0], ks[1], input_shape, HIDDEN)
    w2, b2 = lin(ks[2], ks[3], HIDDEN, HIDDEN)
    w3, b3 = lin(ks[4], ks[5], HIDDEN, HIDDEN)
    w4, b4 = lin(ks[6], ks[7], HIDDEN, input_shape)
    return dict(w1=w1, b1=b1, w2=w2, b2=b2, w3=w3, b3=b3, w4=w4, b4=b4)


def reference_forward(x, p):
    """Pure-JAX reference using the same bf16-weight / f32-accumulate recipe."""
    def layer(a, w, b):
        z = jnp.dot(a.astype(jnp.bfloat16), w,
                    preferred_element_type=jnp.float32) + b
        return jnp.maximum(z, 0.0)

    h = layer(x, p["w1"], p["b1"])
    c = layer(h, p["w2"], p["b2"])
    d = layer(c, p["w3"], p["b3"])
    return layer(d, p["w4"], p["b4"])


if __name__ == "__main__":
    key = jax.random.PRNGKey(0)
    k_x, k_p, k_x2 = jax.random.split(key, 3)

    # Case 1: lane/sublane-aligned shapes (no padding path).
    input_shape, batch = 256, 256
    params = init_params(k_p, input_shape)
    x = jax.random.normal(k_x, (batch, input_shape), jnp.float32)

    out = jax.block_until_ready(autoencoder_forward(x, params))
    ref = reference_forward(x, params)
    assert out.shape == (batch, input_shape)
    assert jnp.allclose(out, ref, atol=1e-2, rtol=1e-2), "mismatch vs reference (aligned)"

    # Case 2: ragged shapes (odd batch, non-multiple-of-128 features) to
    # exercise the wrapper-side padding / slicing path.
    in2, nb2 = 200, 10
    params2 = init_params(jax.random.fold_in(k_p, 1), in2)
    x2 = jax.random.normal(k_x2, (nb2, in2), jnp.float32)

    out2 = jax.block_until_ready(autoencoder_forward(x2, params2))
    ref2 = reference_forward(x2, params2)
    assert out2.shape == (nb2, in2)
    assert jnp.allclose(out2, ref2, atol=1e-2, rtol=1e-2), "mismatch vs reference (ragged)"

    print("KERNEL_OK")
</pallas_src>

<mosaic_0001>
module attributes {stable_mosaic.version = 11 : i64} {
  func.func @autoencoder_kernel(%arg0: i32, %arg1: memref<256x256xf32, #tpu.memory_space<vmem>>, %arg2: memref<256x128xbf16, #tpu.memory_space<vmem>>, %arg3: memref<1x128xf32, #tpu.memory_space<vmem>>, %arg4: memref<128x128xbf16, #tpu.memory_space<vmem>>, %arg5: memref<1x128xf32, #tpu.memory_space<vmem>>, %arg6: memref<128x128xbf16, #tpu.memory_space<vmem>>, %arg7: memref<1x128xf32, #tpu.memory_space<vmem>>, %arg8: memref<128x256xbf16, #tpu.memory_space<vmem>>, %arg9: memref<1x256xf32, #tpu.memory_space<vmem>>, %arg10: memref<256x256xf32, #tpu.memory_space<vmem>>) attributes {dimension_semantics = [#tpu.dimension_semantics<parallel>], iteration_bounds = array<i64: 1>, scalar_prefetch = 0 : i64, scratch_operands = 0 : i64, tpu.core_type = #tpu.core_type<tc>, window_params = [{transform_indices = @transform_0, window_bounds = array<i64: 256, 256>}, {pipeline_mode = #tpu.pipeline_mode<synchronous>, transform_indices = @transform_1, window_bounds = array<i64: 256, 128>}, {pipeline_mode = #tpu.pipeline_mode<synchronous>, transform_indices = @transform_2, window_bounds = array<i64: 1, 128>}, {pipeline_mode = #tpu.pipeline_mode<synchronous>, transform_indices = @transform_3, window_bounds = array<i64: 128, 128>}, {pipeline_mode = #tpu.pipeline_mode<synchronous>, transform_indices = @transform_4, window_bounds = array<i64: 1, 128>}, {pipeline_mode = #tpu.pipeline_mode<synchronous>, transform_indices = @transform_5, window_bounds = array<i64: 128, 128>}, {pipeline_mode = #tpu.pipeline_mode<synchronous>, transform_indices = @transform_6, window_bounds = array<i64: 1, 128>}, {pipeline_mode = #tpu.pipeline_mode<synchronous>, transform_indices = @transform_7, window_bounds = array<i64: 128, 256>}, {pipeline_mode = #tpu.pipeline_mode<synchronous>, transform_indices = @transform_8, window_bounds = array<i64: 1, 256>}, {transform_indices = @transform_9, window_bounds = array<i64: 256, 256>}]} {
    %c0 = arith.constant 0 : index
    %c0_0 = arith.constant 0 : index
    %0 = vector.load %arg1[%c0, %c0_0] : memref<256x256xf32, #tpu.memory_space<vmem>>, vector<256x256xf32>
    %1 = arith.truncf %0 : vector<256x256xf32> to vector<256x256xbf16>
    %c0_1 = arith.constant 0 : index
    %c0_2 = arith.constant 0 : index
    %2 = vector.load %arg2[%c0_1, %c0_2] : memref<256x128xbf16, #tpu.memory_space<vmem>>, vector<256x128xbf16>
    %cst = arith.constant dense<0.000000e+00> : vector<256x128xf32>
    %3 = tpu.matmul %1, %2, %cst {dimension_numbers = #tpu.dot_dimension_numbers<[1], [0], [0], [1], [0, 0, 1, 1], [], []>} : vector<256x256xbf16>, vector<256x128xbf16>, vector<256x128xf32> -> vector<256x128xf32>
    %c0_3 = arith.constant 0 : index
    %c0_4 = arith.constant 0 : index
    %4 = vector.load %arg3[%c0_3, %c0_4] : memref<1x128xf32, #tpu.memory_space<vmem>>, vector<1x128xf32>
    %5 = vector.broadcast %4 : vector<1x128xf32> to vector<256x128xf32>
    %6 = arith.addf %3, %5 : vector<256x128xf32>
    %cst_5 = arith.constant 0.000000e+00 : f32
    %7 = vector.broadcast %cst_5 : f32 to vector<256x128xf32>
    %8 = arith.maximumf %6, %7 : vector<256x128xf32>
    %9 = arith.truncf %8 : vector<256x128xf32> to vector<256x128xbf16>
    %c0_6 = arith.constant 0 : index
    %c0_7 = arith.constant 0 : index
    %10 = vector.load %arg4[%c0_6, %c0_7] : memref<128x128xbf16, #tpu.memory_space<vmem>>, vector<128x128xbf16>
    %cst_8 = arith.constant dense<0.000000e+00> : vector<256x128xf32>
    %11 = tpu.matmul %9, %10, %cst_8 {dimension_numbers = #tpu.dot_dimension_numbers<[1], [0], [0], [1], [0, 0, 1, 1], [], []>} : vector<256x128xbf16>, vector<128x128xbf16>, vector<256x128xf32> -> vector<256x128xf32>
    %c0_9 = arith.constant 0 : index
    %c0_10 = arith.constant 0 : index
    %12 = vector.load %arg5[%c0_9, %c0_10] : memref<1x128xf32, #tpu.memory_space<vmem>>, vector<1x128xf32>
    %13 = vector.broadcast %12 : vector<1x128xf32> to vector<256x128xf32>
    %14 = arith.addf %11, %13 : vector<256x128xf32>
    %cst_11 = arith.constant 0.000000e+00 : f32
    %15 = vector.broadcast %cst_11 : f32 to vector<256x128xf32>
    %16 = arith.maximumf %14, %15 : vector<256x128xf32>
    %17 = arith.truncf %16 : vector<256x128xf32> to vector<256x128xbf16>
    %c0_12 = arith.constant 0 : index
    %c0_13 = arith.constant 0 : index
    %18 = vector.load %arg6[%c0_12, %c0_13] : memref<128x128xbf16, #tpu.memory_space<vmem>>, vector<128x128xbf16>
    %cst_14 = arith.constant dense<0.000000e+00> : vector<256x128xf32>
    %19 = tpu.matmul %17, %18, %cst_14 {dimension_numbers = #tpu.dot_dimension_numbers<[1], [0], [0], [1], [0, 0, 1, 1], [], []>} : vector<256x128xbf16>, vector<128x128xbf16>, vector<256x128xf32> -> vector<256x128xf32>
    %c0_15 = arith.constant 0 : index
    %c0_16 = arith.constant 0 : index
    %20 = vector.load %arg7[%c0_15, %c0_16] : memref<1x128xf32, #tpu.memory_space<vmem>>, vector<1x128xf32>
    %21 = vector.broadcast %20 : vector<1x128xf32> to vector<256x128xf32>
    %22 = arith.addf %19, %21 : vector<256x128xf32>
    %cst_17 = arith.constant 0.000000e+00 : f32
    %23 = vector.broadcast %cst_17 : f32 to vector<256x128xf32>
    %24 = arith.maximumf %22, %23 : vector<256x128xf32>
    %25 = arith.truncf %24 : vector<256x128xf32> to vector<256x128xbf16>
    %c0_18 = arith.constant 0 : index
    %c0_19 = arith.constant 0 : index
    %26 = vector.load %arg8[%c0_18, %c0_19] : memref<128x256xbf16, #tpu.memory_space<vmem>>, vector<128x256xbf16>
    %cst_20 = arith.constant dense<0.000000e+00> : vector<256x256xf32>
    %27 = tpu.matmul %25, %26, %cst_20 {dimension_numbers = #tpu.dot_dimension_numbers<[1], [0], [0], [1], [0, 0, 1, 1], [], []>} : vector<256x128xbf16>, vector<128x256xbf16>, vector<256x256xf32> -> vector<256x256xf32>
    %c0_21 = arith.constant 0 : index
    %c0_22 = arith.constant 0 : index
    %28 = vector.load %arg9[%c0_21, %c0_22] : memref<1x256xf32, #tpu.memory_space<vmem>>, vector<1x256xf32>
    %29 = vector.broadcast %28 : vector<1x256xf32> to vector<256x256xf32>
    %30 = arith.addf %27, %29 : vector<256x256xf32>
    %cst_23 = arith.constant 0.000000e+00 : f32
    %31 = vector.broadcast %cst_23 : f32 to vector<256x256xf32>
    %32 = arith.maximumf %30, %31 : vector<256x256xf32>
    %c0_24 = arith.constant 0 : index
    %c0_25 = arith.constant 0 : index
    %33 = vector.load %arg10[%c0_24, %c0_25] : memref<256x256xf32, #tpu.memory_space<vmem>>, vector<256x256xf32>
    tpu.vector_store %arg10[%c0_24, %c0_25], %32 {strides = array<i32>} : memref<256x256xf32, #tpu.memory_space<vmem>>, vector<256x256xf32>,
    return
  }
  func.func @transform_0(%arg0: i32) -> (i32, i32) {
    %c0_i32 = arith.constant 0 : i32
    %c0_i32_0 = arith.constant 0 : i32
    return %arg0, %c0_i32 : i32, i32
  }
  func.func @transform_1(%arg0: i32) -> (i32, i32) {
    %c0_i32 = arith.constant 0 : i32
    %c0_i32_0 = arith.constant 0 : i32
    %c0_i32_1 = arith.constant 0 : i32
    return %c0_i32, %c0_i32_0 : i32, i32
  }
  func.func @transform_2(%arg0: i32) -> (i32, i32) {
    %c0_i32 = arith.constant 0 : i32
    %c0_i32_0 = arith.constant 0 : i32
    %c0_i32_1 = arith.constant 0 : i32
    return %c0_i32, %c0_i32_0 : i32, i32
  }
  func.func @transform_3(%arg0: i32) -> (i32, i32) {
    %c0_i32 = arith.constant 0 : i32
    %c0_i32_0 = arith.constant 0 : i32
    %c0_i32_1 = arith.constant 0 : i32
    return %c0_i32, %c0_i32_0 : i32, i32
  }
  func.func @transform_4(%arg0: i32) -> (i32, i32) {
    %c0_i32 = arith.constant 0 : i32
    %c0_i32_0 = arith.constant 0 : i32
    %c0_i32_1 = arith.constant 0 : i32
    return %c0_i32, %c0_i32_0 : i32, i32
  }
  func.func @transform_5(%arg0: i32) -> (i32, i32) {
    %c0_i32 = arith.constant 0 : i32
    %c0_i32_0 = arith.constant 0 : i32
    %c0_i32_1 = arith.constant 0 : i32
    return %c0_i32, %c0_i32_0 : i32, i32
  }
  func.func @transform_6(%arg0: i32) -> (i32, i32) {
    %c0_i32 = arith.constant 0 : i32
    %c0_i32_0 = arith.constant 0 : i32
    %c0_i32_1 = arith.constant 0 : i32
    return %c0_i32, %c0_i32_0 : i32, i32
  }
  func.func @transform_7(%arg0: i32) -> (i32, i32) {
    %c0_i32 = arith.constant 0 : i32
    %c0_i32_0 = arith.constant 0 : i32
    %c0_i32_1 = arith.constant 0 : i32
    return %c0_i32, %c0_i32_0 : i32, i32
  }
  func.func @transform_8(%arg0: i32) -> (i32, i32) {
    %c0_i32 = arith.constant 0 : i32
    %c0_i32_0 = arith.constant 0 : i32
    %c0_i32_1 = arith.constant 0 : i32
    return %c0_i32, %c0_i32_0 : i32, i32
  }
  func.func @transform_9(%arg0: i32) -> (i32, i32) {
    %c0_i32 = arith.constant 0 : i32
    %c0_i32_0 = arith.constant 0 : i32
    return %arg0, %c0_i32 : i32, i32
  }
}

module attributes {stable_mosaic.version = 11 : i64} {
  func.func @autoencoder_kernel(%arg0: i32, %arg1: memref<256x256xf32, #tpu.memory_space<vmem>>, %arg2: memref<256x128xbf16, #tpu.memory_space<vmem>>, %arg3: memref<1x128xf32, #tpu.memory_space<vmem>>, %arg4: memref<128x128xbf16, #tpu.memory_space<vmem>>, %arg5: memref<1x128xf32, #tpu.memory_space<vmem>>, %arg6: memref<128x128xbf16, #tpu.memory_space<vmem>>, %arg7: memref<1x128xf32, #tpu.memory_space<vmem>>, %arg8: memref<128x256xbf16, #tpu.memory_space<vmem>>, %arg9: memref<1x256xf32, #tpu.memory_space<vmem>>, %arg10: memref<256x256xf32, #tpu.memory_space<vmem>>) attributes {dimension_semantics = [#tpu.dimension_semantics<parallel>], iteration_bounds = array<i64: 1>, scalar_prefetch = 0 : i64, scratch_operands = 0 : i64, tpu.core_type = #tpu.core_type<tc>, window_params = [{transform_indices = @transform_0, window_bounds = array<i64: 256, 256>}, {pipeline_mode = #tpu.pipeline_mode<synchronous>, transform_indices = @transform_1, window_bounds = array<i64: 256, 128>}, {pipeline_mode = #tpu.pipeline_mode<synchronous>, transform_indices = @transform_2, window_bounds = array<i64: 1, 128>}, {pipeline_mode = #tpu.pipeline_mode<synchronous>, transform_indices = @transform_3, window_bounds = array<i64: 128, 128>}, {pipeline_mode = #tpu.pipeline_mode<synchronous>, transform_indices = @transform_4, window_bounds = array<i64: 1, 128>}, {pipeline_mode = #tpu.pipeline_mode<synchronous>, transform_indices = @transform_5, window_bounds = array<i64: 128, 128>}, {pipeline_mode = #tpu.pipeline_mode<synchronous>, transform_indices = @transform_6, window_bounds = array<i64: 1, 128>}, {pipeline_mode = #tpu.pipeline_mode<synchronous>, transform_indices = @transform_7, window_bounds = array<i64: 128, 256>}, {pipeline_mode = #tpu.pipeline_mode<synchronous>, transform_indices = @transform_8, window_bounds = array<i64: 1, 256>}, {transform_indices = @transform_9, window_bounds = array<i64: 256, 256>}]} {
    %c0 = arith.constant 0 : index
    %c0_0 = arith.constant 0 : index
    %0 = vector.load %arg1[%c0, %c0_0] : memref<256x256xf32, #tpu.memory_space<vmem>>, vector<256x256xf32>
    %1 = arith.truncf %0 : vector<256x256xf32> to vector<256x256xbf16>
    %c0_1 = arith.constant 0 : index
    %c0_2 = arith.constant 0 : index
    %2 = vector.load %arg2[%c0_1, %c0_2] : memref<256x128xbf16, #tpu.memory_space<vmem>>, vector<256x128xbf16>
    %cst = arith.constant dense<0.000000e+00> : vector<256x128xf32>
    %3 = tpu.matmul %1, %2, %cst {dimension_numbers = #tpu.dot_dimension_numbers<[1], [0], [0], [1], [0, 0, 1, 1], [], []>} : vector<256x256xbf16>, vector<256x128xbf16>, vector<256x128xf32> -> vector<256x128xf32>
    %c0_3 = arith.constant 0 : index
    %c0_4 = arith.constant 0 : index
    %4 = vector.load %arg3[%c0_3, %c0_4] : memref<1x128xf32, #tpu.memory_space<vmem>>, vector<1x128xf32>
    %5 = vector.broadcast %4 : vector<1x128xf32> to vector<256x128xf32>
    %6 = arith.addf %3, %5 : vector<256x128xf32>
    %cst_5 = arith.constant 0.000000e+00 : f32
    %7 = vector.broadcast %cst_5 : f32 to vector<256x128xf32>
    %8 = arith.maximumf %6, %7 : vector<256x128xf32>
    %9 = arith.truncf %8 : vector<256x128xf32> to vector<256x128xbf16>
    %c0_6 = arith.constant 0 : index
    %c0_7 = arith.constant 0 : index
    %10 = vector.load %arg4[%c0_6, %c0_7] : memref<128x128xbf16, #tpu.memory_space<vmem>>, vector<128x128xbf16>
    %cst_8 = arith.constant dense<0.000000e+00> : vector<256x128xf32>
    %11 = tpu.matmul %9, %10, %cst_8 {dimension_numbers = #tpu.dot_dimension_numbers<[1], [0], [0], [1], [0, 0, 1, 1], [], []>} : vector<256x128xbf16>, vector<128x128xbf16>, vector<256x128xf32> -> vector<256x128xf32>
    %c0_9 = arith.constant 0 : index
    %c0_10 = arith.constant 0 : index
    %12 = vector.load %arg5[%c0_9, %c0_10] : memref<1x128xf32, #tpu.memory_space<vmem>>, vector<1x128xf32>
    %13 = vector.broadcast %12 : vector<1x128xf32> to vector<256x128xf32>
    %14 = arith.addf %11, %13 : vector<256x128xf32>
    %cst_11 = arith.constant 0.000000e+00 : f32
    %15 = vector.broadcast %cst_11 : f32 to vector<256x128xf32>
    %16 = arith.maximumf %14, %15 : vector<256x128xf32>
    %17 = arith.truncf %16 : vector<256x128xf32> to vector<256x128xbf16>
    %c0_12 = arith.constant 0 : index
    %c0_13 = arith.constant 0 : index
    %18 = vector.load %arg6[%c0_12, %c0_13] : memref<128x128xbf16, #tpu.memory_space<vmem>>, vector<128x128xbf16>
    %cst_14 = arith.constant dense<0.000000e+00> : vector<256x128xf32>
    %19 = tpu.matmul %17, %18, %cst_14 {dimension_numbers = #tpu.dot_dimension_numbers<[1], [0], [0], [1], [0, 0, 1, 1], [], []>} : vector<256x128xbf16>, vector<128x128xbf16>, vector<256x128xf32> -> vector<256x128xf32>
    %c0_15 = arith.constant 0 : index
    %c0_16 = arith.constant 0 : index
    %20 = vector.load %arg7[%c0_15, %c0_16] : memref<1x128xf32, #tpu.memory_space<vmem>>, vector<1x128xf32>
    %21 = vector.broadcast %20 : vector<1x128xf32> to vector<256x128xf32>
    %22 = arith.addf %19, %21 : vector<256x128xf32>
    %cst_17 = arith.constant 0.000000e+00 : f32
    %23 = vector.broadcast %cst_17 : f32 to vector<256x128xf32>
    %24 = arith.maximumf %22, %23 : vector<256x128xf32>
    %25 = arith.truncf %24 : vector<256x128xf32> to vector<256x128xbf16>
    %c0_18 = arith.constant 0 : index
    %c0_19 = arith.constant 0 : index
    %26 = vector.load %arg8[%c0_18, %c0_19] : memref<128x256xbf16, #tpu.memory_space<vmem>>, vector<128x256xbf16>
    %cst_20 = arith.constant dense<0.000000e+00> : vector<256x256xf32>
    %27 = tpu.matmul %25, %26, %cst_20 {dimension_numbers = #tpu.dot_dimension_numbers<[1], [0], [0], [1], [0, 0, 1, 1], [], []>} : vector<256x128xbf16>, vector<128x256xbf16>, vector<256x256xf32> -> vector<256x256xf32>
    %c0_21 = arith.constant 0 : index
    %c0_22 = arith.constant 0 : index
    %28 = vector.load %arg9[%c0_21, %c0_22] : memref<1x256xf32, #tpu.memory_space<vmem>>, vector<1x256xf32>
    %29 = vector.broadcast %28 : vector<1x256xf32> to vector<256x256xf32>
    %30 = arith.addf %27, %29 : vector<256x256xf32>
    %cst_23 = arith.constant 0.000000e+00 : f32
    %31 = vector.broadcast %cst_23 : f32 to vector<256x256xf32>
    %32 = arith.maximumf %30, %31 : vector<256x256xf32>
    %c0_24 = arith.constant 0 : index
    %c0_25 = arith.constant 0 : index
    %33 = vector.load %arg10[%c0_24, %c0_25] : memref<256x256xf32, #tpu.memory_space<vmem>>, vector<256x256xf32>
    tpu.vector_store %arg10[%c0_24, %c0_25], %32 {strides = array<i32>} : memref<256x256xf32, #tpu.memory_space<vmem>>, vector<256x256xf32>,
    return
  }
  func.func @transform_0(%arg0: i32) -> (i32, i32) {
    %c0_i32 = arith.constant 0 : i32
    %c0_i32_0 = arith.constant 0 : i32
    return %arg0, %c0_i32 : i32, i32
  }
  func.func @transform_1(%arg0: i32) -> (i32, i32) {
    %c0_i32 = arith.constant 0 : i32
    %c0_i32_0 = arith.constant 0 : i32
    %c0_i32_1 = arith.constant 0 : i32
    return %c0_i32, %c0_i32_0 : i32, i32
  }
  func.func @transform_2(%arg0: i32) -> (i32, i32) {
    %c0_i32 = arith.constant 0 : i32
    %c0_i32_0 = arith.constant 0 : i32
    %c0_i32_1 = arith.constant 0 : i32
    return %c0_i32, %c0_i32_0 : i32, i32
  }
  func.func @transform_3(%arg0: i32) -> (i32, i32) {
    %c0_i32 = arith.constant 0 : i32
    %c0_i32_0 = arith.constant 0 : i32
    %c0_i32_1 = arith.constant 0 : i32
    return %c0_i32, %c0_i32_0 : i32, i32
  }
  func.func @transform_4(%arg0: i32) -> (i32, i32) {
    %c0_i32 = arith.constant 0 : i32
    %c0_i32_0 = arith.constant 0 : i32
    %c0_i32_1 = arith.constant 0 : i32
    return %c0_i32, %c0_i32_0 : i32, i32
  }
  func.func @transform_5(%arg0: i32) -> (i32, i32) {
    %c0_i32 = arith.constant 0 : i32
    %c0_i32_0 = arith.constant 0 : i32
    %c0_i32_1 = arith.constant 0 : i32
    return %c0_i32, %c0_i32_0 : i32, i32
  }
  func.func @transform_6(%arg0: i32) -> (i32, i32) {
    %c0_i32 = arith.constant 0 : i32
    %c0_i32_0 = arith.constant 0 : i32
    %c0_i32_1 = arith.constant 0 : i32
    return %c0_i32, %c0_i32_0 : i32, i32
  }
  func.func @transform_7(%arg0: i32) -> (i32, i32) {
    %c0_i32 = arith.constant 0 : i32
    %c0_i32_0 = arith.constant 0 : i32
    %c0_i32_1 = arith.constant 0 : i32
    return %c0_i32, %c0_i32_0 : i32, i32
  }
  func.func @transform_8(%arg0: i32) -> (i32, i32) {
    %c0_i32 = arith.constant 0 : i32
    %c0_i32_0 = arith.constant 0 : i32
    %c0_i32_1 = arith.constant 0 : i32
    return %c0_i32, %c0_i32_0 : i32, i32
  }
  func.func @transform_9(%arg0: i32) -> (i32, i32) {
    %c0_i32 = arith.constant 0 : i32
    %c0_i32_0 = arith.constant 0 : i32
    return %arg0, %c0_i32 : i32, i32
  }
}

</mosaic_0001>

<llo_original>
// kernel: tpu_custom_call.1
$region0: #{tpu_custom_call.1}
  #allocation0 [shape = 'u32[]', space=smem, size = 0x4, offset = 0x4, fixed_abs, tag = 'smem constant byte address 0x4 - core index']
  #allocation1 [shape = 'u32[144,128]{1,0:T(1,128)}', space=vmem, size = 0x12000, scoped, tag = 'internal scratch']
  %s0 = inlined_call_operand.hbm [shape: f32[256,256], index: 0, kind: input, shape index: {}]
  %s1 = inlined_call_operand.hbm [shape: bf16[256,128], index: 1, kind: input, shape index: {}]
  %s2 = inlined_call_operand.vmem [shape: f32[1,128], index: 2, kind: input, shape index: {}]
  %s3 = inlined_call_operand.hbm [shape: bf16[128,128], index: 3, kind: input, shape index: {}]
  %s4 = inlined_call_operand.vmem [shape: f32[1,128], index: 4, kind: input, shape index: {}]
  %s5 = inlined_call_operand.hbm [shape: bf16[128,128], index: 5, kind: input, shape index: {}]
  %s6 = inlined_call_operand.vmem [shape: f32[1,128], index: 6, kind: input, shape index: {}]
  %s7 = inlined_call_operand.hbm [shape: bf16[128,256], index: 7, kind: input, shape index: {}]
  %s8 = inlined_call_operand.vmem [shape: f32[1,256], index: 8, kind: input, shape index: {}]
  %s9 = inlined_call_operand.hbm [shape: f32[256,256], index: 9, kind: output, shape index: {}]
  %s10 = sld [smem:[#allocation0]]
  $region66: #{tpu_custom_call.1} parent=0
    _
  %s12 = ssub.s32 1, %s10
  %s13 = scalar_select 0, %s12, %s10
  $region1: #{tpu_custom_call.1} parent=0
    #allocation2 [shape = 'u8[262144]{0}', space=vmem, size = 0x40000, scoped, tag = 'input window, operand 0, single buffered']
    #allocation3 [shape = 's32[1]{0}', space=sflag, size = 0x4, scoped, tag = 'scoped memory for tpu_custom_call.1']
    #allocation4 [shape = 's32[1]{0}', space=sflag, size = 0x4, scoped, tag = 'scoped memory for tpu_custom_call.1']
    #allocation5 [shape = 'u8[65536]{0}', space=vmem, size = 0x10000, scoped, tag = 'input window, operand 1, single buffered']
    #allocation6 [shape = 's32[1]{0}', space=sflag, size = 0x4, scoped, tag = 'scoped memory for tpu_custom_call.1']
    #allocation7 [shape = 'u8[32768]{0}', space=vmem, size = 0x8000, scoped, tag = 'input window, operand 3, single buffered']
    #allocation8 [shape = 'u8[32768]{0}', space=vmem, size = 0x8000, scoped, tag = 'input window, operand 5, single buffered']
    #allocation9 [shape = 's32[1]{0}', space=sflag, size = 0x4, scoped, tag = 'scoped memory for tpu_custom_call.1']
    #allocation10 [shape = 'u8[65536]{0}', space=vmem, size = 0x10000, scoped, tag = 'input window, operand 7, single buffered']
    #allocation11 [shape = 'u8[262144]{0}', space=vmem, size = 0x40000, scoped, tag = 'output window, operand 0, single buffered']
    %14 = vsyncpa [#allocation3], 0
    %15 = vsyncpa [#allocation6], 0
    %16 = vsyncpa [#allocation9], 0
    %17 = vsyncpa [#allocation4], 0
    // Predicated region
    $region2: #{tpu_custom_call.1} parent=1 // pred_check
      _
    $region3: #{tpu_custom_call.1} parent=1 // pred_check_branch
      %19 = sbr.rel (0) target = $region5
    $region4: #{tpu_custom_call.1} parent=1 // pred_region
      %s21 = ssub.s32 8192, 8192
      %22 = vsyncadd [#allocation3], %s21
      %s23 = sshll.u32 [#allocation2], 4
      %s24 = int_to_ptr.vmem [resolvable:$true] %s23
      %29 = dma.hbm_to_vmem [thread:$0]  %s0, 8192, %s24, [#allocation3], 256, 256, 16
    $region5: #{tpu_custom_call.1} parent=1 // pred_fallthru
      _
    // Predicated region
    $region6: #{tpu_custom_call.1} parent=1 // pred_check
      _
    $region7: #{tpu_custom_call.1} parent=1 // pred_check_branch
      %31 = sbr.rel (0) target = $region9
    $region8: #{tpu_custom_call.1} parent=1 // pred_region
      %s33 = ssub.s32 2048, 2048
      %34 = vsyncadd [#allocation6], %s33
      %s35 = sshll.u32 [#allocation5], 4
      %s36 = int_to_ptr.vmem [resolvable:$true] %s35
      %41 = dma.hbm_to_vmem [thread:$0]  %s1, 2048, %s36, [#allocation6], 64, 64, 4
    $region9: #{tpu_custom_call.1} parent=1 // pred_fallthru
      _
    // Predicated region
    $region10: #{tpu_custom_call.1} parent=1 // pred_check
      _
    $region11: #{tpu_custom_call.1} parent=1 // pred_check_branch
      %43 = sbr.rel (0) target = $region13
    $region12: #{tpu_custom_call.1} parent=1 // pred_region
      _
    $region13: #{tpu_custom_call.1} parent=1 // pred_fallthru
      _
    // Predicated region
    $region14: #{tpu_custom_call.1} parent=1 // pred_check
      _
    $region15: #{tpu_custom_call.1} parent=1 // pred_check_branch
      %45 = sbr.rel (0) target = $region17
    $region16: #{tpu_custom_call.1} parent=1 // pred_region
      %s47 = ssub.s32 1024, 1024
      %48 = vsyncadd [#allocation6], %s47
      %s49 = sshll.u32 [#allocation7], 4
      %s50 = int_to_ptr.vmem [resolvable:$true] %s49
      %55 = dma.hbm_to_vmem [thread:$0]  %s3, 1024, %s50, [#allocation6], 64, 64, 4
    $region17: #{tpu_custom_call.1} parent=1 // pred_fallthru
      _
    // Predicated region
    $region18: #{tpu_custom_call.1} parent=1 // pred_check
      _
    $region19: #{tpu_custom_call.1} parent=1 // pred_check_branch
      %57 = sbr.rel (0) target = $region21
    $region20: #{tpu_custom_call.1} parent=1 // pred_region
      _
    $region21: #{tpu_custom_call.1} parent=1 // pred_fallthru
      _
    // Predicated region
    $region22: #{tpu_custom_call.1} parent=1 // pred_check
      _
    $region23: #{tpu_custom_call.1} parent=1 // pred_check_branch
      %59 = sbr.rel (0) target = $region25
    $region24: #{tpu_custom_call.1} parent=1 // pred_region
      %s61 = ssub.s32 1024, 1024
      %62 = vsyncadd [#allocation9], %s61
      %s63 = sshll.u32 [#allocation8], 4
      %s64 = int_to_ptr.vmem [resolvable:$true] %s63
      %69 = dma.hbm_to_vmem [thread:$0]  %s5, 1024, %s64, [#allocation9], 64, 64, 4
    $region25: #{tpu_custom_call.1} parent=1 // pred_fallthru
      _
    // Predicated region
    $region26: #{tpu_custom_call.1} parent=1 // pred_check
      _
    $region27: #{tpu_custom_call.1} parent=1 // pred_check_branch
      %71 = sbr.rel (0) target = $region29
    $region28: #{tpu_custom_call.1} parent=1 // pred_region
      _
    $region29: #{tpu_custom_call.1} parent=1 // pred_fallthru
      _
    // Predicated region
    $region30: #{tpu_custom_call.1} parent=1 // pred_check
      _
    $region31: #{tpu_custom_call.1} parent=1 // pred_check_branch
      %73 = sbr.rel (0) target = $region33
    $region32: #{tpu_custom_call.1} parent=1 // pred_region
      %s75 = ssub.s32 2048, 2048
      %76 = vsyncadd [#allocation9], %s75
      %s77 = sshll.u32 [#allocation10], 4
      %s78 = int_to_ptr.vmem [resolvable:$true] %s77
      %83 = dma.hbm_to_vmem [thread:$0]  %s7, 2048, %s78, [#allocation9], 128, 128, 8
    $region33: #{tpu_custom_call.1} parent=1 // pred_fallthru
      _
    // Predicated region
    $region34: #{tpu_custom_call.1} parent=1 // pred_check
      _
    $region35: #{tpu_custom_call.1} parent=1 // pred_check_branch
      %85 = sbr.rel (0) target = $region37
    $region36: #{tpu_custom_call.1} parent=1 // pred_region
      _
    $region37: #{tpu_custom_call.1} parent=1 // pred_fallthru
      _
    // Predicated region
    $region38: #{tpu_custom_call.1} parent=1 // pred_check
      _
    $region39: #{tpu_custom_call.1} parent=1 // pred_check_branch
      %87 = sbr.rel (0) target = $region41
    $region40: #{tpu_custom_call.1} parent=1 // pred_region
      %88 = dma.done [#allocation3], 8192
    $region41: #{tpu_custom_call.1} parent=1 // pred_fallthru
      _
    // Predicated region
    $region42: #{tpu_custom_call.1} parent=1 // pred_check
      _
    $region43: #{tpu_custom_call.1} parent=1 // pred_check_branch
      %90 = sbr.rel (0) target = $region45
    $region44: #{tpu_custom_call.1} parent=1 // pred_region
      %91 = dma.done [#allocation6], 2048
    $region45: #{tpu_custom_call.1} parent=1 // pred_fallthru
      _
    // Predicated region
    $region46: #{tpu_custom_call.1} parent=1 // pred_check
      _
    $region47: #{tpu_custom_call.1} parent=1 // pred_check_branch
      %93 = sbr.rel (0) target = $region49
    $region48: #{tpu_custom_call.1} parent=1 // pred_region
      %94 = dma.done [#allocation6], 1024
    $region49: #{tpu_custom_call.1} parent=1 // pred_fallthru
      _
    // Predicated region
    $region50: #{tpu_custom_call.1} parent=1 // pred_check
      _
    $region51: #{tpu_custom_call.1} parent=1 // pred_check_branch
      %96 = sbr.rel (0) target = $region53
    $region52: #{tpu_custom_call.1} parent=1 // pred_region
      %97 = dma.done [#allocation9], 1024
    $region53: #{tpu_custom_call.1} parent=1 // pred_fallthru
      _
    // Predicated region
    $region54: #{tpu_custom_call.1} parent=1 // pred_check
      _
    $region55: #{tpu_custom_call.1} parent=1 // pred_check_branch
      %99 = sbr.rel (0) target = $region57
    $region56: #{tpu_custom_call.1} parent=1 // pred_region
      %100 = dma.done [#allocation9], 2048
    $region57: #{tpu_custom_call.1} parent=1 // pred_fallthru
      _
    %v102 = vld [vmem:[#allocation2] sm:$0xff]
    %v103 = vld [vmem:[#allocation2 + $0x8] sm:$0xff]
    %v104 = vld [vmem:[#allocation2 + $0x10] sm:$0xff]
    %v105 = vld [vmem:[#allocation2 + $0x18] sm:$0xff]
    %v106 = vld [vmem:[#allocation2 + $0x20] sm:$0xff]
    %v107 = vld [vmem:[#allocation2 + $0x28] sm:$0xff]
    %v108 = vld [vmem:[#allocation2 + $0x30] sm:$0xff]
    %v109 = vld [vmem:[#allocation2 + $0x38] sm:$0xff]
    %v110 = vld [vmem:[#allocation2 + $0x40] sm:$0xff]
    %v111 = vld [vmem:[#allocation2 + $0x48] sm:$0xff]
    %v112 = vld [vmem:[#allocation2 + $0x50] sm:$0xff]
    %v113 = vld [vmem:[#allocation2 + $0x58] sm:$0xff]
    %v114 = vld [vmem:[#allocation2 + $0x60] sm:$0xff]
    %v115 = vld [vmem:[#allocation2 + $0x68] sm:$0xff]
    %v116 = vld [vmem:[#allocation2 + $0x70] sm:$0xff]
    %v117 = vld [vmem:[#allocation2 + $0x78] sm:$0xff]
    %v118 = vld [vmem:[#allocation2 + $0x80] sm:$0xff]
    %v119 = vld [vmem:[#allocation2 + $0x88] sm:$0xff]
    %v120 = vld [vmem:[#allocation2 + $0x90] sm:$0xff]
    %v121 = vld [vmem:[#allocation2 + $0x98] sm:$0xff]
    %v122 = vld [vmem:[#allocation2 + $0xa0] sm:$0xff]
    %v123 = vld [vmem:[#allocation2 + $0xa8] sm:$0xff]
    %v124 = vld [vmem:[#allocation2 + $0xb0] sm:$0xff]
    %v125 = vld [vmem:[#allocation2 + $0xb8] sm:$0xff]
    %v126 = vld [vmem:[#allocation2 + $0xc0] sm:$0xff]
    %v127 = vld [vmem:[#allocation2 + $0xc8] sm:$0xff]
    %v128 = vld [vmem:[#allocation2 + $0xd0] sm:$0xff]
    %v129 = vld [vmem:[#allocation2 + $0xd8] sm:$0xff]
    %v130 = vld [vmem:[#allocation2 + $0xe0] sm:$0xff]
    %v131 = vld [vmem:[#allocation2 + $0xe8] sm:$0xff]
    %v132 = vld [vmem:[#allocation2 + $0xf0] sm:$0xff]
    %v133 = vld [vmem:[#allocation2 + $0xf8] sm:$0xff]
    %v134 = vld [vmem:[#allocation2 + $0x100] sm:$0xff]
    %v135 = vld [vmem:[#allocation2 + $0x108] sm:$0xff]
    %v136 = vld [vmem:[#allocation2 + $0x110] sm:$0xff]
    %v137 = vld [vmem:[#allocation2 + $0x118] sm:$0xff]
    %v138 = vld [vmem:[#allocation2 + $0x120] sm:$0xff]
    %v139 = vld [vmem:[#allocation2 + $0x128] sm:$0xff]
    %v140 = vld [vmem:[#allocation2 + $0x130] sm:$0xff]
    %v141 = vld [vmem:[#allocation2 + $0x138] sm:$0xff]
    %v142 = vld [vmem:[#allocation2 + $0x140] sm:$0xff]
    %v143 = vld [vmem:[#allocation2 + $0x148] sm:$0xff]
    %v144 = vld [vmem:[#allocation2 + $0x150] sm:$0xff]
    %v145 = vld [vmem:[#allocation2 + $0x158] sm:$0xff]
    %v146 = vld [vmem:[#allocation2 + $0x160] sm:$0xff]
    %v147 = vld [vmem:[#allocation2 + $0x168] sm:$0xff]
    %v148 = vld [vmem:[#allocation2 + $0x170] sm:$0xff]
    %v149 = vld [vmem:[#allocation2 + $0x178] sm:$0xff]
    %v150 = vld [vmem:[#allocation2 + $0x180] sm:$0xff]
    %v151 = vld [vmem:[#allocation2 + $0x188] sm:$0xff]
    %v152 = vld [vmem:[#allocation2 + $0x190] sm:$0xff]
    %v153 = vld [vmem:[#allocation2 + $0x198] sm:$0xff]
    %v154 = vld [vmem:[#allocation2 + $0x1a0] sm:$0xff]
    %v155 = vld [vmem:[#allocation2 + $0x1a8] sm:$0xff]
    %v156 = vld [vmem:[#allocation2 + $0x1b0] sm:$0xff]
    %v157 = vld [vmem:[#allocation2 + $0x1b8] sm:$0xff]
    %v158 = vld [vmem:[#allocation2 + $0x1c0] sm:$0xff]
    %v159 = vld [vmem:[#allocation2 + $0x1c8] sm:$0xff]
    %v160 = vld [vmem:[#allocation2 + $0x1d0] sm:$0xff]
    %v161 = vld [vmem:[#allocation2 + $0x1d8] sm:$0xff]
    %v162 = vld [vmem:[#allocation2 + $0x1e0] sm:$0xff]
    %v163 = vld [vmem:[#allocation2 + $0x1e8] sm:$0xff]
    %v164 = vld [vmem:[#allocation2 + $0x1f0] sm:$0xff]
    %v165 = vld [vmem:[#allocation2 + $0x1f8] sm:$0xff]
    %v166 = vpack.c.bf16 %v104, %v102
    %v167 = vpack.c.bf16 %v105, %v103
    %v168 = vpack.c.bf16 %v108, %v106
    %v169 = vpack.c.bf16 %v109, %v107
    %v170 = vpack.c.bf16 %v112, %v110
    %v171 = vpack.c.bf16 %v113, %v111
    %v172 = vpack.c.bf16 %v116, %v114
    %v173 = vpack.c.bf16 %v117, %v115
    %v174 = vpack.c.bf16 %v120, %v118
    %v175 = vpack.c.bf16 %v121, %v119
    %v176 = vpack.c.bf16 %v124, %v122
    %v177 = vpack.c.bf16 %v125, %v123
    %v178 = vpack.c.bf16 %v128, %v126
    %v179 = vpack.c.bf16 %v129, %v127
    %v180 = vpack.c.bf16 %v132, %v130
    %v181 = vpack.c.bf16 %v133, %v131
    %v182 = vpack.c.bf16 %v136, %v134
    %v183 = vpack.c.bf16 %v137, %v135
    %v184 = vpack.c.bf16 %v140, %v138
    %v185 = vpack.c.bf16 %v141, %v139
    %v186 = vpack.c.bf16 %v144, %v142
    %v187 = vpack.c.bf16 %v145, %v143
    %v188 = vpack.c.bf16 %v148, %v146
    %v189 = vpack.c.bf16 %v149, %v147
    %v190 = vpack.c.bf16 %v152, %v150
    %v191 = vpack.c.bf16 %v153, %v151
    %v192 = vpack.c.bf16 %v156, %v154
    %v193 = vpack.c.bf16 %v157, %v155
    %v194 = vpack.c.bf16 %v160, %v158
    %v195 = vpack.c.bf16 %v161, %v159
    %v196 = vpack.c.bf16 %v164, %v162
    %v197 = vpack.c.bf16 %v165, %v163
    %v198 = vld [vmem:[#allocation5] sm:$0xf]
    %v199 = vld [vmem:[#allocation5 + $0x4] sm:$0xf]
    %v200 = vld [vmem:[#allocation5 + $0x8] sm:$0xf]
    %v201 = vld [vmem:[#allocation5 + $0xc] sm:$0xf]
    %v202 = vld [vmem:[#allocation5 + $0x10] sm:$0xf]
    %v203 = vld [vmem:[#allocation5 + $0x14] sm:$0xf]
    %v204 = vld [vmem:[#allocation5 + $0x18] sm:$0xf]
    %v205 = vld [vmem:[#allocation5 + $0x1c] sm:$0xf]
    %v206 = vld [vmem:[#allocation5 + $0x20] sm:$0xf]
    %v207 = vld [vmem:[#allocation5 + $0x24] sm:$0xf]
    %v208 = vld [vmem:[#allocation5 + $0x28] sm:$0xf]
    %v209 = vld [vmem:[#allocation5 + $0x2c] sm:$0xf]
    %v210 = vld [vmem:[#allocation5 + $0x30] sm:$0xf]
    %v211 = vld [vmem:[#allocation5 + $0x34] sm:$0xf]
    %v212 = vld [vmem:[#allocation5 + $0x38] sm:$0xf]
    %v213 = vld [vmem:[#allocation5 + $0x3c] sm:$0xf]
    %v214 = vld [vmem:[#allocation5 + $0x40] sm:$0xf]
    %v215 = vld [vmem:[#allocation5 + $0x44] sm:$0xf]
    %v216 = vld [vmem:[#allocation5 + $0x48] sm:$0xf]
    %v217 = vld [vmem:[#allocation5 + $0x4c] sm:$0xf]
    %v218 = vld [vmem:[#allocation5 + $0x50] sm:$0xf]
    %v219 = vld [vmem:[#allocation5 + $0x54] sm:$0xf]
    %v220 = vld [vmem:[#allocation5 + $0x58] sm:$0xf]
    %v221 = vld [vmem:[#allocation5 + $0x5c] sm:$0xf]
    %v222 = vld [vmem:[#allocation5 + $0x60] sm:$0xf]
    %v223 = vld [vmem:[#allocation5 + $0x64] sm:$0xf]
    %v224 = vld [vmem:[#allocation5 + $0x68] sm:$0xf]
    %v225 = vld [vmem:[#allocation5 + $0x6c] sm:$0xf]
    %v226 = vld [vmem:[#allocation5 + $0x70] sm:$0xf]
    %v227 = vld [vmem:[#allocation5 + $0x74] sm:$0xf]
    %v228 = vld [vmem:[#allocation5 + $0x78] sm:$0xf]
    %v229 = vld [vmem:[#allocation5 + $0x7c] sm:$0xf]
    %v230 = vld [vmem:[%s2] sm:$0x1]
    %v232 = vlaneseq
    %v233 = vshrl.u32 %v232, 7
    %v234 = vsub.s32 0, %v233
    %v235 = vrot.slane %v230, %v234
    %v269 = vunpack.c.l.b16 %v198
    %v270 = vunpack.c.l.b16 %v199
    %v271 = vunpack.c.l.b16 %v200
    %v272 = vunpack.c.l.b16 %v201
    %v273 = vunpack.c.l.b16 %v202
    %v274 = vunpack.c.l.b16 %v203
    %v275 = vunpack.c.l.b16 %v204
    %v276 = vunpack.c.l.b16 %v205
    %v277 = vunpack.c.l.b16 %v206
    %v278 = vunpack.c.l.b16 %v207
    %v279 = vunpack.c.l.b16 %v208
    %v280 = vunpack.c.l.b16 %v209
    %v281 = vunpack.c.l.b16 %v210
    %v282 = vunpack.c.l.b16 %v211
    %v283 = vunpack.c.l.b16 %v212
    %v284 = vunpack.c.l.b16 %v213
    %v285 = vunpack.c.l.b16 %v214
    %v286 = vunpack.c.l.b16 %v215
    %v287 = vunpack.c.l.b16 %v216
    %v288 = vunpack.c.l.b16 %v217
    %v289 = vunpack.c.l.b16 %v218
    %v290 = vunpack.c.l.b16 %v219
    %v291 = vunpack.c.l.b16 %v220
    %v292 = vunpack.c.l.b16 %v221
    %v293 = vunpack.c.l.b16 %v222
    %v294 = vunpack.c.l.b16 %v223
    %v295 = vunpack.c.l.b16 %v224
    %v296 = vunpack.c.l.b16 %v225
    %v297 = vunpack.c.l.b16 %v226
    %v298 = vunpack.c.l.b16 %v227
    %v299 = vunpack.c.l.b16 %v228
    %v300 = vunpack.c.l.b16 %v229
    %v301 = vpack.c.b16 %v270, %v269
    %v302 = vpack.c.b16 %v272, %v271
    %v303 = vpack.c.b16 %v274, %v273
    %v304 = vpack.c.b16 %v276, %v275
    %v305 = vpack.c.b16 %v278, %v277
    %v306 = vpack.c.b16 %v280, %v279
    %v307 = vpack.c.b16 %v282, %v281
    %v308 = vpack.c.b16 %v284, %v283
    %v309 = vpack.c.b16 %v286, %v285
    %v310 = vpack.c.b16 %v288, %v287
    %v311 = vpack.c.b16 %v290, %v289
    %v312 = vpack.c.b16 %v292, %v291
    %v313 = vpack.c.b16 %v294, %v293
    %v314 = vpack.c.b16 %v296, %v295
    %v315 = vpack.c.b16 %v298, %v297
    %v316 = vpack.c.b16 %v300, %v299
    %333 = vmatprep.subr.bf16.mxu0 0
    %334 = vmatpush1.bf16.msra.mxu0 %v301
    %335 = vmatprep.subr.bf16.mxu0 0
    %336 = vmatpush1.bf16.msra.mxu0 %v302
    %337 = vmatprep.subr.bf16.mxu0 0
    %338 = vmatpush1.bf16.msra.mxu0 %v303
    %339 = vmatprep.subr.bf16.mxu0 0
    %340 = vmatpush1.bf16.msra.mxu0 %v304
    %341 = vmatprep.subr.bf16.mxu0 0
    %342 = vmatpush1.bf16.msra.mxu0 %v305
    %343 = vmatprep.subr.bf16.mxu0 0
    %344 = vmatpush1.bf16.msra.mxu0 %v306
    %345 = vmatprep.subr.bf16.mxu0 0
    %346 = vmatpush1.bf16.msra.mxu0 %v307
    %347 = vmatprep.subr.bf16.mxu0 0
    %348 = vmatpush1.bf16.msra.mxu0 %v308
    %349 = vmatprep.subr.bf16.mxu0 0
    %350 = vmatpush1.bf16.msra.mxu0 %v309
    %351 = vmatprep.subr.bf16.mxu0 0
    %352 = vmatpush1.bf16.msra.mxu0 %v310
    %353 = vmatprep.subr.bf16.mxu0 0
    %354 = vmatpush1.bf16.msra.mxu0 %v311
    %355 = vmatprep.subr.bf16.mxu0 0
    %356 = vmatpush1.bf16.msra.mxu0 %v312
    %357 = vmatprep.subr.bf16.mxu0 0
    %358 = vmatpush1.bf16.msra.mxu0 %v313
    %359 = vmatprep.subr.bf16.mxu0 0
    %360 = vmatpush1.bf16.msra.mxu0 %v314
    %361 = vmatprep.subr.bf16.mxu0 0
    %362 = vmatpush1.bf16.msra.mxu0 %v315
    %363 = vmatprep.subr.bf16.mxu0 0
    %364 = vmatpush1.bf16.msra.mxu0 %v316
    %365 = vmatprep.mubr.bf16.mxu0 %v167
    %366 = vmatmul.mubr.bf16.gmra.mrb[0].mxu0 %v166
    %v367 = vpop.f32.mrb[0].mxu0
    %v368 = vadd.f32 %v235, %v367
    %v369 = vpop.f32.mrb[0].mxu0
    %v370 = vpop.f32.mrb[0].mxu0
    %v371 = vadd.f32 %v235, %v370
    %v372 = vpop.f32.mrb[0].mxu0
    %373 = vmatprep.mubr.bf16.mxu0 %v169
    %374 = vmatmul.mubr.bf16.gmra.mrb[0].mxu0 %v168
    %v375 = vpop.f32.mrb[0].mxu0
    %v376 = vadd.f32 %v235, %v375
    %v377 = vpop.f32.mrb[0].mxu0
    %v378 = vpop.f32.mrb[0].mxu0
    %v379 = vadd.f32 %v235, %v378
    %v380 = vpop.f32.mrb[0].mxu0
    %381 = vmatprep.mubr.bf16.mxu0 %v171
    %382 = vmatmul.mubr.bf16.gmra.mrb[0].mxu0 %v170
    %v383 = vpop.f32.mrb[0].mxu0
    %v384 = vadd.f32 %v235, %v383
    %v385 = vpop.f32.mrb[0].mxu0
    %v386 = vpop.f32.mrb[0].mxu0
    %v387 = vadd.f32 %v235, %v386
    %v388 = vpop.f32.mrb[0].mxu0
    %389 = vmatprep.mubr.bf16.mxu0 %v173
    %390 = vmatmul.mubr.bf16.gmra.mrb[0].mxu0 %v172
    %v391 = vpop.f32.mrb[0].mxu0
    %v392 = vadd.f32 %v235, %v391
    %v393 = vpop.f32.mrb[0].mxu0
    %v394 = vpop.f32.mrb[0].mxu0
    %v395 = vadd.f32 %v235, %v394
    %v396 = vpop.f32.mrb[0].mxu0
    %397 = vmatprep.mubr.bf16.mxu0 %v175
    %398 = vmatmul.mubr.bf16.gmra.mrb[0].mxu0 %v174
    %v399 = vpop.f32.mrb[0].mxu0
    %v400 = vadd.f32 %v235, %v399
    %v401 = vpop.f32.mrb[0].mxu0
    %v402 = vpop.f32.mrb[0].mxu0
    %v403 = vadd.f32 %v235, %v402
    %v404 = vpop.f32.mrb[0].mxu0
    %405 = vmatprep.mubr.bf16.mxu0 %v177
    %406 = vmatmul.mubr.bf16.gmra.mrb[0].mxu0 %v176
    %v407 = vpop.f32.mrb[0].mxu0
    %v408 = vadd.f32 %v235, %v407
    %v409 = vpop.f32.mrb[0].mxu0
    %v410 = vpop.f32.mrb[0].mxu0
    %v411 = vadd.f32 %v235, %v410
    %v412 = vpop.f32.mrb[0].mxu0
    %413 = vmatprep.mubr.bf16.mxu0 %v179
    %414 = vmatmul.mubr.bf16.gmra.mrb[0].mxu0 %v178
    %v415 = vpop.f32.mrb[0].mxu0
    %v416 = vadd.f32 %v235, %v415
    %v417 = vpop.f32.mrb[0].mxu0
    %v418 = vpop.f32.mrb[0].mxu0
    %v419 = vadd.f32 %v235, %v418
    %v420 = vpop.f32.mrb[0].mxu0
    %421 = vmatprep.mubr.bf16.mxu0 %v181
    %422 = vmatmul.mubr.bf16.gmra.mrb[0].mxu0 %v180
    %v423 = vpop.f32.mrb[0].mxu0
    %v424 = vadd.f32 %v235, %v423
    %v425 = vpop.f32.mrb[0].mxu0
    %v426 = vpop.f32.mrb[0].mxu0
    %v427 = vadd.f32 %v235, %v426
    %v428 = vpop.f32.mrb[0].mxu0
    %429 = vmatprep.mubr.bf16.mxu0 %v183
    %430 = vmatmul.mubr.bf16.gmra.mrb[0].mxu0 %v182
    %v431 = vpop.f32.mrb[0].mxu0
    %v432 = vadd.f32 %v235, %v431
    %v433 = vpop.f32.mrb[0].mxu0
    %v434 = vpop.f32.mrb[0].mxu0
    %v435 = vadd.f32 %v235, %v434
    %v436 = vpop.f32.mrb[0].mxu0
    %437 = vmatprep.mubr.bf16.mxu0 %v185
    %438 = vmatmul.mubr.bf16.gmra.mrb[0].mxu0 %v184
    %v439 = vpop.f32.mrb[0].mxu0
    %v440 = vadd.f32 %v235, %v439
    %v441 = vpop.f32.mrb[0].mxu0
    %v442 = vpop.f32.mrb[0].mxu0
    %v443 = vadd.f32 %v235, %v442
    %v444 = vpop.f32.mrb[0].mxu0
    %445 = vmatprep.mubr.bf16.mxu0 %v187
    %446 = vmatmul.mubr.bf16.gmra.mrb[0].mxu0 %v186
    %v447 = vpop.f32.mrb[0].mxu0
    %v448 = vadd.f32 %v235, %v447
    %v449 = vpop.f32.mrb[0].mxu0
    %v450 = vpop.f32.mrb[0].mxu0
    %v451 = vadd.f32 %v235, %v450
    %v452 = vpop.f32.mrb[0].mxu0
    %453 = vmatprep.mubr.bf16.mxu0 %v189
    %454 = vmatmul.mubr.bf16.gmra.mrb[0].mxu0 %v188
    %v455 = vpop.f32.mrb[0].mxu0
    %v456 = vadd.f32 %v235, %v455
    %v457 = vpop.f32.mrb[0].mxu0
    %v458 = vpop.f32.mrb[0].mxu0
    %v459 = vadd.f32 %v235, %v458
    %v460 = vpop.f32.mrb[0].mxu0
    %461 = vmatprep.mubr.bf16.mxu0 %v191
    %462 = vmatmul.mubr.bf16.gmra.mrb[0].mxu0 %v190
    %v463 = vpop.f32.mrb[0].mxu0
    %v464 = vadd.f32 %v235, %v463
    %v465 = vpop.f32.mrb[0].mxu0
    %v466 = vpop.f32.mrb[0].mxu0
    %v467 = vadd.f32 %v235, %v466
    %v468 = vpop.f32.mrb[0].mxu0
    %469 = vmatprep.mubr.bf16.mxu0 %v193
    %470 = vmatmul.mubr.bf16.gmra.mrb[0].mxu0 %v192
    %v471 = vpop.f32.mrb[0].mxu0
    %v472 = vadd.f32 %v235, %v471
    %v473 = vpop.f32.mrb[0].mxu0
    %v474 = vpop.f32.mrb[0].mxu0
    %v475 = vadd.f32 %v235, %v474
    %v476 = vpop.f32.mrb[0].mxu0
    %477 = vmatprep.mubr.bf16.mxu0 %v195
    %478 = vmatmul.mubr.bf16.gmra.mrb[0].mxu0 %v194
    %v479 = vpop.f32.mrb[0].mxu0
    %v480 = vadd.f32 %v235, %v479
    %v481 = vpop.f32.mrb[0].mxu0
    %v482 = vpop.f32.mrb[0].mxu0
    %v483 = vadd.f32 %v235, %v482
    %v484 = vpop.f32.mrb[0].mxu0
    %485 = vmatprep.mubr.bf16.mxu0 %v197
    %486 = vmatmul.mubr.bf16.gmra.mrb[0].mxu0 %v196
    %v487 = vpop.f32.mrb[0].mxu0
    %v488 = vadd.f32 %v235, %v487
    %v489 = vpop.f32.mrb[0].mxu0
    %v490 = vpop.f32.mrb[0].mxu0
    %v491 = vadd.f32 %v235, %v490
    %v492 = vpop.f32.mrb[0].mxu0
    %493 = vdwg.mxu0
    %v494 = vmax.f32 %v368, 0.0
    %v495 = vmax.f32 %v371, 0.0
    %v496 = vmax.f32 %v376, 0.0
    %v497 = vmax.f32 %v379, 0.0
    %v498 = vmax.f32 %v384, 0.0
    %v499 = vmax.f32 %v387, 0.0
    %v500 = vmax.f32 %v392, 0.0
    %v501 = vmax.f32 %v395, 0.0
    %v502 = vmax.f32 %v400, 0.0
    %v503 = vmax.f32 %v403, 0.0
    %v504 = vmax.f32 %v408, 0.0
    %v505 = vmax.f32 %v411, 0.0
    %v506 = vmax.f32 %v416, 0.0
    %v507 = vmax.f32 %v419, 0.0
    %v508 = vmax.f32 %v424, 0.0
    %v509 = vmax.f32 %v427, 0.0
    %v510 = vmax.f32 %v432, 0.0
    %v511 = vmax.f32 %v435, 0.0
    %v512 = vmax.f32 %v440, 0.0
    %v513 = vmax.f32 %v443, 0.0
    %v514 = vmax.f32 %v448, 0.0
    %v515 = vmax.f32 %v451, 0.0
    %v516 = vmax.f32 %v456, 0.0
    %v517 = vmax.f32 %v459, 0.0
    %v518 = vmax.f32 %v464, 0.0
    %v519 = vmax.f32 %v467, 0.0
    %v520 = vmax.f32 %v472, 0.0
    %v521 = vmax.f32 %v475, 0.0
    %v522 = vmax.f32 %v480, 0.0
    %v523 = vmax.f32 %v483, 0.0
    %v524 = vmax.f32 %v488, 0.0
    %v525 = vmax.f32 %v491, 0.0
    %v526 = vpack.c.bf16 %v495, %v494
    %v527 = vpack.c.bf16 %v497, %v496
    %v528 = vpack.c.bf16 %v499, %v498
    %v529 = vpack.c.bf16 %v501, %v500
    %v530 = vpack.c.bf16 %v503, %v502
    %v531 = vpack.c.bf16 %v505, %v504
    %v532 = vpack.c.bf16 %v507, %v506
    %v533 = vpack.c.bf16 %v509, %v508
    %v534 = vpack.c.bf16 %v511, %v510
    %v535 = vpack.c.bf16 %v513, %v512
    %v536 = vpack.c.bf16 %v515, %v514
    %v537 = vpack.c.bf16 %v517, %v516
    %v538 = vpack.c.bf16 %v519, %v518
    %v539 = vpack.c.bf16 %v521, %v520
    %v540 = vpack.c.bf16 %v523, %v522
    %v541 = vpack.c.bf16 %v525, %v524
    %v542 = vld [vmem:[#allocation7] sm:$0xf]
    %v543 = vld [vmem:[#allocation7 + $0x4] sm:$0xf]
    %v544 = vld [vmem:[#allocation7 + $0x8] sm:$0xf]
    %v545 = vld [vmem:[#allocation7 + $0xc] sm:$0xf]
    %v546 = vld [vmem:[#allocation7 + $0x10] sm:$0xf]
    %v547 = vld [vmem:[#allocation7 + $0x14] sm:$0xf]
    %v548 = vld [vmem:[#allocation7 + $0x18] sm:$0xf]
    %v549 = vld [vmem:[#allocation7 + $0x1c] sm:$0xf]
    %v550 = vld [vmem:[#allocation7 + $0x20] sm:$0xf]
    %v551 = vld [vmem:[#allocation7 + $0x24] sm:$0xf]
    %v552 = vld [vmem:[#allocation7 + $0x28] sm:$0xf]
    %v553 = vld [vmem:[#allocation7 + $0x2c] sm:$0xf]
    %v554 = vld [vmem:[#allocation7 + $0x30] sm:$0xf]
    %v555 = vld [vmem:[#allocation7 + $0x34] sm:$0xf]
    %v556 = vld [vmem:[#allocation7 + $0x38] sm:$0xf]
    %v557 = vld [vmem:[#allocation7 + $0x3c] sm:$0xf]
    %v558 = vld [vmem:[%s4] sm:$0x1]
    %v560 = vlaneseq
    %v561 = vshrl.u32 %v560, 7
    %v562 = vsub.s32 0, %v561
    %v563 = vrot.slane %v558, %v562
    %v581 = vunpack.c.l.b16 %v542
    %v582 = vunpack.c.l.b16 %v543
    %v583 = vunpack.c.l.b16 %v544
    %v584 = vunpack.c.l.b16 %v545
    %v585 = vunpack.c.l.b16 %v546
    %v586 = vunpack.c.l.b16 %v547
    %v587 = vunpack.c.l.b16 %v548
    %v588 = vunpack.c.l.b16 %v549
    %v589 = vunpack.c.l.b16 %v550
    %v590 = vunpack.c.l.b16 %v551
    %v591 = vunpack.c.l.b16 %v552
    %v592 = vunpack.c.l.b16 %v553
    %v593 = vunpack.c.l.b16 %v554
    %v594 = vunpack.c.l.b16 %v555
    %v595 = vunpack.c.l.b16 %v556
    %v596 = vunpack.c.l.b16 %v557
    %v597 = vpack.c.b16 %v582, %v581
    %v598 = vpack.c.b16 %v584, %v583
    %v599 = vpack.c.b16 %v586, %v585
    %v600 = vpack.c.b16 %v588, %v587
    %v601 = vpack.c.b16 %v590, %v589
    %v602 = vpack.c.b16 %v592, %v591
    %v603 = vpack.c.b16 %v594, %v593
    %v604 = vpack.c.b16 %v596, %v595
    %613 = vmatprep.subr.bf16.mxu0 0
    %614 = vmatpush1.bf16.msra.mxu0 %v597
    %615 = vmatprep.subr.bf16.mxu0 0
    %616 = vmatpush1.bf16.msra.mxu0 %v598
    %617 = vmatprep.subr.bf16.mxu0 0
    %618 = vmatpush1.bf16.msra.mxu0 %v599
    %619 = vmatprep.subr.bf16.mxu0 0
    %620 = vmatpush1.bf16.msra.mxu0 %v600
    %621 = vmatprep.subr.bf16.mxu0 0
    %622 = vmatpush1.bf16.msra.mxu0 %v601
    %623 = vmatprep.subr.bf16.mxu0 0
    %624 = vmatpush1.bf16.msra.mxu0 %v602
    %625 = vmatprep.subr.bf16.mxu0 0
    %626 = vmatpush1.bf16.msra.mxu0 %v603
    %627 = vmatprep.subr.bf16.mxu0 0
    %628 = vmatpush1.bf16.msra.mxu0 %v604
    %629 = vmatprep.subr.bf16.mxu0 0
    %630 = vmatpush1.bf16.msra.mxu0 0
    %631 = vmatprep.subr.bf16.mxu0 0
    %632 = vmatpush1.bf16.msra.mxu0 0
    %633 = vmatprep.subr.bf16.mxu0 0
    %634 = vmatpush1.bf16.msra.mxu0 0
    %635 = vmatprep.subr.bf16.mxu0 0
    %636 = vmatpush1.bf16.msra.mxu0 0
    %637 = vmatprep.subr.bf16.mxu0 0
    %638 = vmatpush1.bf16.msra.mxu0 0
    %639 = vmatprep.subr.bf16.mxu0 0
    %640 = vmatpush1.bf16.msra.mxu0 0
    %641 = vmatprep.subr.bf16.mxu0 0
    %642 = vmatpush1.bf16.msra.mxu0 0
    %643 = vmatprep.subr.bf16.mxu0 0
    %644 = vmatpush1.bf16.msra.mxu0 0
    %645 = vmatprep.mubr.bf16.mxu0 0
    %646 = vmatmul.mubr.bf16.gmra.mrb[0].mxu0 %v526
    %v647 = vpop.f32.mrb[0].mxu0
    %v648 = vadd.f32 %v563, %v647
    %v649 = vpop.f32.mrb[0].mxu0
    %v650 = vpop.f32.mrb[0].mxu0
    %v651 = vadd.f32 %v563, %v650
    %v652 = vpop.f32.mrb[0].mxu0
    %653 = vmatprep.mubr.bf16.mxu0 0
    %654 = vmatmul.mubr.bf16.gmra.mrb[0].mxu0 %v527
    %v655 = vpop.f32.mrb[0].mxu0
    %v656 = vadd.f32 %v563, %v655
    %v657 = vpop.f32.mrb[0].mxu0
    %v658 = vpop.f32.mrb[0].mxu0
    %v659 = vadd.f32 %v563, %v658
    %v660 = vpop.f32.mrb[0].mxu0
    %661 = vmatprep.mubr.bf16.mxu0 0
    %662 = vmatmul.mubr.bf16.gmra.mrb[0].mxu0 %v528
    %v663 = vpop.f32.mrb[0].mxu0
    %v664 = vadd.f32 %v563, %v663
    %v665 = vpop.f32.mrb[0].mxu0
    %v666 = vpop.f32.mrb[0].mxu0
    %v667 = vadd.f32 %v563, %v666
    %v668 = vpop.f32.mrb[0].mxu0
    %669 = vmatprep.mubr.bf16.mxu0 0
    %670 = vmatmul.mubr.bf16.gmra.mrb[0].mxu0 %v529
    %v671 = vpop.f32.mrb[0].mxu0
    %v672 = vadd.f32 %v563, %v671
    %v673 = vpop.f32.mrb[0].mxu0
    %v674 = vpop.f32.mrb[0].mxu0
    %v675 = vadd.f32 %v563, %v674
    %v676 = vpop.f32.mrb[0].mxu0
    %677 = vmatprep.mubr.bf16.mxu0 0
    %678 = vmatmul.mubr.bf16.gmra.mrb[0].mxu0 %v530
    %v679 = vpop.f32.mrb[0].mxu0
    %v680 = vadd.f32 %v563, %v679
    %v681 = vpop.f32.mrb[0].mxu0
    %v682 = vpop.f32.mrb[0].mxu0
    %v683 = vadd.f32 %v563, %v682
    %v684 = vpop.f32.mrb[0].mxu0
    %685 = vmatprep.mubr.bf16.mxu0 0
    %686 = vmatmul.mubr.bf16.gmra.mrb[0].mxu0 %v531
    %v687 = vpop.f32.mrb[0].mxu0
    %v688 = vadd.f32 %v563, %v687
    %v689 = vpop.f32.mrb[0].mxu0
    %v690 = vpop.f32.mrb[0].mxu0
    %v691 = vadd.f32 %v563, %v690
    %v692 = vpop.f32.mrb[0].mxu0
    %693 = vmatprep.mubr.bf16.mxu0 0
    %694 = vmatmul.mubr.bf16.gmra.mrb[0].mxu0 %v532
    %v695 = vpop.f32.mrb[0].mxu0
    %v696 = vadd.f32 %v563, %v695
    %v697 = vpop.f32.mrb[0].mxu0
    %v698 = vpop.f32.mrb[0].mxu0
    %v699 = vadd.f32 %v563, %v698
    %v700 = vpop.f32.mrb[0].mxu0
    %701 = vmatprep.mubr.bf16.mxu0 0
    %702 = vmatmul.mubr.bf16.gmra.mrb[0].mxu0 %v533
    %v703 = vpop.f32.mrb[0].mxu0
    %v704 = vadd.f32 %v563, %v703
    %v705 = vpop.f32.mrb[0].mxu0
    %v706 = vpop.f32.mrb[0].mxu0
    %v707 = vadd.f32 %v563, %v706
    %v708 = vpop.f32.mrb[0].mxu0
    %709 = vmatprep.mubr.bf16.mxu0 0
    %710 = vmatmul.mubr.bf16.gmra.mrb[0].mxu0 %v534
    %v711 = vpop.f32.mrb[0].mxu0
    %v712 = vadd.f32 %v563, %v711
    %v713 = vpop.f32.mrb[0].mxu0
    %v714 = vpop.f32.mrb[0].mxu0
    %v715 = vadd.f32 %v563, %v714
    %v716 = vpop.f32.mrb[0].mxu0
    %717 = vmatprep.mubr.bf16.mxu0 0
    %718 = vmatmul.mubr.bf16.gmra.mrb[0].mxu0 %v535
    %v719 = vpop.f32.mrb[0].mxu0
    %v720 = vadd.f32 %v563, %v719
    %v721 = vpop.f32.mrb[0].mxu0
    %v722 = vpop.f32.mrb[0].mxu0
    %v723 = vadd.f32 %v563, %v722
    %v724 = vpop.f32.mrb[0].mxu0
    %725 = vmatprep.mubr.bf16.mxu0 0
    %726 = vmatmul.mubr.bf16.gmra.mrb[0].mxu0 %v536
    %v727 = vpop.f32.mrb[0].mxu0
    %v728 = vadd.f32 %v563, %v727
    %v729 = vpop.f32.mrb[0].mxu0
    %v730 = vpop.f32.mrb[0].mxu0
    %v731 = vadd.f32 %v563, %v730
    %v732 = vpop.f32.mrb[0].mxu0
    %733 = vmatprep.mubr.bf16.mxu0 0
    %734 = vmatmul.mubr.bf16.gmra.mrb[0].mxu0 %v537
    %v735 = vpop.f32.mrb[0].mxu0
    %v736 = vadd.f32 %v563, %v735
    %v737 = vpop.f32.mrb[0].mxu0
    %v738 = vpop.f32.mrb[0].mxu0
    %v739 = vadd.f32 %v563, %v738
    %v740 = vpop.f32.mrb[0].mxu0
    %741 = vmatprep.mubr.bf16.mxu0 0
    %742 = vmatmul.mubr.bf16.gmra.mrb[0].mxu0 %v538
    %v743 = vpop.f32.mrb[0].mxu0
    %v744 = vadd.f32 %v563, %v743
    %v745 = vpop.f32.mrb[0].mxu0
    %v746 = vpop.f32.mrb[0].mxu0
    %v747 = vadd.f32 %v563, %v746
    %v748 = vpop.f32.mrb[0].mxu0
    %749 = vmatprep.mubr.bf16.mxu0 0
    %750 = vmatmul.mubr.bf16.gmra.mrb[0].mxu0 %v539
    %v751 = vpop.f32.mrb[0].mxu0
    %v752 = vadd.f32 %v563, %v751
    %v753 = vpop.f32.mrb[0].mxu0
    %v754 = vpop.f32.mrb[0].mxu0
    %v755 = vadd.f32 %v563, %v754
    %v756 = vpop.f32.mrb[0].mxu0
    %757 = vmatprep.mubr.bf16.mxu0 0
    %758 = vmatmul.mubr.bf16.gmra.mrb[0].mxu0 %v540
    %v759 = vpop.f32.mrb[0].mxu0
    %v760 = vadd.f32 %v563, %v759
    %v761 = vpop.f32.mrb[0].mxu0
    %v762 = vpop.f32.mrb[0].mxu0
    %v763 = vadd.f32 %v563, %v762
    %v764 = vpop.f32.mrb[0].mxu0
    %765 = vmatprep.mubr.bf16.mxu0 0
    %766 = vmatmul.mubr.bf16.gmra.mrb[0].mxu0 %v541
    %v767 = vpop.f32.mrb[0].mxu0
    %v768 = vadd.f32 %v563, %v767
    %v769 = vpop.f32.mrb[0].mxu0
    %v770 = vpop.f32.mrb[0].mxu0
    %v771 = vadd.f32 %v563, %v770
    %v772 = vpop.f32.mrb[0].mxu0
    %773 = vdwg.mxu0
    %v774 = vmax.f32 %v648, 0.0
    %v775 = vmax.f32 %v651, 0.0
    %v776 = vmax.f32 %v656, 0.0
    %v777 = vmax.f32 %v659, 0.0
    %v778 = vmax.f32 %v664, 0.0
    %v779 = vmax.f32 %v667, 0.0
    %v780 = vmax.f32 %v672, 0.0
    %v781 = vmax.f32 %v675, 0.0
    %v782 = vmax.f32 %v680, 0.0
    %v783 = vmax.f32 %v683, 0.0
    %v784 = vmax.f32 %v688, 0.0
    %v785 = vmax.f32 %v691, 0.0
    %v786 = vmax.f32 %v696, 0.0
    %v787 = vmax.f32 %v699, 0.0
    %v788 = vmax.f32 %v704, 0.0
    %v789 = vmax.f32 %v707, 0.0
    %v790 = vmax.f32 %v712, 0.0
    %v791 = vmax.f32 %v715, 0.0
    %v792 = vmax.f32 %v720, 0.0
    %v793 = vmax.f32 %v723, 0.0
    %v794 = vmax.f32 %v728, 0.0
    %v795 = vmax.f32 %v731, 0.0
    %v796 = vmax.f32 %v736, 0.0
    %v797 = vmax.f32 %v739, 0.0
    %v798 = vmax.f32 %v744, 0.0
    %v799 = vmax.f32 %v747, 0.0
    %v800 = vmax.f32 %v752, 0.0
    %v801 = vmax.f32 %v755, 0.0
    %v802 = vmax.f32 %v760, 0.0
    %v803 = vmax.f32 %v763, 0.0
    %v804 = vmax.f32 %v768, 0.0
    %v805 = vmax.f32 %v771, 0.0
    %v806 = vpack.c.bf16 %v775, %v774
    %v807 = vpack.c.bf16 %v777, %v776
    %v808 = vpack.c.bf16 %v779, %v778
    %v809 = vpack.c.bf16 %v781, %v780
    %v810 = vpack.c.bf16 %v783, %v782
    %v811 = vpack.c.bf16 %v785, %v784
    %v812 = vpack.c.bf16 %v787, %v786
    %v813 = vpack.c.bf16 %v789, %v788
    %v814 = vpack.c.bf16 %v791, %v790
    %v815 = vpack.c.bf16 %v793, %v792
    %v816 = vpack.c.bf16 %v795, %v794
    %v817 = vpack.c.bf16 %v797, %v796
    %v818 = vpack.c.bf16 %v799, %v798
    %v819 = vpack.c.bf16 %v801, %v800
    %v820 = vpack.c.bf16 %v803, %v802
    %v821 = vpack.c.bf16 %v805, %v804
    %v822 = vld [vmem:[#allocation8] sm:$0xf]
    %v823 = vld [vmem:[#allocation8 + $0x4] sm:$0xf]
    %v824 = vld [vmem:[#allocation8 + $0x8] sm:$0xf]
    %v825 = vld [vmem:[#allocation8 + $0xc] sm:$0xf]
    %v826 = vld [vmem:[#allocation8 + $0x10] sm:$0xf]
    %v827 = vld [vmem:[#allocation8 + $0x14] sm:$0xf]
    %v828 = vld [vmem:[#allocation8 + $0x18] sm:$0xf]
    %v829 = vld [vmem:[#allocation8 + $0x1c] sm:$0xf]
    %v830 = vld [vmem:[#allocation8 + $0x20] sm:$0xf]
    %v831 = vld [vmem:[#allocation8 + $0x24] sm:$0xf]
    %v832 = vld [vmem:[#allocation8 + $0x28] sm:$0xf]
    %v833 = vld [vmem:[#allocation8 + $0x2c] sm:$0xf]
    %v834 = vld [vmem:[#allocation8 + $0x30] sm:$0xf]
    %v835 = vld [vmem:[#allocation8 + $0x34] sm:$0xf]
    %v836 = vld [vmem:[#allocation8 + $0x38] sm:$0xf]
    %v837 = vld [vmem:[#allocation8 + $0x3c] sm:$0xf]
    %v838 = vld [vmem:[%s6] sm:$0x1]
    %v840 = vlaneseq
    %v841 = vshrl.u32 %v840, 7
    %v842 = vsub.s32 0, %v841
    %v843 = vrot.slane %v838, %v842
    %v861 = vunpack.c.l.b16 %v822
    %v862 = vunpack.c.l.b16 %v823
    %v863 = vunpack.c.l.b16 %v824
    %v864 = vunpack.c.l.b16 %v825
    %v865 = vunpack.c.l.b16 %v826
    %v866 = vunpack.c.l.b16 %v827
    %v867 = vunpack.c.l.b16 %v828
    %v868 = vunpack.c.l.b16 %v829
    %v869 = vunpack.c.l.b16 %v830
    %v870 = vunpack.c.l.b16 %v831
    %v871 = vunpack.c.l.b16 %v832
    %v872 = vunpack.c.l.b16 %v833
    %v873 = vunpack.c.l.b16 %v834
    %v874 = vunpack.c.l.b16 %v835
    %v875 = vunpack.c.l.b16 %v836
    %v876 = vunpack.c.l.b16 %v837
    %v877 = vpack.c.b16 %v862, %v861
    %v878 = vpack.c.b16 %v864, %v863
    %v879 = vpack.c.b16 %v866, %v865
    %v880 = vpack.c.b16 %v868, %v867
    %v881 = vpack.c.b16 %v870, %v869
    %v882 = vpack.c.b16 %v872, %v871
    %v883 = vpack.c.b16 %v874, %v873
    %v884 = vpack.c.b16 %v876, %v875
    %893 = vmatprep.subr.bf16.mxu0 0
    %894 = vmatpush1.bf16.msra.mxu0 %v877
    %895 = vmatprep.subr.bf16.mxu0 0
    %896 = vmatpush1.bf16.msra.mxu0 %v878
    %897 = vmatprep.subr.bf16.mxu0 0
    %898 = vmatpush1.bf16.msra.mxu0 %v879
    %899 = vmatprep.subr.bf16.mxu0 0
    %900 = vmatpush1.bf16.msra.mxu0 %v880
    %901 = vmatprep.subr.bf16.mxu0 0
    %902 = vmatpush1.bf16.msra.mxu0 %v881
    %903 = vmatprep.subr.bf16.mxu0 0
    %904 = vmatpush1.bf16.msra.mxu0 %v882
    %905 = vmatprep.subr.bf16.mxu0 0
    %906 = vmatpush1.bf16.msra.mxu0 %v883
    %907 = vmatprep.subr.bf16.mxu0 0
    %908 = vmatpush1.bf16.msra.mxu0 %v884
    %909 = vmatprep.subr.bf16.mxu0 0
    %910 = vmatpush1.bf16.msra.mxu0 0
    %911 = vmatprep.subr.bf16.mxu0 0
    %912 = vmatpush1.bf16.msra.mxu0 0
    %913 = vmatprep.subr.bf16.mxu0 0
    %914 = vmatpush1.bf16.msra.mxu0 0
    %915 = vmatprep.subr.bf16.mxu0 0
    %916 = vmatpush1.bf16.msra.mxu0 0
    %917 = vmatprep.subr.bf16.mxu0 0
    %918 = vmatpush1.bf16.msra.mxu0 0
    %919 = vmatprep.subr.bf16.mxu0 0
    %920 = vmatpush1.bf16.msra.mxu0 0
    %921 = vmatprep.subr.bf16.mxu0 0
    %922 = vmatpush1.bf16.msra.mxu0 0
    %923 = vmatprep.subr.bf16.mxu0 0
    %924 = vmatpush1.bf16.msra.mxu0 0
    %925 = vmatprep.mubr.bf16.mxu0 0
    %926 = vmatmul.mubr.bf16.gmra.mrb[0].mxu0 %v806
    %v927 = vpop.f32.mrb[0].mxu0
    %v928 = vadd.f32 %v843, %v927
    %v929 = vpop.f32.mrb[0].mxu0
    %v930 = vpop.f32.mrb[0].mxu0
    %v931 = vadd.f32 %v843, %v930
    %v932 = vpop.f32.mrb[0].mxu0
    %933 = vmatprep.mubr.bf16.mxu0 0
    %934 = vmatmul.mubr.bf16.gmra.mrb[0].mxu0 %v807
    %v935 = vpop.f32.mrb[0].mxu0
    %v936 = vadd.f32 %v843, %v935
    %v937 = vpop.f32.mrb[0].mxu0
    %v938 = vpop.f32.mrb[0].mxu0
    %v939 = vadd.f32 %v843, %v938
    %v940 = vpop.f32.mrb[0].mxu0
    %941 = vmatprep.mubr.bf16.mxu0 0
    %942 = vmatmul.mubr.bf16.gmra.mrb[0].mxu0 %v808
    %v943 = vpop.f32.mrb[0].mxu0
    %v944 = vadd.f32 %v843, %v943
    %v945 = vpop.f32.mrb[0].mxu0
    %v946 = vpop.f32.mrb[0].mxu0
    %v947 = vadd.f32 %v843, %v946
    %v948 = vpop.f32.mrb[0].mxu0
    %949 = vmatprep.mubr.bf16.mxu0 0
    %950 = vmatmul.mubr.bf16.gmra.mrb[0].mxu0 %v809
    %v951 = vpop.f32.mrb[0].mxu0
    %v952 = vadd.f32 %v843, %v951
    %v953 = vpop.f32.mrb[0].mxu0
    %v954 = vpop.f32.mrb[0].mxu0
    %v955 = vadd.f32 %v843, %v954
    %v956 = vpop.f32.mrb[0].mxu0
    %957 = vmatprep.mubr.bf16.mxu0 0
    %958 = vmatmul.mubr.bf16.gmra.mrb[0].mxu0 %v810
    %v959 = vpop.f32.mrb[0].mxu0
    %v960 = vadd.f32 %v843, %v959
    %v961 = vpop.f32.mrb[0].mxu0
    %v962 = vpop.f32.mrb[0].mxu0
    %v963 = vadd.f32 %v843, %v962
    %v964 = vpop.f32.mrb[0].mxu0
    %965 = vmatprep.mubr.bf16.mxu0 0
    %966 = vmatmul.mubr.bf16.gmra.mrb[0].mxu0 %v811
    %v967 = vpop.f32.mrb[0].mxu0
    %v968 = vadd.f32 %v843, %v967
    %v969 = vpop.f32.mrb[0].mxu0
    %v970 = vpop.f32.mrb[0].mxu0
    %v971 = vadd.f32 %v843, %v970
    %v972 = vpop.f32.mrb[0].mxu0
    %973 = vmatprep.mubr.bf16.mxu0 0
    %974 = vmatmul.mubr.bf16.gmra.mrb[0].mxu0 %v812
    %v975 = vpop.f32.mrb[0].mxu0
    %v976 = vadd.f32 %v843, %v975
    %v977 = vpop.f32.mrb[0].mxu0
    %v978 = vpop.f32.mrb[0].mxu0
    %v979 = vadd.f32 %v843, %v978
    %v980 = vpop.f32.mrb[0].mxu0
    %981 = vmatprep.mubr.bf16.mxu0 0
    %982 = vmatmul.mubr.bf16.gmra.mrb[0].mxu0 %v813
    %v983 = vpop.f32.mrb[0].mxu0
    %v984 = vadd.f32 %v843, %v983
    %v985 = vpop.f32.mrb[0].mxu0
    %v986 = vpop.f32.mrb[0].mxu0
    %v987 = vadd.f32 %v843, %v986
    %v988 = vpop.f32.mrb[0].mxu0
    %989 = vmatprep.mubr.bf16.mxu0 0
    %990 = vmatmul.mubr.bf16.gmra.mrb[0].mxu0 %v814
    %v991 = vpop.f32.mrb[0].mxu0
    %v992 = vadd.f32 %v843, %v991
    %v993 = vpop.f32.mrb[0].mxu0
    %v994 = vpop.f32.mrb[0].mxu0
    %v995 = vadd.f32 %v843, %v994
    %v996 = vpop.f32.mrb[0].mxu0
    %997 = vmatprep.mubr.bf16.mxu0 0
    %998 = vmatmul.mubr.bf16.gmra.mrb[0].mxu0 %v815
    %v999 = vpop.f32.mrb[0].mxu0
    %v1000 = vadd.f32 %v843, %v999
    %v1001 = vpop.f32.mrb[0].mxu0
    %v1002 = vpop.f32.mrb[0].mxu0
    %v1003 = vadd.f32 %v843, %v1002
    %v1004 = vpop.f32.mrb[0].mxu0
    %1005 = vmatprep.mubr.bf16.mxu0 0
    %1006 = vmatmul.mubr.bf16.gmra.mrb[0].mxu0 %v816
    %v1007 = vpop.f32.mrb[0].mxu0
    %v1008 = vadd.f32 %v843, %v1007
    %v1009 = vpop.f32.mrb[0].mxu0
    %v1010 = vpop.f32.mrb[0].mxu0
    %v1011 = vadd.f32 %v843, %v1010
    %v1012 = vpop.f32.mrb[0].mxu0
    %1013 = vmatprep.mubr.bf16.mxu0 0
    %1014 = vmatmul.mubr.bf16.gmra.mrb[0].mxu0 %v817
    %v1015 = vpop.f32.mrb[0].mxu0
    %v1016 = vadd.f32 %v843, %v1015
    %v1017 = vpop.f32.mrb[0].mxu0
    %v1018 = vpop.f32.mrb[0].mxu0
    %v1019 = vadd.f32 %v843, %v1018
    %v1020 = vpop.f32.mrb[0].mxu0
    %1021 = vmatprep.mubr.bf16.mxu0 0
    %1022 = vmatmul.mubr.bf16.gmra.mrb[0].mxu0 %v818
    %v1023 = vpop.f32.mrb[0].mxu0
    %v1024 = vadd.f32 %v843, %v1023
    %v1025 = vpop.f32.mrb[0].mxu0
    %v1026 = vpop.f32.mrb[0].mxu0
    %v1027 = vadd.f32 %v843, %v1026
    %v1028 = vpop.f32.mrb[0].mxu0
    %1029 = vmatprep.mubr.bf16.mxu0 0
    %1030 = vmatmul.mubr.bf16.gmra.mrb[0].mxu0 %v819
    %v1031 = vpop.f32.mrb[0].mxu0
    %v1032 = vadd.f32 %v843, %v1031
    %v1033 = vpop.f32.mrb[0].mxu0
    %v1034 = vpop.f32.mrb[0].mxu0
    %v1035 = vadd.f32 %v843, %v1034
    %v1036 = vpop.f32.mrb[0].mxu0
    %1037 = vmatprep.mubr.bf16.mxu0 0
    %1038 = vmatmul.mubr.bf16.gmra.mrb[0].mxu0 %v820
    %v1039 = vpop.f32.mrb[0].mxu0
    %v1040 = vadd.f32 %v843, %v1039
    %v1041 = vpop.f32.mrb[0].mxu0
    %v1042 = vpop.f32.mrb[0].mxu0
    %v1043 = vadd.f32 %v843, %v1042
    %v1044 = vpop.f32.mrb[0].mxu0
    %1045 = vmatprep.mubr.bf16.mxu0 0
    %1046 = vmatmul.mubr.bf16.gmra.mrb[0].mxu0 %v821
    %v1047 = vpop.f32.mrb[0].mxu0
    %v1048 = vadd.f32 %v843, %v1047
    %v1049 = vpop.f32.mrb[0].mxu0
    %v1050 = vpop.f32.mrb[0].mxu0
    %v1051 = vadd.f32 %v843, %v1050
    %v1052 = vpop.f32.mrb[0].mxu0
    %1053 = vdwg.mxu0
    %v1054 = vmax.f32 %v928, 0.0
    %v1055 = vmax.f32 %v931, 0.0
    %v1056 = vmax.f32 %v936, 0.0
    %v1057 = vmax.f32 %v939, 0.0
    %v1058 = vmax.f32 %v944, 0.0
    %v1059 = vmax.f32 %v947, 0.0
    %v1060 = vmax.f32 %v952, 0.0
    %v1061 = vmax.f32 %v955, 0.0
    %v1062 = vmax.f32 %v960, 0.0
    %v1063 = vmax.f32 %v963, 0.0
    %v1064 = vmax.f32 %v968, 0.0
    %v1065 = vmax.f32 %v971, 0.0
    %v1066 = vmax.f32 %v976, 0.0
    %v1067 = vmax.f32 %v979, 0.0
    %v1068 = vmax.f32 %v984, 0.0
    %v1069 = vmax.f32 %v987, 0.0
    %v1070 = vmax.f32 %v992, 0.0
    %v1071 = vmax.f32 %v995, 0.0
    %v1072 = vmax.f32 %v1000, 0.0
    %v1073 = vmax.f32 %v1003, 0.0
    %v1074 = vmax.f32 %v1008, 0.0
    %v1075 = vmax.f32 %v1011, 0.0
    %v1076 = vmax.f32 %v1016, 0.0
    %v1077 = vmax.f32 %v1019, 0.0
    %v1078 = vmax.f32 %v1024, 0.0
    %v1079 = vmax.f32 %v1027, 0.0
    %v1080 = vmax.f32 %v1032, 0.0
    %v1081 = vmax.f32 %v1035, 0.0
    %v1082 = vmax.f32 %v1040, 0.0
    %v1083 = vmax.f32 %v1043, 0.0
    %v1084 = vmax.f32 %v1048, 0.0
    %v1085 = vmax.f32 %v1051, 0.0
    %v1086 = vpack.c.bf16 %v1055, %v1054
    %v1087 = vpack.c.bf16 %v1057, %v1056
    %v1088 = vpack.c.bf16 %v1059, %v1058
    %v1089 = vpack.c.bf16 %v1061, %v1060
    %v1090 = vpack.c.bf16 %v1063, %v1062
    %v1091 = vpack.c.bf16 %v1065, %v1064
    %v1092 = vpack.c.bf16 %v1067, %v1066
    %v1093 = vpack.c.bf16 %v1069, %v1068
    %v1094 = vpack.c.bf16 %v1071, %v1070
    %v1095 = vpack.c.bf16 %v1073, %v1072
    %v1096 = vpack.c.bf16 %v1075, %v1074
    %v1097 = vpack.c.bf16 %v1077, %v1076
    %v1098 = vpack.c.bf16 %v1079, %v1078
    %v1099 = vpack.c.bf16 %v1081, %v1080
    %v1100 = vpack.c.bf16 %v1083, %v1082
    %v1101 = vpack.c.bf16 %v1085, %v1084
    %v1102 = vld [vmem:[#allocation10] sm:$0xff]
    %v1103 = vld [vmem:[#allocation10 + $0x8] sm:$0xff]
    %v1104 = vld [vmem:[#allocation10 + $0x10] sm:$0xff]
    %v1105 = vld [vmem:[#allocation10 + $0x18] sm:$0xff]
    %v1106 = vld [vmem:[#allocation10 + $0x20] sm:$0xff]
    %v1107 = vld [vmem:[#allocation10 + $0x28] sm:$0xff]
    %v1108 = vld [vmem:[#allocation10 + $0x30] sm:$0xff]
    %v1109 = vld [vmem:[#allocation10 + $0x38] sm:$0xff]
    %v1110 = vld [vmem:[#allocation10 + $0x40] sm:$0xff]
    %v1111 = vld [vmem:[#allocation10 + $0x48] sm:$0xff]
    %v1112 = vld [vmem:[#allocation10 + $0x50] sm:$0xff]
    %v1113 = vld [vmem:[#allocation10 + $0x58] sm:$0xff]
    %v1114 = vld [vmem:[#allocation10 + $0x60] sm:$0xff]
    %v1115 = vld [vmem:[#allocation10 + $0x68] sm:$0xff]
    %v1116 = vld [vmem:[#allocation10 + $0x70] sm:$0xff]
    %v1117 = vld [vmem:[#allocation10 + $0x78] sm:$0xff]
    %v1118 = vld [vmem:[%s8] sm:$0x3]
    %v1120 = vlaneseq
    %v1121 = vshrl.u32 %v1120, 7
    %v1122 = vsub.s32 0, %v1121
    %v1123 = vrot.slane %v1118, %v1122
    %v1124 = vlaneseq
    %v1125 = vshrl.u32 %v1124, 7
    %v1126 = vsub.s32 1, %v1125
    %v1127 = vrot.slane %v1118, %v1126
    %v1146 = vunpack.c.l.b16 %v1102
    %v1147 = vunpack.c.h.b16 %v1102
    %v1148 = vunpack.c.l.b16 %v1103
    %v1149 = vunpack.c.h.b16 %v1103
    %v1150 = vunpack.c.l.b16 %v1104
    %v1151 = vunpack.c.h.b16 %v1104
    %v1152 = vunpack.c.l.b16 %v1105
    %v1153 = vunpack.c.h.b16 %v1105
    %v1154 = vunpack.c.l.b16 %v1106
    %v1155 = vunpack.c.h.b16 %v1106
    %v1156 = vunpack.c.l.b16 %v1107
    %v1157 = vunpack.c.h.b16 %v1107
    %v1158 = vunpack.c.l.b16 %v1108
    %v1159 = vunpack.c.h.b16 %v1108
    %v1160 = vunpack.c.l.b16 %v1109
    %v1161 = vunpack.c.h.b16 %v1109
    %v1162 = vunpack.c.l.b16 %v1110
    %v1163 = vunpack.c.h.b16 %v1110
    %v1164 = vunpack.c.l.b16 %v1111
    %v1165 = vunpack.c.h.b16 %v1111
    %v1166 = vunpack.c.l.b16 %v1112
    %v1167 = vunpack.c.h.b16 %v1112
    %v1168 = vunpack.c.l.b16 %v1113
    %v1169 = vunpack.c.h.b16 %v1113
    %v1170 = vunpack.c.l.b16 %v1114
    %v1171 = vunpack.c.h.b16 %v1114
    %v1172 = vunpack.c.l.b16 %v1115
    %v1173 = vunpack.c.h.b16 %v1115
    %v1174 = vunpack.c.l.b16 %v1116
    %v1175 = vunpack.c.h.b16 %v1116
    %v1176 = vunpack.c.l.b16 %v1117
    %v1177 = vunpack.c.h.b16 %v1117
    %v1178 = vpack.c.b16 %v1148, %v1146
    %v1179 = vpack.c.b16 %v1149, %v1147
    %v1180 = vpack.c.b16 %v1152, %v1150
    %v1181 = vpack.c.b16 %v1153, %v1151
    %v1182 = vpack.c.b16 %v1156, %v1154
    %v1183 = vpack.c.b16 %v1157, %v1155
    %v1184 = vpack.c.b16 %v1160, %v1158
    %v1185 = vpack.c.b16 %v1161, %v1159
    %v1186 = vpack.c.b16 %v1164, %v1162
    %v1187 = vpack.c.b16 %v1165, %v1163
    %v1188 = vpack.c.b16 %v1168, %v1166
    %v1189 = vpack.c.b16 %v1169, %v1167
    %v1190 = vpack.c.b16 %v1172, %v1170
    %v1191 = vpack.c.b16 %v1173, %v1171
    %v1192 = vpack.c.b16 %v1176, %v1174
    %v1193 = vpack.c.b16 %v1177, %v1175
    %1210 = vmatprep.subr.bf16.mxu0 %v1179
    %1211 = vmatpush1.bf16.msra.mxu0 %v1178
    %1212 = vmatprep.subr.bf16.mxu0 %v1181
    %1213 = vmatpush1.bf16.msra.mxu0 %v1180
    %1214 = vmatprep.subr.bf16.mxu0 %v1183
    %1215 = vmatpush1.bf16.msra.mxu0 %v1182
    %1216 = vmatprep.subr.bf16.mxu0 %v1185
    %1217 = vmatpush1.bf16.msra.mxu0 %v1184
    %1218 = vmatprep.subr.bf16.mxu0 %v1187
    %1219 = vmatpush1.bf16.msra.mxu0 %v1186
    %1220 = vmatprep.subr.bf16.mxu0 %v1189
    %1221 = vmatpush1.bf16.msra.mxu0 %v1188
    %1222 = vmatprep.subr.bf16.mxu0 %v1191
    %1223 = vmatpush1.bf16.msra.mxu0 %v1190
    %1224 = vmatprep.subr.bf16.mxu0 %v1193
    %1225 = vmatpush1.bf16.msra.mxu0 %v1192
    %1226 = vmatprep.subr.bf16.mxu0 0
    %1227 = vmatpush1.bf16.msra.mxu0 0
    %1228 = vmatprep.subr.bf16.mxu0 0
    %1229 = vmatpush1.bf16.msra.mxu0 0
    %1230 = vmatprep.subr.bf16.mxu0 0
    %1231 = vmatpush1.bf16.msra.mxu0 0
    %1232 = vmatprep.subr.bf16.mxu0 0
    %1233 = vmatpush1.bf16.msra.mxu0 0
    %1234 = vmatprep.subr.bf16.mxu0 0
    %1235 = vmatpush1.bf16.msra.mxu0 0
    %1236 = vmatprep.subr.bf16.mxu0 0
    %1237 = vmatpush1.bf16.msra.mxu0 0
    %1238 = vmatprep.subr.bf16.mxu0 0
    %1239 = vmatpush1.bf16.msra.mxu0 0
    %1240 = vmatprep.subr.bf16.mxu0 0
    %1241 = vmatpush1.bf16.msra.mxu0 0
    %1242 = vmatprep.mubr.bf16.mxu0 0
    %1243 = vmatmul.mubr.bf16.gmra.mrb[0].mxu0 %v1086
    %v1244 = vpop.f32.mrb[0].mxu0
    %v1245 = vadd.f32 %v1123, %v1244
    %v1246 = vpop.f32.mrb[0].mxu0
    %v1247 = vadd.f32 %v1127, %v1246
    %v1248 = vpop.f32.mrb[0].mxu0
    %v1249 = vadd.f32 %v1123, %v1248
    %v1250 = vpop.f32.mrb[0].mxu0
    %v1251 = vadd.f32 %v1127, %v1250
    %1252 = vmatprep.mubr.bf16.mxu0 0
    %1253 = vmatmul.mubr.bf16.gmra.mrb[0].mxu0 %v1087
    %v1254 = vpop.f32.mrb[0].mxu0
    %v1255 = vadd.f32 %v1123, %v1254
    %v1256 = vpop.f32.mrb[0].mxu0
    %v1257 = vadd.f32 %v1127, %v1256
    %v1258 = vpop.f32.mrb[0].mxu0
    %v1259 = vadd.f32 %v1123, %v1258
    %v1260 = vpop.f32.mrb[0].mxu0
    %v1261 = vadd.f32 %v1127, %v1260
    %1262 = vmatprep.mubr.bf16.mxu0 0
    %1263 = vmatmul.mubr.bf16.gmra.mrb[0].mxu0 %v1088
    %v1264 = vpop.f32.mrb[0].mxu0
    %v1265 = vadd.f32 %v1123, %v1264
    %v1266 = vpop.f32.mrb[0].mxu0
    %v1267 = vadd.f32 %v1127, %v1266
    %v1268 = vpop.f32.mrb[0].mxu0
    %v1269 = vadd.f32 %v1123, %v1268
    %v1270 = vpop.f32.mrb[0].mxu0
    %v1271 = vadd.f32 %v1127, %v1270
    %1272 = vmatprep.mubr.bf16.mxu0 0
    %1273 = vmatmul.mubr.bf16.gmra.mrb[0].mxu0 %v1089
    %v1274 = vpop.f32.mrb[0].mxu0
    %v1275 = vadd.f32 %v1123, %v1274
    %v1276 = vpop.f32.mrb[0].mxu0
    %v1277 = vadd.f32 %v1127, %v1276
    %v1278 = vpop.f32.mrb[0].mxu0
    %v1279 = vadd.f32 %v1123, %v1278
    %v1280 = vpop.f32.mrb[0].mxu0
    %v1281 = vadd.f32 %v1127, %v1280
    %1282 = vmatprep.mubr.bf16.mxu0 0
    %1283 = vmatmul.mubr.bf16.gmra.mrb[0].mxu0 %v1090
    %v1284 = vpop.f32.mrb[0].mxu0
    %v1285 = vadd.f32 %v1123, %v1284
    %v1286 = vpop.f32.mrb[0].mxu0
    %v1287 = vadd.f32 %v1127, %v1286
    %v1288 = vpop.f32.mrb[0].mxu0
    %v1289 = vadd.f32 %v1123, %v1288
    %v1290 = vpop.f32.mrb[0].mxu0
    %v1291 = vadd.f32 %v1127, %v1290
    %1292 = vmatprep.mubr.bf16.mxu0 0
    %1293 = vmatmul.mubr.bf16.gmra.mrb[0].mxu0 %v1091
    %v1294 = vpop.f32.mrb[0].mxu0
    %v1295 = vadd.f32 %v1123, %v1294
    %v1296 = vpop.f32.mrb[0].mxu0
    %v1297 = vadd.f32 %v1127, %v1296
    %v1298 = vpop.f32.mrb[0].mxu0
    %v1299 = vadd.f32 %v1123, %v1298
    %v1300 = vpop.f32.mrb[0].mxu0
    %v1301 = vadd.f32 %v1127, %v1300
    %1302 = vmatprep.mubr.bf16.mxu0 0
    %1303 = vmatmul.mubr.bf16.gmra.mrb[0].mxu0 %v1092
    %v1304 = vpop.f32.mrb[0].mxu0
    %v1305 = vadd.f32 %v1123, %v1304
    %v1306 = vpop.f32.mrb[0].mxu0
    %v1307 = vadd.f32 %v1127, %v1306
    %v1308 = vpop.f32.mrb[0].mxu0
    %v1309 = vadd.f32 %v1123, %v1308
    %v1310 = vpop.f32.mrb[0].mxu0
    %v1311 = vadd.f32 %v1127, %v1310
    %1312 = vmatprep.mubr.bf16.mxu0 0
    %1313 = vmatmul.mubr.bf16.gmra.mrb[0].mxu0 %v1093
    %v1314 = vpop.f32.mrb[0].mxu0
    %v1315 = vadd.f32 %v1123, %v1314
    %v1316 = vpop.f32.mrb[0].mxu0
    %v1317 = vadd.f32 %v1127, %v1316
    %v1318 = vpop.f32.mrb[0].mxu0
    %v1319 = vadd.f32 %v1123, %v1318
    %v1320 = vpop.f32.mrb[0].mxu0
    %v1321 = vadd.f32 %v1127, %v1320
    %1322 = vmatprep.mubr.bf16.mxu0 0
    %1323 = vmatmul.mubr.bf16.gmra.mrb[0].mxu0 %v1094
    %v1324 = vpop.f32.mrb[0].mxu0
    %v1325 = vadd.f32 %v1123, %v1324
    %v1326 = vpop.f32.mrb[0].mxu0
    %v1327 = vadd.f32 %v1127, %v1326
    %v1328 = vpop.f32.mrb[0].mxu0
    %v1329 = vadd.f32 %v1123, %v1328
    %v1330 = vpop.f32.mrb[0].mxu0
    %v1331 = vadd.f32 %v1127, %v1330
    %1332 = vmatprep.mubr.bf16.mxu0 0
    %1333 = vmatmul.mubr.bf16.gmra.mrb[0].mxu0 %v1095
    %v1334 = vpop.f32.mrb[0].mxu0
    %v1335 = vadd.f32 %v1123, %v1334
    %v1336 = vpop.f32.mrb[0].mxu0
    %v1337 = vadd.f32 %v1127, %v1336
    %v1338 = vpop.f32.mrb[0].mxu0
    %v1339 = vadd.f32 %v1123, %v1338
    %v1340 = vpop.f32.mrb[0].mxu0
    %v1341 = vadd.f32 %v1127, %v1340
    %1342 = vmatprep.mubr.bf16.mxu0 0
    %1343 = vmatmul.mubr.bf16.gmra.mrb[0].mxu0 %v1096
    %v1344 = vpop.f32.mrb[0].mxu0
    %v1345 = vadd.f32 %v1123, %v1344
    %v1346 = vpop.f32.mrb[0].mxu0
    %v1347 = vadd.f32 %v1127, %v1346
    %v1348 = vpop.f32.mrb[0].mxu0
    %v1349 = vadd.f32 %v1123, %v1348
    %v1350 = vpop.f32.mrb[0].mxu0
    %v1351 = vadd.f32 %v1127, %v1350
    %1352 = vmatprep.mubr.bf16.mxu0 0
    %1353 = vmatmul.mubr.bf16.gmra.mrb[0].mxu0 %v1097
    %v1354 = vpop.f32.mrb[0].mxu0
    %v1355 = vadd.f32 %v1123, %v1354
    %v1356 = vpop.f32.mrb[0].mxu0
    %v1357 = vadd.f32 %v1127, %v1356
    %v1358 = vpop.f32.mrb[0].mxu0
    %v1359 = vadd.f32 %v1123, %v1358
    %v1360 = vpop.f32.mrb[0].mxu0
    %v1361 = vadd.f32 %v1127, %v1360
    %1362 = vmatprep.mubr.bf16.mxu0 0
    %1363 = vmatmul.mubr.bf16.gmra.mrb[0].mxu0 %v1098
    %v1364 = vpop.f32.mrb[0].mxu0
    %v1365 = vadd.f32 %v1123, %v1364
    %v1366 = vpop.f32.mrb[0].mxu0
    %v1367 = vadd.f32 %v1127, %v1366
    %v1368 = vpop.f32.mrb[0].mxu0
    %v1369 = vadd.f32 %v1123, %v1368
    %v1370 = vpop.f32.mrb[0].mxu0
    %v1371 = vadd.f32 %v1127, %v1370
    %1372 = vmatprep.mubr.bf16.mxu0 0
    %1373 = vmatmul.mubr.bf16.gmra.mrb[0].mxu0 %v1099
    %v1374 = vpop.f32.mrb[0].mxu0
    %v1375 = vadd.f32 %v1123, %v1374
    %v1376 = vpop.f32.mrb[0].mxu0
    %v1377 = vadd.f32 %v1127, %v1376
    %v1378 = vpop.f32.mrb[0].mxu0
    %v1379 = vadd.f32 %v1123, %v1378
    %v1380 = vpop.f32.mrb[0].mxu0
    %v1381 = vadd.f32 %v1127, %v1380
    %1382 = vmatprep.mubr.bf16.mxu0 0
    %1383 = vmatmul.mubr.bf16.gmra.mrb[0].mxu0 %v1100
    %v1384 = vpop.f32.mrb[0].mxu0
    %v1385 = vadd.f32 %v1123, %v1384
    %v1386 = vpop.f32.mrb[0].mxu0
    %v1387 = vadd.f32 %v1127, %v1386
    %v1388 = vpop.f32.mrb[0].mxu0
    %v1389 = vadd.f32 %v1123, %v1388
    %v1390 = vpop.f32.mrb[0].mxu0
    %v1391 = vadd.f32 %v1127, %v1390
    %1392 = vmatprep.mubr.bf16.mxu0 0
    %1393 = vmatmul.mubr.bf16.gmra.mrb[0].mxu0 %v1101
    %v1394 = vpop.f32.mrb[0].mxu0
    %v1395 = vadd.f32 %v1123, %v1394
    %v1396 = vpop.f32.mrb[0].mxu0
    %v1397 = vadd.f32 %v1127, %v1396
    %v1398 = vpop.f32.mrb[0].mxu0
    %v1399 = vadd.f32 %v1123, %v1398
    %v1400 = vpop.f32.mrb[0].mxu0
    %v1401 = vadd.f32 %v1127, %v1400
    %1402 = vdwg.mxu0
    %v1403 = vmax.f32 %v1245, 0.0
    %v1404 = vmax.f32 %v1247, 0.0
    %v1405 = vmax.f32 %v1249, 0.0
    %v1406 = vmax.f32 %v1251, 0.0
    %v1407 = vmax.f32 %v1255, 0.0
    %v1408 = vmax.f32 %v1257, 0.0
    %v1409 = vmax.f32 %v1259, 0.0
    %v1410 = vmax.f32 %v1261, 0.0
    %v1411 = vmax.f32 %v1265, 0.0
    %v1412 = vmax.f32 %v1267, 0.0
    %v1413 = vmax.f32 %v1269, 0.0
    %v1414 = vmax.f32 %v1271, 0.0
    %v1415 = vmax.f32 %v1275, 0.0
    %v1416 = vmax.f32 %v1277, 0.0
    %v1417 = vmax.f32 %v1279, 0.0
    %v1418 = vmax.f32 %v1281, 0.0
    %v1419 = vmax.f32 %v1285, 0.0
    %v1420 = vmax.f32 %v1287, 0.0
    %v1421 = vmax.f32 %v1289, 0.0
    %v1422 = vmax.f32 %v1291, 0.0
    %v1423 = vmax.f32 %v1295, 0.0
    %v1424 = vmax.f32 %v1297, 0.0
    %v1425 = vmax.f32 %v1299, 0.0
    %v1426 = vmax.f32 %v1301, 0.0
    %v1427 = vmax.f32 %v1305, 0.0
    %v1428 = vmax.f32 %v1307, 0.0
    %v1429 = vmax.f32 %v1309, 0.0
    %v1430 = vmax.f32 %v1311, 0.0
    %v1431 = vmax.f32 %v1315, 0.0
    %v1432 = vmax.f32 %v1317, 0.0
    %v1433 = vmax.f32 %v1319, 0.0
    %v1434 = vmax.f32 %v1321, 0.0
    %v1435 = vmax.f32 %v1325, 0.0
    %v1436 = vmax.f32 %v1327, 0.0
    %v1437 = vmax.f32 %v1329, 0.0
    %v1438 = vmax.f32 %v1331, 0.0
    %v1439 = vmax.f32 %v1335, 0.0
    %v1440 = vmax.f32 %v1337, 0.0
    %v1441 = vmax.f32 %v1339, 0.0
    %v1442 = vmax.f32 %v1341, 0.0
    %v1443 = vmax.f32 %v1345, 0.0
    %v1444 = vmax.f32 %v1347, 0.0
    %v1445 = vmax.f32 %v1349, 0.0
    %v1446 = vmax.f32 %v1351, 0.0
    %v1447 = vmax.f32 %v1355, 0.0
    %v1448 = vmax.f32 %v1357, 0.0
    %v1449 = vmax.f32 %v1359, 0.0
    %v1450 = vmax.f32 %v1361, 0.0
    %v1451 = vmax.f32 %v1365, 0.0
    %v1452 = vmax.f32 %v1367, 0.0
    %v1453 = vmax.f32 %v1369, 0.0
    %v1454 = vmax.f32 %v1371, 0.0
    %v1455 = vmax.f32 %v1375, 0.0
    %v1456 = vmax.f32 %v1377, 0.0
    %v1457 = vmax.f32 %v1379, 0.0
    %v1458 = vmax.f32 %v1381, 0.0
    %v1459 = vmax.f32 %v1385, 0.0
    %v1460 = vmax.f32 %v1387, 0.0
    %v1461 = vmax.f32 %v1389, 0.0
    %v1462 = vmax.f32 %v1391, 0.0
    %v1463 = vmax.f32 %v1395, 0.0
    %v1464 = vmax.f32 %v1397, 0.0
    %v1465 = vmax.f32 %v1399, 0.0
    %v1466 = vmax.f32 %v1401, 0.0
    %1467 = vst [vmem:[#allocation11] sm:$0xff] %v1403
    %1468 = vst [vmem:[#allocation11 + $0x8] sm:$0xff] %v1404
    %1469 = vst [vmem:[#allocation11 + $0x10] sm:$0xff] %v1405
    %1470 = vst [vmem:[#allocation11 + $0x18] sm:$0xff] %v1406
    %1471 = vst [vmem:[#allocation11 + $0x20] sm:$0xff] %v1407
    %1472 = vst [vmem:[#allocation11 + $0x28] sm:$0xff] %v1408
    %1473 = vst [vmem:[#allocation11 + $0x30] sm:$0xff] %v1409
    %1474 = vst [vmem:[#allocation11 + $0x38] sm:$0xff] %v1410
    %1475 = vst [vmem:[#allocation11 + $0x40] sm:$0xff] %v1411
    %1476 = vst [vmem:[#allocation11 + $0x48] sm:$0xff] %v1412
    %1477 = vst [vmem:[#allocation11 + $0x50] sm:$0xff] %v1413
    %1478 = vst [vmem:[#allocation11 + $0x58] sm:$0xff] %v1414
    %1479 = vst [vmem:[#allocation11 + $0x60] sm:$0xff] %v1415
    %1480 = vst [vmem:[#allocation11 + $0x68] sm:$0xff] %v1416
    %1481 = vst [vmem:[#allocation11 + $0x70] sm:$0xff] %v1417
    %1482 = vst [vmem:[#allocation11 + $0x78] sm:$0xff] %v1418
    %1483 = vst [vmem:[#allocation11 + $0x80] sm:$0xff] %v1419
    %1484 = vst [vmem:[#allocation11 + $0x88] sm:$0xff] %v1420
    %1485 = vst [vmem:[#allocation11 + $0x90] sm:$0xff] %v1421
    %1486 = vst [vmem:[#allocation11 + $0x98] sm:$0xff] %v1422
    %1487 = vst [vmem:[#allocation11 + $0xa0] sm:$0xff] %v1423
    %1488 = vst [vmem:[#allocation11 + $0xa8] sm:$0xff] %v1424
    %1489 = vst [vmem:[#allocation11 + $0xb0] sm:$0xff] %v1425
    %1490 = vst [vmem:[#allocation11 + $0xb8] sm:$0xff] %v1426
    %1491 = vst [vmem:[#allocation11 + $0xc0] sm:$0xff] %v1427
    %1492 = vst [vmem:[#allocation11 + $0xc8] sm:$0xff] %v1428
    %1493 = vst [vmem:[#allocation11 + $0xd0] sm:$0xff] %v1429
    %1494 = vst [vmem:[#allocation11 + $0xd8] sm:$0xff] %v1430
    %1495 = vst [vmem:[#allocation11 + $0xe0] sm:$0xff] %v1431
    %1496 = vst [vmem:[#allocation11 + $0xe8] sm:$0xff] %v1432
    %1497 = vst [vmem:[#allocation11 + $0xf0] sm:$0xff] %v1433
    %1498 = vst [vmem:[#allocation11 + $0xf8] sm:$0xff] %v1434
    %1499 = vst [vmem:[#allocation11 + $0x100] sm:$0xff] %v1435
    %1500 = vst [vmem:[#allocation11 + $0x108] sm:$0xff] %v1436
    %1501 = vst [vmem:[#allocation11 + $0x110] sm:$0xff] %v1437
    %1502 = vst [vmem:[#allocation11 + $0x118] sm:$0xff] %v1438
    %1503 = vst [vmem:[#allocation11 + $0x120] sm:$0xff] %v1439
    %1504 = vst [vmem:[#allocation11 + $0x128] sm:$0xff] %v1440
    %1505 = vst [vmem:[#allocation11 + $0x130] sm:$0xff] %v1441
    %1506 = vst [vmem:[#allocation11 + $0x138] sm:$0xff] %v1442
    %1507 = vst [vmem:[#allocation11 + $0x140] sm:$0xff] %v1443
    %1508 = vst [vmem:[#allocation11 + $0x148] sm:$0xff] %v1444
    %1509 = vst [vmem:[#allocation11 + $0x150] sm:$0xff] %v1445
    %1510 = vst [vmem:[#allocation11 + $0x158] sm:$0xff] %v1446
    %1511 = vst [vmem:[#allocation11 + $0x160] sm:$0xff] %v1447
    %1512 = vst [vmem:[#allocation11 + $0x168] sm:$0xff] %v1448
    %1513 = vst [vmem:[#allocation11 + $0x170] sm:$0xff] %v1449
    %1514 = vst [vmem:[#allocation11 + $0x178] sm:$0xff] %v1450
    %1515 = vst [vmem:[#allocation11 + $0x180] sm:$0xff] %v1451
    %1516 = vst [vmem:[#allocation11 + $0x188] sm:$0xff] %v1452
    %1517 = vst [vmem:[#allocation11 + $0x190] sm:$0xff] %v1453
    %1518 = vst [vmem:[#allocation11 + $0x198] sm:$0xff] %v1454
    %1519 = vst [vmem:[#allocation11 + $0x1a0] sm:$0xff] %v1455
    %1520 = vst [vmem:[#allocation11 + $0x1a8] sm:$0xff] %v1456
    %1521 = vst [vmem:[#allocation11 + $0x1b0] sm:$0xff] %v1457
    %1522 = vst [vmem:[#allocation11 + $0x1b8] sm:$0xff] %v1458
    %1523 = vst [vmem:[#allocation11 + $0x1c0] sm:$0xff] %v1459
    %1524 = vst [vmem:[#allocation11 + $0x1c8] sm:$0xff] %v1460
    %1525 = vst [vmem:[#allocation11 + $0x1d0] sm:$0xff] %v1461
    %1526 = vst [vmem:[#allocation11 + $0x1d8] sm:$0xff] %v1462
    %1527 = vst [vmem:[#allocation11 + $0x1e0] sm:$0xff] %v1463
    %1528 = vst [vmem:[#allocation11 + $0x1e8] sm:$0xff] %v1464
    %1529 = vst [vmem:[#allocation11 + $0x1f0] sm:$0xff] %v1465
    %1530 = vst [vmem:[#allocation11 + $0x1f8] sm:$0xff] %v1466
    // Predicated region
    $region58: #{tpu_custom_call.1} parent=1 // pred_check
      _
    $region59: #{tpu_custom_call.1} parent=1 // pred_check_branch
      %1532 = sbr.rel (0) target = $region61
    $region60: #{tpu_custom_call.1} parent=1 // pred_region
      %s1534 = ssub.s32 8192, 8192
      %1535 = vsyncadd [#allocation4], %s1534
      %s1536 = sshll.u32 [#allocation11], 4
      %s1537 = int_to_ptr.vmem [resolvable:$true] %s1536
      %1542 = dma.vmem_to_hbm [thread:$0]  %s1537, 8192, %s9, [#allocation4], 256, 256, 16
    $region61: #{tpu_custom_call.1} parent=1 // pred_fallthru
      _
    // Predicated region
    $region62: #{tpu_custom_call.1} parent=1 // pred_check
      _
    $region63: #{tpu_custom_call.1} parent=1 // pred_check_branch
      %1544 = sbr.rel (0) target = $region65
    $region64: #{tpu_custom_call.1} parent=1 // pred_region
      %1545 = dma.done [#allocation4], 8192
    $region65: #{tpu_custom_call.1} parent=1 // pred_fallthru
      _
    %1546 = vsyncpa [#allocation3], 1
    %1547 = vsyncpa [#allocation6], 1
    %1548 = vsyncpa [#allocation9], 1
    %1549 = vsyncpa [#allocation4], 1

// kernel: tpu_custom_call.1
$region0: #{tpu_custom_call.1}
  #allocation0 [shape = 'u32[]', space=smem, size = 0x4, offset = 0x4, fixed_abs, tag = 'smem constant byte address 0x4 - core index']
  #allocation1 [shape = 'u32[144,128]{1,0:T(1,128)}', space=vmem, size = 0x12000, scoped, tag = 'internal scratch']
  %s0 = inlined_call_operand.hbm [shape: f32[256,256], index: 0, kind: input, shape index: {}]
  %s1 = inlined_call_operand.hbm [shape: bf16[256,128], index: 1, kind: input, shape index: {}]
  %s2 = inlined_call_operand.vmem [shape: f32[1,128], index: 2, kind: input, shape index: {}]
  %s3 = inlined_call_operand.hbm [shape: bf16[128,128], index: 3, kind: input, shape index: {}]
  %s4 = inlined_call_operand.vmem [shape: f32[1,128], index: 4, kind: input, shape index: {}]
  %s5 = inlined_call_operand.hbm [shape: bf16[128,128], index: 5, kind: input, shape index: {}]
  %s6 = inlined_call_operand.vmem [shape: f32[1,128], index: 6, kind: input, shape index: {}]
  %s7 = inlined_call_operand.hbm [shape: bf16[128,256], index: 7, kind: input, shape index: {}]
  %s8 = inlined_call_operand.vmem [shape: f32[1,256], index: 8, kind: input, shape index: {}]
  %s9 = inlined_call_operand.hbm [shape: f32[256,256], index: 9, kind: output, shape index: {}]
  %s10 = sld [smem:[#allocation0]]
  $region66: #{tpu_custom_call.1} parent=0
    _
  %s12 = ssub.s32 1, %s10
  %s13 = scalar_select 0, %s12, %s10
  $region1: #{tpu_custom_call.1} parent=0
    #allocation2 [shape = 'u8[262144]{0}', space=vmem, size = 0x40000, scoped, tag = 'input window, operand 0, single buffered']
    #allocation3 [shape = 's32[1]{0}', space=sflag, size = 0x4, scoped, tag = 'scoped memory for tpu_custom_call.1']
    #allocation4 [shape = 's32[1]{0}', space=sflag, size = 0x4, scoped, tag = 'scoped memory for tpu_custom_call.1']
    #allocation5 [shape = 'u8[65536]{0}', space=vmem, size = 0x10000, scoped, tag = 'input window, operand 1, single buffered']
    #allocation6 [shape = 's32[1]{0}', space=sflag, size = 0x4, scoped, tag = 'scoped memory for tpu_custom_call.1']
    #allocation7 [shape = 'u8[32768]{0}', space=vmem, size = 0x8000, scoped, tag = 'input window, operand 3, single buffered']
    #allocation8 [shape = 'u8[32768]{0}', space=vmem, size = 0x8000, scoped, tag = 'input window, operand 5, single buffered']
    #allocation9 [shape = 's32[1]{0}', space=sflag, size = 0x4, scoped, tag = 'scoped memory for tpu_custom_call.1']
    #allocation10 [shape = 'u8[65536]{0}', space=vmem, size = 0x10000, scoped, tag = 'input window, operand 7, single buffered']
    #allocation11 [shape = 'u8[262144]{0}', space=vmem, size = 0x40000, scoped, tag = 'output window, operand 0, single buffered']
    %14 = vsyncpa [#allocation3], 0
    %15 = vsyncpa [#allocation6], 0
    %16 = vsyncpa [#allocation9], 0
    %17 = vsyncpa [#allocation4], 0
    // Predicated region
    $region2: #{tpu_custom_call.1} parent=1 // pred_check
      _
    $region3: #{tpu_custom_call.1} parent=1 // pred_check_branch
      %19 = sbr.rel (0) target = $region5
    $region4: #{tpu_custom_call.1} parent=1 // pred_region
      %s21 = ssub.s32 8192, 8192
      %22 = vsyncadd [#allocation3], %s21
      %s23 = sshll.u32 [#allocation2], 4
      %s24 = int_to_ptr.vmem [resolvable:$true] %s23
      %29 = dma.hbm_to_vmem [thread:$0]  %s0, 8192, %s24, [#allocation3], 256, 256, 16
    $region5: #{tpu_custom_call.1} parent=1 // pred_fallthru
      _
    // Predicated region
    $region6: #{tpu_custom_call.1} parent=1 // pred_check
      _
    $region7: #{tpu_custom_call.1} parent=1 // pred_check_branch
      %31 = sbr.rel (0) target = $region9
    $region8: #{tpu_custom_call.1} parent=1 // pred_region
      %s33 = ssub.s32 2048, 2048
      %34 = vsyncadd [#allocation6], %s33
      %s35 = sshll.u32 [#allocation5], 4
      %s36 = int_to_ptr.vmem [resolvable:$true] %s35
      %41 = dma.hbm_to_vmem [thread:$0]  %s1, 2048, %s36, [#allocation6], 64, 64, 4
    $region9: #{tpu_custom_call.1} parent=1 // pred_fallthru
      _
    // Predicated region
    $region10: #{tpu_custom_call.1} parent=1 // pred_check
      _
    $region11: #{tpu_custom_call.1} parent=1 // pred_check_branch
      %43 = sbr.rel (0) target = $region13
    $region12: #{tpu_custom_call.1} parent=1 // pred_region
      _
    $region13: #{tpu_custom_call.1} parent=1 // pred_fallthru
      _
    // Predicated region
    $region14: #{tpu_custom_call.1} parent=1 // pred_check
      _
    $region15: #{tpu_custom_call.1} parent=1 // pred_check_branch
      %45 = sbr.rel (0) target = $region17
    $region16: #{tpu_custom_call.1} parent=1 // pred_region
      %s47 = ssub.s32 1024, 1024
      %48 = vsyncadd [#allocation6], %s47
      %s49 = sshll.u32 [#allocation7], 4
      %s50 = int_to_ptr.vmem [resolvable:$true] %s49
      %55 = dma.hbm_to_vmem [thread:$0]  %s3, 1024, %s50, [#allocation6], 64, 64, 4
    $region17: #{tpu_custom_call.1} parent=1 // pred_fallthru
      _
    // Predicated region
    $region18: #{tpu_custom_call.1} parent=1 // pred_check
      _
    $region19: #{tpu_custom_call.1} parent=1 // pred_check_branch
      %57 = sbr.rel (0) target = $region21
    $region20: #{tpu_custom_call.1} parent=1 // pred_region
      _
    $region21: #{tpu_custom_call.1} parent=1 // pred_fallthru
      _
    // Predicated region
    $region22: #{tpu_custom_call.1} parent=1 // pred_check
      _
    $region23: #{tpu_custom_call.1} parent=1 // pred_check_branch
      %59 = sbr.rel (0) target = $region25
    $region24: #{tpu_custom_call.1} parent=1 // pred_region
      %s61 = ssub.s32 1024, 1024
      %62 = vsyncadd [#allocation9], %s61
      %s63 = sshll.u32 [#allocation8], 4
      %s64 = int_to_ptr.vmem [resolvable:$true] %s63
      %69 = dma.hbm_to_vmem [thread:$0]  %s5, 1024, %s64, [#allocation9], 64, 64, 4
    $region25: #{tpu_custom_call.1} parent=1 // pred_fallthru
      _
    // Predicated region
    $region26: #{tpu_custom_call.1} parent=1 // pred_check
      _
    $region27: #{tpu_custom_call.1} parent=1 // pred_check_branch
      %71 = sbr.rel (0) target = $region29
    $region28: #{tpu_custom_call.1} parent=1 // pred_region
      _
    $region29: #{tpu_custom_call.1} parent=1 // pred_fallthru
      _
    // Predicated region
    $region30: #{tpu_custom_call.1} parent=1 // pred_check
      _
    $region31: #{tpu_custom_call.1} parent=1 // pred_check_branch
      %73 = sbr.rel (0) target = $region33
    $region32: #{tpu_custom_call.1} parent=1 // pred_region
      %s75 = ssub.s32 2048, 2048
      %76 = vsyncadd [#allocation9], %s75
      %s77 = sshll.u32 [#allocation10], 4
      %s78 = int_to_ptr.vmem [resolvable:$true] %s77
      %83 = dma.hbm_to_vmem [thread:$0]  %s7, 2048, %s78, [#allocation9], 128, 128, 8
    $region33: #{tpu_custom_call.1} parent=1 // pred_fallthru
      _
    // Predicated region
    $region34: #{tpu_custom_call.1} parent=1 // pred_check
      _
    $region35: #{tpu_custom_call.1} parent=1 // pred_check_branch
      %85 = sbr.rel (0) target = $region37
    $region36: #{tpu_custom_call.1} parent=1 // pred_region
      _
    $region37: #{tpu_custom_call.1} parent=1 // pred_fallthru
      _
    // Predicated region
    $region38: #{tpu_custom_call.1} parent=1 // pred_check
      _
    $region39: #{tpu_custom_call.1} parent=1 // pred_check_branch
      %87 = sbr.rel (0) target = $region41
    $region40: #{tpu_custom_call.1} parent=1 // pred_region
      %88 = dma.done [#allocation3], 8192
    $region41: #{tpu_custom_call.1} parent=1 // pred_fallthru
      _
    // Predicated region
    $region42: #{tpu_custom_call.1} parent=1 // pred_check
      _
    $region43: #{tpu_custom_call.1} parent=1 // pred_check_branch
      %90 = sbr.rel (0) target = $region45
    $region44: #{tpu_custom_call.1} parent=1 // pred_region
      %91 = dma.done [#allocation6], 2048
    $region45: #{tpu_custom_call.1} parent=1 // pred_fallthru
      _
    // Predicated region
    $region46: #{tpu_custom_call.1} parent=1 // pred_check
      _
    $region47: #{tpu_custom_call.1} parent=1 // pred_check_branch
      %93 = sbr.rel (0) target = $region49
    $region48: #{tpu_custom_call.1} parent=1 // pred_region
      %94 = dma.done [#allocation6], 1024
    $region49: #{tpu_custom_call.1} parent=1 // pred_fallthru
      _
    // Predicated region
    $region50: #{tpu_custom_call.1} parent=1 // pred_check
      _
    $region51: #{tpu_custom_call.1} parent=1 // pred_check_branch
      %96 = sbr.rel (0) target = $region53
    $region52: #{tpu_custom_call.1} parent=1 // pred_region
      %97 = dma.done [#allocation9], 1024
    $region53: #{tpu_custom_call.1} parent=1 // pred_fallthru
      _
    // Predicated region
    $region54: #{tpu_custom_call.1} parent=1 // pred_check
      _
    $region55: #{tpu_custom_call.1} parent=1 // pred_check_branch
      %99 = sbr.rel (0) target = $region57
    $region56: #{tpu_custom_call.1} parent=1 // pred_region
      %100 = dma.done [#allocation9], 2048
    $region57: #{tpu_custom_call.1} parent=1 // pred_fallthru
      _
    %v102 = vld [vmem:[#allocation2] sm:$0xff]
    %v103 = vld [vmem:[#allocation2 + $0x8] sm:$0xff]
    %v104 = vld [vmem:[#allocation2 + $0x10] sm:$0xff]
    %v105 = vld [vmem:[#allocation2 + $0x18] sm:$0xff]
    %v106 = vld [vmem:[#allocation2 + $0x20] sm:$0xff]
    %v107 = vld [vmem:[#allocation2 + $0x28] sm:$0xff]
    %v108 = vld [vmem:[#allocation2 + $0x30] sm:$0xff]
    %v109 = vld [vmem:[#allocation2 + $0x38] sm:$0xff]
    %v110 = vld [vmem:[#allocation2 + $0x40] sm:$0xff]
    %v111 = vld [vmem:[#allocation2 + $0x48] sm:$0xff]
    %v112 = vld [vmem:[#allocation2 + $0x50] sm:$0xff]
    %v113 = vld [vmem:[#allocation2 + $0x58] sm:$0xff]
    %v114 = vld [vmem:[#allocation2 + $0x60] sm:$0xff]
    %v115 = vld [vmem:[#allocation2 + $0x68] sm:$0xff]
    %v116 = vld [vmem:[#allocation2 + $0x70] sm:$0xff]
    %v117 = vld [vmem:[#allocation2 + $0x78] sm:$0xff]
    %v118 = vld [vmem:[#allocation2 + $0x80] sm:$0xff]
    %v119 = vld [vmem:[#allocation2 + $0x88] sm:$0xff]
    %v120 = vld [vmem:[#allocation2 + $0x90] sm:$0xff]
    %v121 = vld [vmem:[#allocation2 + $0x98] sm:$0xff]
    %v122 = vld [vmem:[#allocation2 + $0xa0] sm:$0xff]
    %v123 = vld [vmem:[#allocation2 + $0xa8] sm:$0xff]
    %v124 = vld [vmem:[#allocation2 + $0xb0] sm:$0xff]
    %v125 = vld [vmem:[#allocation2 + $0xb8] sm:$0xff]
    %v126 = vld [vmem:[#allocation2 + $0xc0] sm:$0xff]
    %v127 = vld [vmem:[#allocation2 + $0xc8] sm:$0xff]
    %v128 = vld [vmem:[#allocation2 + $0xd0] sm:$0xff]
    %v129 = vld [vmem:[#allocation2 + $0xd8] sm:$0xff]
    %v130 = vld [vmem:[#allocation2 + $0xe0] sm:$0xff]
    %v131 = vld [vmem:[#allocation2 + $0xe8] sm:$0xff]
    %v132 = vld [vmem:[#allocation2 + $0xf0] sm:$0xff]
    %v133 = vld [vmem:[#allocation2 + $0xf8] sm:$0xff]
    %v134 = vld [vmem:[#allocation2 + $0x100] sm:$0xff]
    %v135 = vld [vmem:[#allocation2 + $0x108] sm:$0xff]
    %v136 = vld [vmem:[#allocation2 + $0x110] sm:$0xff]
    %v137 = vld [vmem:[#allocation2 + $0x118] sm:$0xff]
    %v138 = vld [vmem:[#allocation2 + $0x120] sm:$0xff]
    %v139 = vld [vmem:[#allocation2 + $0x128] sm:$0xff]
    %v140 = vld [vmem:[#allocation2 + $0x130] sm:$0xff]
    %v141 = vld [vmem:[#allocation2 + $0x138] sm:$0xff]
    %v142 = vld [vmem:[#allocation2 + $0x140] sm:$0xff]
    %v143 = vld [vmem:[#allocation2 + $0x148] sm:$0xff]
    %v144 = vld [vmem:[#allocation2 + $0x150] sm:$0xff]
    %v145 = vld [vmem:[#allocation2 + $0x158] sm:$0xff]
    %v146 = vld [vmem:[#allocation2 + $0x160] sm:$0xff]
    %v147 = vld [vmem:[#allocation2 + $0x168] sm:$0xff]
    %v148 = vld [vmem:[#allocation2 + $0x170] sm:$0xff]
    %v149 = vld [vmem:[#allocation2 + $0x178] sm:$0xff]
    %v150 = vld [vmem:[#allocation2 + $0x180] sm:$0xff]
    %v151 = vld [vmem:[#allocation2 + $0x188] sm:$0xff]
    %v152 = vld [vmem:[#allocation2 + $0x190] sm:$0xff]
    %v153 = vld [vmem:[#allocation2 + $0x198] sm:$0xff]
    %v154 = vld [vmem:[#allocation2 + $0x1a0] sm:$0xff]
    %v155 = vld [vmem:[#allocation2 + $0x1a8] sm:$0xff]
    %v156 = vld [vmem:[#allocation2 + $0x1b0] sm:$0xff]
    %v157 = vld [vmem:[#allocation2 + $0x1b8] sm:$0xff]
    %v158 = vld [vmem:[#allocation2 + $0x1c0] sm:$0xff]
    %v159 = vld [vmem:[#allocation2 + $0x1c8] sm:$0xff]
    %v160 = vld [vmem:[#allocation2 + $0x1d0] sm:$0xff]
    %v161 = vld [vmem:[#allocation2 + $0x1d8] sm:$0xff]
    %v162 = vld [vmem:[#allocation2 + $0x1e0] sm:$0xff]
    %v163 = vld [vmem:[#allocation2 + $0x1e8] sm:$0xff]
    %v164 = vld [vmem:[#allocation2 + $0x1f0] sm:$0xff]
    %v165 = vld [vmem:[#allocation2 + $0x1f8] sm:$0xff]
    %v166 = vpack.c.bf16 %v104, %v102
    %v167 = vpack.c.bf16 %v105, %v103
    %v168 = vpack.c.bf16 %v108, %v106
    %v169 = vpack.c.bf16 %v109, %v107
    %v170 = vpack.c.bf16 %v112, %v110
    %v171 = vpack.c.bf16 %v113, %v111
    %v172 = vpack.c.bf16 %v116, %v114
    %v173 = vpack.c.bf16 %v117, %v115
    %v174 = vpack.c.bf16 %v120, %v118
    %v175 = vpack.c.bf16 %v121, %v119
    %v176 = vpack.c.bf16 %v124, %v122
    %v177 = vpack.c.bf16 %v125, %v123
    %v178 = vpack.c.bf16 %v128, %v126
    %v179 = vpack.c.bf16 %v129, %v127
    %v180 = vpack.c.bf16 %v132, %v130
    %v181 = vpack.c.bf16 %v133, %v131
    %v182 = vpack.c.bf16 %v136, %v134
    %v183 = vpack.c.bf16 %v137, %v135
    %v184 = vpack.c.bf16 %v140, %v138
    %v185 = vpack.c.bf16 %v141, %v139
    %v186 = vpack.c.bf16 %v144, %v142
    %v187 = vpack.c.bf16 %v145, %v143
    %v188 = vpack.c.bf16 %v148, %v146
    %v189 = vpack.c.bf16 %v149, %v147
    %v190 = vpack.c.bf16 %v152, %v150
    %v191 = vpack.c.bf16 %v153, %v151
    %v192 = vpack.c.bf16 %v156, %v154
    %v193 = vpack.c.bf16 %v157, %v155
    %v194 = vpack.c.bf16 %v160, %v158
    %v195 = vpack.c.bf16 %v161, %v159
    %v196 = vpack.c.bf16 %v164, %v162
    %v197 = vpack.c.bf16 %v165, %v163
    %v198 = vld [vmem:[#allocation5] sm:$0xf]
    %v199 = vld [vmem:[#allocation5 + $0x4] sm:$0xf]
    %v200 = vld [vmem:[#allocation5 + $0x8] sm:$0xf]
    %v201 = vld [vmem:[#allocation5 + $0xc] sm:$0xf]
    %v202 = vld [vmem:[#allocation5 + $0x10] sm:$0xf]
    %v203 = vld [vmem:[#allocation5 + $0x14] sm:$0xf]
    %v204 = vld [vmem:[#allocation5 + $0x18] sm:$0xf]
    %v205 = vld [vmem:[#allocation5 + $0x1c] sm:$0xf]
    %v206 = vld [vmem:[#allocation5 + $0x20] sm:$0xf]
    %v207 = vld [vmem:[#allocation5 + $0x24] sm:$0xf]
    %v208 = vld [vmem:[#allocation5 + $0x28] sm:$0xf]
    %v209 = vld [vmem:[#allocation5 + $0x2c] sm:$0xf]
    %v210 = vld [vmem:[#allocation5 + $0x30] sm:$0xf]
    %v211 = vld [vmem:[#allocation5 + $0x34] sm:$0xf]
    %v212 = vld [vmem:[#allocation5 + $0x38] sm:$0xf]
    %v213 = vld [vmem:[#allocation5 + $0x3c] sm:$0xf]
    %v214 = vld [vmem:[#allocation5 + $0x40] sm:$0xf]
    %v215 = vld [vmem:[#allocation5 + $0x44] sm:$0xf]
    %v216 = vld [vmem:[#allocation5 + $0x48] sm:$0xf]
    %v217 = vld [vmem:[#allocation5 + $0x4c] sm:$0xf]
    %v218 = vld [vmem:[#allocation5 + $0x50] sm:$0xf]
    %v219 = vld [vmem:[#allocation5 + $0x54] sm:$0xf]
    %v220 = vld [vmem:[#allocation5 + $0x58] sm:$0xf]
    %v221 = vld [vmem:[#allocation5 + $0x5c] sm:$0xf]
    %v222 = vld [vmem:[#allocation5 + $0x60] sm:$0xf]
    %v223 = vld [vmem:[#allocation5 + $0x64] sm:$0xf]
    %v224 = vld [vmem:[#allocation5 + $0x68] sm:$0xf]
    %v225 = vld [vmem:[#allocation5 + $0x6c] sm:$0xf]
    %v226 = vld [vmem:[#allocation5 + $0x70] sm:$0xf]
    %v227 = vld [vmem:[#allocation5 + $0x74] sm:$0xf]
    %v228 = vld [vmem:[#allocation5 + $0x78] sm:$0xf]
    %v229 = vld [vmem:[#allocation5 + $0x7c] sm:$0xf]
    %v230 = vld [vmem:[%s2] sm:$0x1]
    %v232 = vlaneseq
    %v233 = vshrl.u32 %v232, 7
    %v234 = vsub.s32 0, %v233
    %v235 = vrot.slane %v230, %v234
    %v269 = vunpack.c.l.b16 %v198
    %v270 = vunpack.c.l.b16 %v199
    %v271 = vunpack.c.l.b16 %v200
    %v272 = vunpack.c.l.b16 %v201
    %v273 = vunpack.c.l.b16 %v202
    %v274 = vunpack.c.l.b16 %v203
    %v275 = vunpack.c.l.b16 %v204
    %v276 = vunpack.c.l.b16 %v205
    %v277 = vunpack.c.l.b16 %v206
    %v278 = vunpack.c.l.b16 %v207
    %v279 = vunpack.c.l.b16 %v208
    %v280 = vunpack.c.l.b16 %v209
    %v281 = vunpack.c.l.b16 %v210
    %v282 = vunpack.c.l.b16 %v211
    %v283 = vunpack.c.l.b16 %v212
    %v284 = vunpack.c.l.b16 %v213
    %v285 = vunpack.c.l.b16 %v214
    %v286 = vunpack.c.l.b16 %v215
    %v287 = vunpack.c.l.b16 %v216
    %v288 = vunpack.c.l.b16 %v217
    %v289 = vunpack.c.l.b16 %v218
    %v290 = vunpack.c.l.b16 %v219
    %v291 = vunpack.c.l.b16 %v220
    %v292 = vunpack.c.l.b16 %v221
    %v293 = vunpack.c.l.b16 %v222
    %v294 = vunpack.c.l.b16 %v223
    %v295 = vunpack.c.l.b16 %v224
    %v296 = vunpack.c.l.b16 %v225
    %v297 = vunpack.c.l.b16 %v226
    %v298 = vunpack.c.l.b16 %v227
    %v299 = vunpack.c.l.b16 %v228
    %v300 = vunpack.c.l.b16 %v229
    %v301 = vpack.c.b16 %v270, %v269
    %v302 = vpack.c.b16 %v272, %v271
    %v303 = vpack.c.b16 %v274, %v273
    %v304 = vpack.c.b16 %v276, %v275
    %v305 = vpack.c.b16 %v278, %v277
    %v306 = vpack.c.b16 %v280, %v279
    %v307 = vpack.c.b16 %v282, %v281
    %v308 = vpack.c.b16 %v284, %v283
    %v309 = vpack.c.b16 %v286, %v285
    %v310 = vpack.c.b16 %v288, %v287
    %v311 = vpack.c.b16 %v290, %v289
    %v312 = vpack.c.b16 %v292, %v291
    %v313 = vpack.c.b16 %v294, %v293
    %v314 = vpack.c.b16 %v296, %v295
    %v315 = vpack.c.b16 %v298, %v297
    %v316 = vpack.c.b16 %v300, %v299
    %333 = vmatprep.subr.bf16.mxu0 0
    %334 = vmatpush1.bf16.msra.mxu0 %v301
    %335 = vmatprep.subr.bf16.mxu0 0
    %336 = vmatpush1.bf16.msra.mxu0 %v302
    %337 = vmatprep.subr.bf16.mxu0 0
    %338 = vmatpush1.bf16.msra.mxu0 %v303
    %339 = vmatprep.subr.bf16.mxu0 0
    %340 = vmatpush1.bf16.msra.mxu0 %v304
    %341 = vmatprep.subr.bf16.mxu0 0
    %342 = vmatpush1.bf16.msra.mxu0 %v305
    %343 = vmatprep.subr.bf16.mxu0 0
    %344 = vmatpush1.bf16.msra.mxu0 %v306
    %345 = vmatprep.subr.bf16.mxu0 0
    %346 = vmatpush1.bf16.msra.mxu0 %v307
    %347 = vmatprep.subr.bf16.mxu0 0
    %348 = vmatpush1.bf16.msra.mxu0 %v308
    %349 = vmatprep.subr.bf16.mxu0 0
    %350 = vmatpush1.bf16.msra.mxu0 %v309
    %351 = vmatprep.subr.bf16.mxu0 0
    %352 = vmatpush1.bf16.msra.mxu0 %v310
    %353 = vmatprep.subr.bf16.mxu0 0
    %354 = vmatpush1.bf16.msra.mxu0 %v311
    %355 = vmatprep.subr.bf16.mxu0 0
    %356 = vmatpush1.bf16.msra.mxu0 %v312
    %357 = vmatprep.subr.bf16.mxu0 0
    %358 = vmatpush1.bf16.msra.mxu0 %v313
    %359 = vmatprep.subr.bf16.mxu0 0
    %360 = vmatpush1.bf16.msra.mxu0 %v314
    %361 = vmatprep.subr.bf16.mxu0 0
    %362 = vmatpush1.bf16.msra.mxu0 %v315
    %363 = vmatprep.subr.bf16.mxu0 0
    %364 = vmatpush1.bf16.msra.mxu0 %v316
    %365 = vmatprep.mubr.bf16.mxu0 %v167
    %366 = vmatmul.mubr.bf16.gmra.mrb[0].mxu0 %v166
    %v367 = vpop.f32.mrb[0].mxu0
    %v368 = vadd.f32 %v235, %v367
    %v369 = vpop.f32.mrb[0].mxu0
    %v370 = vpop.f32.mrb[0].mxu0
    %v371 = vadd.f32 %v235, %v370
    %v372 = vpop.f32.mrb[0].mxu0
    %373 = vmatprep.mubr.bf16.mxu0 %v169
    %374 = vmatmul.mubr.bf16.gmra.mrb[0].mxu0 %v168
    %v375 = vpop.f32.mrb[0].mxu0
    %v376 = vadd.f32 %v235, %v375
    %v377 = vpop.f32.mrb[0].mxu0
    %v378 = vpop.f32.mrb[0].mxu0
    %v379 = vadd.f32 %v235, %v378
    %v380 = vpop.f32.mrb[0].mxu0
    %381 = vmatprep.mubr.bf16.mxu0 %v171
    %382 = vmatmul.mubr.bf16.gmra.mrb[0].mxu0 %v170
    %v383 = vpop.f32.mrb[0].mxu0
    %v384 = vadd.f32 %v235, %v383
    %v385 = vpop.f32.mrb[0].mxu0
    %v386 = vpop.f32.mrb[0].mxu0
    %v387 = vadd.f32 %v235, %v386
    %v388 = vpop.f32.mrb[0].mxu0
    %389 = vmatprep.mubr.bf16.mxu0 %v173
    %390 = vmatmul.mubr.bf16.gmra.mrb[0].mxu0 %v172
    %v391 = vpop.f32.mrb[0].mxu0
    %v392 = vadd.f32 %v235, %v391
    %v393 = vpop.f32.mrb[0].mxu0
    %v394 = vpop.f32.mrb[0].mxu0
    %v395 = vadd.f32 %v235, %v394
    %v396 = vpop.f32.mrb[0].mxu0
    %397 = vmatprep.mubr.bf16.mxu0 %v175
    %398 = vmatmul.mubr.bf16.gmra.mrb[0].mxu0 %v174
    %v399 = vpop.f32.mrb[0].mxu0
    %v400 = vadd.f32 %v235, %v399
    %v401 = vpop.f32.mrb[0].mxu0
    %v402 = vpop.f32.mrb[0].mxu0
    %v403 = vadd.f32 %v235, %v402
    %v404 = vpop.f32.mrb[0].mxu0
    %405 = vmatprep.mubr.bf16.mxu0 %v177
    %406 = vmatmul.mubr.bf16.gmra.mrb[0].mxu0 %v176
    %v407 = vpop.f32.mrb[0].mxu0
    %v408 = vadd.f32 %v235, %v407
    %v409 = vpop.f32.mrb[0].mxu0
    %v410 = vpop.f32.mrb[0].mxu0
    %v411 = vadd.f32 %v235, %v410
    %v412 = vpop.f32.mrb[0].mxu0
    %413 = vmatprep.mubr.bf16.mxu0 %v179
    %414 = vmatmul.mubr.bf16.gmra.mrb[0].mxu0 %v178
    %v415 = vpop.f32.mrb[0].mxu0
    %v416 = vadd.f32 %v235, %v415
    %v417 = vpop.f32.mrb[0].mxu0
    %v418 = vpop.f32.mrb[0].mxu0
    %v419 = vadd.f32 %v235, %v418
    %v420 = vpop.f32.mrb[0].mxu0
    %421 = vmatprep.mubr.bf16.mxu0 %v181
    %422 = vmatmul.mubr.bf16.gmra.mrb[0].mxu0 %v180
    %v423 = vpop.f32.mrb[0].mxu0
    %v424 = vadd.f32 %v235, %v423
    %v425 = vpop.f32.mrb[0].mxu0
    %v426 = vpop.f32.mrb[0].mxu0
    %v427 = vadd.f32 %v235, %v426
    %v428 = vpop.f32.mrb[0].mxu0
    %429 = vmatprep.mubr.bf16.mxu0 %v183
    %430 = vmatmul.mubr.bf16.gmra.mrb[0].mxu0 %v182
    %v431 = vpop.f32.mrb[0].mxu0
    %v432 = vadd.f32 %v235, %v431
    %v433 = vpop.f32.mrb[0].mxu0
    %v434 = vpop.f32.mrb[0].mxu0
    %v435 = vadd.f32 %v235, %v434
    %v436 = vpop.f32.mrb[0].mxu0
    %437 = vmatprep.mubr.bf16.mxu0 %v185
    %438 = vmatmul.mubr.bf16.gmra.mrb[0].mxu0 %v184
    %v439 = vpop.f32.mrb[0].mxu0
    %v440 = vadd.f32 %v235, %v439
    %v441 = vpop.f32.mrb[0].mxu0
    %v442 = vpop.f32.mrb[0].mxu0
    %v443 = vadd.f32 %v235, %v442
    %v444 = vpop.f32.mrb[0].mxu0
    %445 = vmatprep.mubr.bf16.mxu0 %v187
    %446 = vmatmul.mubr.bf16.gmra.mrb[0].mxu0 %v186
    %v447 = vpop.f32.mrb[0].mxu0
    %v448 = vadd.f32 %v235, %v447
    %v449 = vpop.f32.mrb[0].mxu0
    %v450 = vpop.f32.mrb[0].mxu0
    %v451 = vadd.f32 %v235, %v450
    %v452 = vpop.f32.mrb[0].mxu0
    %453 = vmatprep.mubr.bf16.mxu0 %v189
    %454 = vmatmul.mubr.bf16.gmra.mrb[0].mxu0 %v188
    %v455 = vpop.f32.mrb[0].mxu0
    %v456 = vadd.f32 %v235, %v455
    %v457 = vpop.f32.mrb[0].mxu0
    %v458 = vpop.f32.mrb[0].mxu0
    %v459 = vadd.f32 %v235, %v458
    %v460 = vpop.f32.mrb[0].mxu0
    %461 = vmatprep.mubr.bf16.mxu0 %v191
    %462 = vmatmul.mubr.bf16.gmra.mrb[0].mxu0 %v190
    %v463 = vpop.f32.mrb[0].mxu0
    %v464 = vadd.f32 %v235, %v463
    %v465 = vpop.f32.mrb[0].mxu0
    %v466 = vpop.f32.mrb[0].mxu0
    %v467 = vadd.f32 %v235, %v466
    %v468 = vpop.f32.mrb[0].mxu0
    %469 = vmatprep.mubr.bf16.mxu0 %v193
    %470 = vmatmul.mubr.bf16.gmra.mrb[0].mxu0 %v192
    %v471 = vpop.f32.mrb[0].mxu0
    %v472 = vadd.f32 %v235, %v471
    %v473 = vpop.f32.mrb[0].mxu0
    %v474 = vpop.f32.mrb[0].mxu0
    %v475 = vadd.f32 %v235, %v474
    %v476 = vpop.f32.mrb[0].mxu0
    %477 = vmatprep.mubr.bf16.mxu0 %v195
    %478 = vmatmul.mubr.bf16.gmra.mrb[0].mxu0 %v194
    %v479 = vpop.f32.mrb[0].mxu0
    %v480 = vadd.f32 %v235, %v479
    %v481 = vpop.f32.mrb[0].mxu0
    %v482 = vpop.f32.mrb[0].mxu0
    %v483 = vadd.f32 %v235, %v482
    %v484 = vpop.f32.mrb[0].mxu0
    %485 = vmatprep.mubr.bf16.mxu0 %v197
    %486 = vmatmul.mubr.bf16.gmra.mrb[0].mxu0 %v196
    %v487 = vpop.f32.mrb[0].mxu0
    %v488 = vadd.f32 %v235, %v487
    %v489 = vpop.f32.mrb[0].mxu0
    %v490 = vpop.f32.mrb[0].mxu0
    %v491 = vadd.f32 %v235, %v490
    %v492 = vpop.f32.mrb[0].mxu0
    %493 = vdwg.mxu0
    %v494 = vmax.f32 %v368, 0.0
    %v495 = vmax.f32 %v371, 0.0
    %v496 = vmax.f32 %v376, 0.0
    %v497 = vmax.f32 %v379, 0.0
    %v498 = vmax.f32 %v384, 0.0
    %v499 = vmax.f32 %v387, 0.0
    %v500 = vmax.f32 %v392, 0.0
    %v501 = vmax.f32 %v395, 0.0
    %v502 = vmax.f32 %v400, 0.0
    %v503 = vmax.f32 %v403, 0.0
    %v504 = vmax.f32 %v408, 0.0
    %v505 = vmax.f32 %v411, 0.0
    %v506 = vmax.f32 %v416, 0.0
    %v507 = vmax.f32 %v419, 0.0
    %v508 = vmax.f32 %v424, 0.0
    %v509 = vmax.f32 %v427, 0.0
    %v510 = vmax.f32 %v432, 0.0
    %v511 = vmax.f32 %v435, 0.0
    %v512 = vmax.f32 %v440, 0.0
    %v513 = vmax.f32 %v443, 0.0
    %v514 = vmax.f32 %v448, 0.0
    %v515 = vmax.f32 %v451, 0.0
    %v516 = vmax.f32 %v456, 0.0
    %v517 = vmax.f32 %v459, 0.0
    %v518 = vmax.f32 %v464, 0.0
    %v519 = vmax.f32 %v467, 0.0
    %v520 = vmax.f32 %v472, 0.0
    %v521 = vmax.f32 %v475, 0.0
    %v522 = vmax.f32 %v480, 0.0
    %v523 = vmax.f32 %v483, 0.0
    %v524 = vmax.f32 %v488, 0.0
    %v525 = vmax.f32 %v491, 0.0
    %v526 = vpack.c.bf16 %v495, %v494
    %v527 = vpack.c.bf16 %v497, %v496
    %v528 = vpack.c.bf16 %v499, %v498
    %v529 = vpack.c.bf16 %v501, %v500
    %v530 = vpack.c.bf16 %v503, %v502
    %v531 = vpack.c.bf16 %v505, %v504
    %v532 = vpack.c.bf16 %v507, %v506
    %v533 = vpack.c.bf16 %v509, %v508
    %v534 = vpack.c.bf16 %v511, %v510
    %v535 = vpack.c.bf16 %v513, %v512
    %v536 = vpack.c.bf16 %v515, %v514
    %v537 = vpack.c.bf16 %v517, %v516
    %v538 = vpack.c.bf16 %v519, %v518
    %v539 = vpack.c.bf16 %v521, %v520
    %v540 = vpack.c.bf16 %v523, %v522
    %v541 = vpack.c.bf16 %v525, %v524
    %v542 = vld [vmem:[#allocation7] sm:$0xf]
    %v543 = vld [vmem:[#allocation7 + $0x4] sm:$0xf]
    %v544 = vld [vmem:[#allocation7 + $0x8] sm:$0xf]
    %v545 = vld [vmem:[#allocation7 + $0xc] sm:$0xf]
    %v546 = vld [vmem:[#allocation7 + $0x10] sm:$0xf]
    %v547 = vld [vmem:[#allocation7 + $0x14] sm:$0xf]
    %v548 = vld [vmem:[#allocation7 + $0x18] sm:$0xf]
    %v549 = vld [vmem:[#allocation7 + $0x1c] sm:$0xf]
    %v550 = vld [vmem:[#allocation7 + $0x20] sm:$0xf]
    %v551 = vld [vmem:[#allocation7 + $0x24] sm:$0xf]
    %v552 = vld [vmem:[#allocation7 + $0x28] sm:$0xf]
    %v553 = vld [vmem:[#allocation7 + $0x2c] sm:$0xf]
    %v554 = vld [vmem:[#allocation7 + $0x30] sm:$0xf]
    %v555 = vld [vmem:[#allocation7 + $0x34] sm:$0xf]
    %v556 = vld [vmem:[#allocation7 + $0x38] sm:$0xf]
    %v557 = vld [vmem:[#allocation7 + $0x3c] sm:$0xf]
    %v558 = vld [vmem:[%s4] sm:$0x1]
    %v560 = vlaneseq
    %v561 = vshrl.u32 %v560, 7
    %v562 = vsub.s32 0, %v561
    %v563 = vrot.slane %v558, %v562
    %v581 = vunpack.c.l.b16 %v542
    %v582 = vunpack.c.l.b16 %v543
    %v583 = vunpack.c.l.b16 %v544
    %v584 = vunpack.c.l.b16 %v545
    %v585 = vunpack.c.l.b16 %v546
    %v586 = vunpack.c.l.b16 %v547
    %v587 = vunpack.c.l.b16 %v548
    %v588 = vunpack.c.l.b16 %v549
    %v589 = vunpack.c.l.b16 %v550
    %v590 = vunpack.c.l.b16 %v551
    %v591 = vunpack.c.l.b16 %v552
    %v592 = vunpack.c.l.b16 %v553
    %v593 = vunpack.c.l.b16 %v554
    %v594 = vunpack.c.l.b16 %v555
    %v595 = vunpack.c.l.b16 %v556
    %v596 = vunpack.c.l.b16 %v557
    %v597 = vpack.c.b16 %v582, %v581
    %v598 = vpack.c.b16 %v584, %v583
    %v599 = vpack.c.b16 %v586, %v585
    %v600 = vpack.c.b16 %v588, %v587
    %v601 = vpack.c.b16 %v590, %v589
    %v602 = vpack.c.b16 %v592, %v591
    %v603 = vpack.c.b16 %v594, %v593
    %v604 = vpack.c.b16 %v596, %v595
    %613 = vmatprep.subr.bf16.mxu0 0
    %614 = vmatpush1.bf16.msra.mxu0 %v597
    %615 = vmatprep.subr.bf16.mxu0 0
    %616 = vmatpush1.bf16.msra.mxu0 %v598
    %617 = vmatprep.subr.bf16.mxu0 0
    %618 = vmatpush1.bf16.msra.mxu0 %v599
    %619 = vmatprep.subr.bf16.mxu0 0
    %620 = vmatpush1.bf16.msra.mxu0 %v600
    %621 = vmatprep.subr.bf16.mxu0 0
    %622 = vmatpush1.bf16.msra.mxu0 %v601
    %623 = vmatprep.subr.bf16.mxu0 0
    %624 = vmatpush1.bf16.msra.mxu0 %v602
    %625 = vmatprep.subr.bf16.mxu0 0
    %626 = vmatpush1.bf16.msra.mxu0 %v603
    %627 = vmatprep.subr.bf16.mxu0 0
    %628 = vmatpush1.bf16.msra.mxu0 %v604
    %629 = vmatprep.subr.bf16.mxu0 0
    %630 = vmatpush1.bf16.msra.mxu0 0
    %631 = vmatprep.subr.bf16.mxu0 0
    %632 = vmatpush1.bf16.msra.mxu0 0
    %633 = vmatprep.subr.bf16.mxu0 0
    %634 = vmatpush1.bf16.msra.mxu0 0
    %635 = vmatprep.subr.bf16.mxu0 0
    %636 = vmatpush1.bf16.msra.mxu0 0
    %637 = vmatprep.subr.bf16.mxu0 0
    %638 = vmatpush1.bf16.msra.mxu0 0
    %639 = vmatprep.subr.bf16.mxu0 0
    %640 = vmatpush1.bf16.msra.mxu0 0
    %641 = vmatprep.subr.bf16.mxu0 0
    %642 = vmatpush1.bf16.msra.mxu0 0
    %643 = vmatprep.subr.bf16.mxu0 0
    %644 = vmatpush1.bf16.msra.mxu0 0
    %645 = vmatprep.mubr.bf16.mxu0 0
    %646 = vmatmul.mubr.bf16.gmra.mrb[0].mxu0 %v526
    %v647 = vpop.f32.mrb[0].mxu0
    %v648 = vadd.f32 %v563, %v647
    %v649 = vpop.f32.mrb[0].mxu0
    %v650 = vpop.f32.mrb[0].mxu0
    %v651 = vadd.f32 %v563, %v650
    %v652 = vpop.f32.mrb[0].mxu0
    %653 = vmatprep.mubr.bf16.mxu0 0
    %654 = vmatmul.mubr.bf16.gmra.mrb[0].mxu0 %v527
    %v655 = vpop.f32.mrb[0].mxu0
    %v656 = vadd.f32 %v563, %v655
    %v657 = vpop.f32.mrb[0].mxu0
    %v658 = vpop.f32.mrb[0].mxu0
    %v659 = vadd.f32 %v563, %v658
    %v660 = vpop.f32.mrb[0].mxu0
    %661 = vmatprep.mubr.bf16.mxu0 0
    %662 = vmatmul.mubr.bf16.gmra.mrb[0].mxu0 %v528
    %v663 = vpop.f32.mrb[0].mxu0
    %v664 = vadd.f32 %v563, %v663
    %v665 = vpop.f32.mrb[0].mxu0
    %v666 = vpop.f32.mrb[0].mxu0
    %v667 = vadd.f32 %v563, %v666
    %v668 = vpop.f32.mrb[0].mxu0
    %669 = vmatprep.mubr.bf16.mxu0 0
    %670 = vmatmul.mubr.bf16.gmra.mrb[0].mxu0 %v529
    %v671 = vpop.f32.mrb[0].mxu0
    %v672 = vadd.f32 %v563, %v671
    %v673 = vpop.f32.mrb[0].mxu0
    %v674 = vpop.f32.mrb[0].mxu0
    %v675 = vadd.f32 %v563, %v674
    %v676 = vpop.f32.mrb[0].mxu0
    %677 = vmatprep.mubr.bf16.mxu0 0
    %678 = vmatmul.mubr.bf16.gmra.mrb[0].mxu0 %v530
    %v679 = vpop.f32.mrb[0].mxu0
    %v680 = vadd.f32 %v563, %v679
    %v681 = vpop.f32.mrb[0].mxu0
    %v682 = vpop.f32.mrb[0].mxu0
    %v683 = vadd.f32 %v563, %v682
    %v684 = vpop.f32.mrb[0].mxu0
    %685 = vmatprep.mubr.bf16.mxu0 0
    %686 = vmatmul.mubr.bf16.gmra.mrb[0].mxu0 %v531
    %v687 = vpop.f32.mrb[0].mxu0
    %v688 = vadd.f32 %v563, %v687
    %v689 = vpop.f32.mrb[0].mxu0
    %v690 = vpop.f32.mrb[0].mxu0
    %v691 = vadd.f32 %v563, %v690
    %v692 = vpop.f32.mrb[0].mxu0
    %693 = vmatprep.mubr.bf16.mxu0 0
    %694 = vmatmul.mubr.bf16.gmra.mrb[0].mxu0 %v532
    %v695 = vpop.f32.mrb[0].mxu0
    %v696 = vadd.f32 %v563, %v695
    %v697 = vpop.f32.mrb[0].mxu0
    %v698 = vpop.f32.mrb[0].mxu0
    %v699 = vadd.f32 %v563, %v698
    %v700 = vpop.f32.mrb[0].mxu0
    %701 = vmatprep.mubr.bf16.mxu0 0
    %702 = vmatmul.mubr.bf16.gmra.mrb[0].mxu0 %v533
    %v703 = vpop.f32.mrb[0].mxu0
    %v704 = vadd.f32 %v563, %v703
    %v705 = vpop.f32.mrb[0].mxu0
    %v706 = vpop.f32.mrb[0].mxu0
    %v707 = vadd.f32 %v563, %v706
    %v708 = vpop.f32.mrb[0].mxu0
    %709 = vmatprep.mubr.bf16.mxu0 0
    %710 = vmatmul.mubr.bf16.gmra.mrb[0].mxu0 %v534
    %v711 = vpop.f32.mrb[0].mxu0
    %v712 = vadd.f32 %v563, %v711
    %v713 = vpop.f32.mrb[0].mxu0
    %v714 = vpop.f32.mrb[0].mxu0
    %v715 = vadd.f32 %v563, %v714
    %v716 = vpop.f32.mrb[0].mxu0
    %717 = vmatprep.mubr.bf16.mxu0 0
    %718 = vmatmul.mubr.bf16.gmra.mrb[0].mxu0 %v535
    %v719 = vpop.f32.mrb[0].mxu0
    %v720 = vadd.f32 %v563, %v719
    %v721 = vpop.f32.mrb[0].mxu0
    %v722 = vpop.f32.mrb[0].mxu0
    %v723 = vadd.f32 %v563, %v722
    %v724 = vpop.f32.mrb[0].mxu0
    %725 = vmatprep.mubr.bf16.mxu0 0
    %726 = vmatmul.mubr.bf16.gmra.mrb[0].mxu0 %v536
    %v727 = vpop.f32.mrb[0].mxu0
    %v728 = vadd.f32 %v563, %v727
    %v729 = vpop.f32.mrb[0].mxu0
    %v730 = vpop.f32.mrb[0].mxu0
    %v731 = vadd.f32 %v563, %v730
    %v732 = vpop.f32.mrb[0].mxu0
    %733 = vmatprep.mubr.bf16.mxu0 0
    %734 = vmatmul.mubr.bf16.gmra.mrb[0].mxu0 %v537
    %v735 = vpop.f32.mrb[0].mxu0
    %v736 = vadd.f32 %v563, %v735
    %v737 = vpop.f32.mrb[0].mxu0
    %v738 = vpop.f32.mrb[0].mxu0
    %v739 = vadd.f32 %v563, %v738
    %v740 = vpop.f32.mrb[0].mxu0
    %741 = vmatprep.mubr.bf16.mxu0 0
    %742 = vmatmul.mubr.bf16.gmra.mrb[0].mxu0 %v538
    %v743 = vpop.f32.mrb[0].mxu0
    %v744 = vadd.f32 %v563, %v743
    %v745 = vpop.f32.mrb[0].mxu0
    %v746 = vpop.f32.mrb[0].mxu0
    %v747 = vadd.f32 %v563, %v746
    %v748 = vpop.f32.mrb[0].mxu0
    %749 = vmatprep.mubr.bf16.mxu0 0
    %750 = vmatmul.mubr.bf16.gmra.mrb[0].mxu0 %v539
    %v751 = vpop.f32.mrb[0].mxu0
    %v752 = vadd.f32 %v563, %v751
    %v753 = vpop.f32.mrb[0].mxu0
    %v754 = vpop.f32.mrb[0].mxu0
    %v755 = vadd.f32 %v563, %v754
    %v756 = vpop.f32.mrb[0].mxu0
    %757 = vmatprep.mubr.bf16.mxu0 0
    %758 = vmatmul.mubr.bf16.gmra.mrb[0].mxu0 %v540
    %v759 = vpop.f32.mrb[0].mxu0
    %v760 = vadd.f32 %v563, %v759
    %v761 = vpop.f32.mrb[0].mxu0
    %v762 = vpop.f32.mrb[0].mxu0
    %v763 = vadd.f32 %v563, %v762
    %v764 = vpop.f32.mrb[0].mxu0
    %765 = vmatprep.mubr.bf16.mxu0 0
    %766 = vmatmul.mubr.bf16.gmra.mrb[0].mxu0 %v541
    %v767 = vpop.f32.mrb[0].mxu0
    %v768 = vadd.f32 %v563, %v767
    %v769 = vpop.f32.mrb[0].mxu0
    %v770 = vpop.f32.mrb[0].mxu0
    %v771 = vadd.f32 %v563, %v770
    %v772 = vpop.f32.mrb[0].mxu0
    %773 = vdwg.mxu0
    %v774 = vmax.f32 %v648, 0.0
    %v775 = vmax.f32 %v651, 0.0
    %v776 = vmax.f32 %v656, 0.0
    %v777 = vmax.f32 %v659, 0.0
    %v778 = vmax.f32 %v664, 0.0
    %v779 = vmax.f32 %v667, 0.0
    %v780 = vmax.f32 %v672, 0.0
    %v781 = vmax.f32 %v675, 0.0
    %v782 = vmax.f32 %v680, 0.0
    %v783 = vmax.f32 %v683, 0.0
    %v784 = vmax.f32 %v688, 0.0
    %v785 = vmax.f32 %v691, 0.0
    %v786 = vmax.f32 %v696, 0.0
    %v787 = vmax.f32 %v699, 0.0
    %v788 = vmax.f32 %v704, 0.0
    %v789 = vmax.f32 %v707, 0.0
    %v790 = vmax.f32 %v712, 0.0
    %v791 = vmax.f32 %v715, 0.0
    %v792 = vmax.f32 %v720, 0.0
    %v793 = vmax.f32 %v723, 0.0
    %v794 = vmax.f32 %v728, 0.0
    %v795 = vmax.f32 %v731, 0.0
    %v796 = vmax.f32 %v736, 0.0
    %v797 = vmax.f32 %v739, 0.0
    %v798 = vmax.f32 %v744, 0.0
    %v799 = vmax.f32 %v747, 0.0
    %v800 = vmax.f32 %v752, 0.0
    %v801 = vmax.f32 %v755, 0.0
    %v802 = vmax.f32 %v760, 0.0
    %v803 = vmax.f32 %v763, 0.0
    %v804 = vmax.f32 %v768, 0.0
    %v805 = vmax.f32 %v771, 0.0
    %v806 = vpack.c.bf16 %v775, %v774
    %v807 = vpack.c.bf16 %v777, %v776
    %v808 = vpack.c.bf16 %v779, %v778
    %v809 = vpack.c.bf16 %v781, %v780
    %v810 = vpack.c.bf16 %v783, %v782
    %v811 = vpack.c.bf16 %v785, %v784
    %v812 = vpack.c.bf16 %v787, %v786
    %v813 = vpack.c.bf16 %v789, %v788
    %v814 = vpack.c.bf16 %v791, %v790
    %v815 = vpack.c.bf16 %v793, %v792
    %v816 = vpack.c.bf16 %v795, %v794
    %v817 = vpack.c.bf16 %v797, %v796
    %v818 = vpack.c.bf16 %v799, %v798
    %v819 = vpack.c.bf16 %v801, %v800
    %v820 = vpack.c.bf16 %v803, %v802
    %v821 = vpack.c.bf16 %v805, %v804
    %v822 = vld [vmem:[#allocation8] sm:$0xf]
    %v823 = vld [vmem:[#allocation8 + $0x4] sm:$0xf]
    %v824 = vld [vmem:[#allocation8 + $0x8] sm:$0xf]
    %v825 = vld [vmem:[#allocation8 + $0xc] sm:$0xf]
    %v826 = vld [vmem:[#allocation8 + $0x10] sm:$0xf]
    %v827 = vld [vmem:[#allocation8 + $0x14] sm:$0xf]
    %v828 = vld [vmem:[#allocation8 + $0x18] sm:$0xf]
    %v829 = vld [vmem:[#allocation8 + $0x1c] sm:$0xf]
    %v830 = vld [vmem:[#allocation8 + $0x20] sm:$0xf]
    %v831 = vld [vmem:[#allocation8 + $0x24] sm:$0xf]
    %v832 = vld [vmem:[#allocation8 + $0x28] sm:$0xf]
    %v833 = vld [vmem:[#allocation8 + $0x2c] sm:$0xf]
    %v834 = vld [vmem:[#allocation8 + $0x30] sm:$0xf]
    %v835 = vld [vmem:[#allocation8 + $0x34] sm:$0xf]
    %v836 = vld [vmem:[#allocation8 + $0x38] sm:$0xf]
    %v837 = vld [vmem:[#allocation8 + $0x3c] sm:$0xf]
    %v838 = vld [vmem:[%s6] sm:$0x1]
    %v840 = vlaneseq
    %v841 = vshrl.u32 %v840, 7
    %v842 = vsub.s32 0, %v841
    %v843 = vrot.slane %v838, %v842
    %v861 = vunpack.c.l.b16 %v822
    %v862 = vunpack.c.l.b16 %v823
    %v863 = vunpack.c.l.b16 %v824
    %v864 = vunpack.c.l.b16 %v825
    %v865 = vunpack.c.l.b16 %v826
    %v866 = vunpack.c.l.b16 %v827
    %v867 = vunpack.c.l.b16 %v828
    %v868 = vunpack.c.l.b16 %v829
    %v869 = vunpack.c.l.b16 %v830
    %v870 = vunpack.c.l.b16 %v831
    %v871 = vunpack.c.l.b16 %v832
    %v872 = vunpack.c.l.b16 %v833
    %v873 = vunpack.c.l.b16 %v834
    %v874 = vunpack.c.l.b16 %v835
    %v875 = vunpack.c.l.b16 %v836
    %v876 = vunpack.c.l.b16 %v837
    %v877 = vpack.c.b16 %v862, %v861
    %v878 = vpack.c.b16 %v864, %v863
    %v879 = vpack.c.b16 %v866, %v865
    %v880 = vpack.c.b16 %v868, %v867
    %v881 = vpack.c.b16 %v870, %v869
    %v882 = vpack.c.b16 %v872, %v871
    %v883 = vpack.c.b16 %v874, %v873
    %v884 = vpack.c.b16 %v876, %v875
    %893 = vmatprep.subr.bf16.mxu0 0
    %894 = vmatpush1.bf16.msra.mxu0 %v877
    %895 = vmatprep.subr.bf16.mxu0 0
    %896 = vmatpush1.bf16.msra.mxu0 %v878
    %897 = vmatprep.subr.bf16.mxu0 0
    %898 = vmatpush1.bf16.msra.mxu0 %v879
    %899 = vmatprep.subr.bf16.mxu0 0
    %900 = vmatpush1.bf16.msra.mxu0 %v880
    %901 = vmatprep.subr.bf16.mxu0 0
    %902 = vmatpush1.bf16.msra.mxu0 %v881
    %903 = vmatprep.subr.bf16.mxu0 0
    %904 = vmatpush1.bf16.msra.mxu0 %v882
    %905 = vmatprep.subr.bf16.mxu0 0
    %906 = vmatpush1.bf16.msra.mxu0 %v883
    %907 = vmatprep.subr.bf16.mxu0 0
    %908 = vmatpush1.bf16.msra.mxu0 %v884
    %909 = vmatprep.subr.bf16.mxu0 0
    %910 = vmatpush1.bf16.msra.mxu0 0
    %911 = vmatprep.subr.bf16.mxu0 0
    %912 = vmatpush1.bf16.msra.mxu0 0
    %913 = vmatprep.subr.bf16.mxu0 0
    %914 = vmatpush1.bf16.msra.mxu0 0
    %915 = vmatprep.subr.bf16.mxu0 0
    %916 = vmatpush1.bf16.msra.mxu0 0
    %917 = vmatprep.subr.bf16.mxu0 0
    %918 = vmatpush1.bf16.msra.mxu0 0
    %919 = vmatprep.subr.bf16.mxu0 0
    %920 = vmatpush1.bf16.msra.mxu0 0
    %921 = vmatprep.subr.bf16.mxu0 0
    %922 = vmatpush1.bf16.msra.mxu0 0
    %923 = vmatprep.subr.bf16.mxu0 0
    %924 = vmatpush1.bf16.msra.mxu0 0
    %925 = vmatprep.mubr.bf16.mxu0 0
    %926 = vmatmul.mubr.bf16.gmra.mrb[0].mxu0 %v806
    %v927 = vpop.f32.mrb[0].mxu0
    %v928 = vadd.f32 %v843, %v927
    %v929 = vpop.f32.mrb[0].mxu0
    %v930 = vpop.f32.mrb[0].mxu0
    %v931 = vadd.f32 %v843, %v930
    %v932 = vpop.f32.mrb[0].mxu0
    %933 = vmatprep.mubr.bf16.mxu0 0
    %934 = vmatmul.mubr.bf16.gmra.mrb[0].mxu0 %v807
    %v935 = vpop.f32.mrb[0].mxu0
    %v936 = vadd.f32 %v843, %v935
    %v937 = vpop.f32.mrb[0].mxu0
    %v938 = vpop.f32.mrb[0].mxu0
    %v939 = vadd.f32 %v843, %v938
    %v940 = vpop.f32.mrb[0].mxu0
    %941 = vmatprep.mubr.bf16.mxu0 0
    %942 = vmatmul.mubr.bf16.gmra.mrb[0].mxu0 %v808
    %v943 = vpop.f32.mrb[0].mxu0
    %v944 = vadd.f32 %v843, %v943
    %v945 = vpop.f32.mrb[0].mxu0
    %v946 = vpop.f32.mrb[0].mxu0
    %v947 = vadd.f32 %v843, %v946
    %v948 = vpop.f32.mrb[0].mxu0
    %949 = vmatprep.mubr.bf16.mxu0 0
    %950 = vmatmul.mubr.bf16.gmra.mrb[0].mxu0 %v809
    %v951 = vpop.f32.mrb[0].mxu0
    %v952 = vadd.f32 %v843, %v951
    %v953 = vpop.f32.mrb[0].mxu0
    %v954 = vpop.f32.mrb[0].mxu0
    %v955 = vadd.f32 %v843, %v954
    %v956 = vpop.f32.mrb[0].mxu0
    %957 = vmatprep.mubr.bf16.mxu0 0
    %958 = vmatmul.mubr.bf16.gmra.mrb[0].mxu0 %v810
    %v959 = vpop.f32.mrb[0].mxu0
    %v960 = vadd.f32 %v843, %v959
    %v961 = vpop.f32.mrb[0].mxu0
    %v962 = vpop.f32.mrb[0].mxu0
    %v963 = vadd.f32 %v843, %v962
    %v964 = vpop.f32.mrb[0].mxu0
    %965 = vmatprep.mubr.bf16.mxu0 0
    %966 = vmatmul.mubr.bf16.gmra.mrb[0].mxu0 %v811
    %v967 = vpop.f32.mrb[0].mxu0
    %v968 = vadd.f32 %v843, %v967
    %v969 = vpop.f32.mrb[0].mxu0
    %v970 = vpop.f32.mrb[0].mxu0
    %v971 = vadd.f32 %v843, %v970
    %v972 = vpop.f32.mrb[0].mxu0
    %973 = vmatprep.mubr.bf16.mxu0 0
    %974 = vmatmul.mubr.bf16.gmra.mrb[0].mxu0 %v812
    %v975 = vpop.f32.mrb[0].mxu0
    %v976 = vadd.f32 %v843, %v975
    %v977 = vpop.f32.mrb[0].mxu0
    %v978 = vpop.f32.mrb[0].mxu0
    %v979 = vadd.f32 %v843, %v978
    %v980 = vpop.f32.mrb[0].mxu0
    %981 = vmatprep.mubr.bf16.mxu0 0
    %982 = vmatmul.mubr.bf16.gmra.mrb[0].mxu0 %v813
    %v983 = vpop.f32.mrb[0].mxu0
    %v984 = vadd.f32 %v843, %v983
    %v985 = vpop.f32.mrb[0].mxu0
    %v986 = vpop.f32.mrb[0].mxu0
    %v987 = vadd.f32 %v843, %v986
    %v988 = vpop.f32.mrb[0].mxu0
    %989 = vmatprep.mubr.bf16.mxu0 0
    %990 = vmatmul.mubr.bf16.gmra.mrb[0].mxu0 %v814
    %v991 = vpop.f32.mrb[0].mxu0
    %v992 = vadd.f32 %v843, %v991
    %v993 = vpop.f32.mrb[0].mxu0
    %v994 = vpop.f32.mrb[0].mxu0
    %v995 = vadd.f32 %v843, %v994
    %v996 = vpop.f32.mrb[0].mxu0
    %997 = vmatprep.mubr.bf16.mxu0 0
    %998 = vmatmul.mubr.bf16.gmra.mrb[0].mxu0 %v815
    %v999 = vpop.f32.mrb[0].mxu0
    %v1000 = vadd.f32 %v843, %v999
    %v1001 = vpop.f32.mrb[0].mxu0
    %v1002 = vpop.f32.mrb[0].mxu0
    %v1003 = vadd.f32 %v843, %v1002
    %v1004 = vpop.f32.mrb[0].mxu0
    %1005 = vmatprep.mubr.bf16.mxu0 0
    %1006 = vmatmul.mubr.bf16.gmra.mrb[0].mxu0 %v816
    %v1007 = vpop.f32.mrb[0].mxu0
    %v1008 = vadd.f32 %v843, %v1007
    %v1009 = vpop.f32.mrb[0].mxu0
    %v1010 = vpop.f32.mrb[0].mxu0
    %v1011 = vadd.f32 %v843, %v1010
    %v1012 = vpop.f32.mrb[0].mxu0
    %1013 = vmatprep.mubr.bf16.mxu0 0
    %1014 = vmatmul.mubr.bf16.gmra.mrb[0].mxu0 %v817
    %v1015 = vpop.f32.mrb[0].mxu0
    %v1016 = vadd.f32 %v843, %v1015
    %v1017 = vpop.f32.mrb[0].mxu0
    %v1018 = vpop.f32.mrb[0].mxu0
    %v1019 = vadd.f32 %v843, %v1018
    %v1020 = vpop.f32.mrb[0].mxu0
    %1021 = vmatprep.mubr.bf16.mxu0 0
    %1022 = vmatmul.mubr.bf16.gmra.mrb[0].mxu0 %v818
    %v1023 = vpop.f32.mrb[0].mxu0
    %v1024 = vadd.f32 %v843, %v1023
    %v1025 = vpop.f32.mrb[0].mxu0
    %v1026 = vpop.f32.mrb[0].mxu0
    %v1027 = vadd.f32 %v843, %v1026
    %v1028 = vpop.f32.mrb[0].mxu0
    %1029 = vmatprep.mubr.bf16.mxu0 0
    %1030 = vmatmul.mubr.bf16.gmra.mrb[0].mxu0 %v819
    %v1031 = vpop.f32.mrb[0].mxu0
    %v1032 = vadd.f32 %v843, %v1031
    %v1033 = vpop.f32.mrb[0].mxu0
    %v1034 = vpop.f32.mrb[0].mxu0
    %v1035 = vadd.f32 %v843, %v1034
    %v1036 = vpop.f32.mrb[0].mxu0
    %1037 = vmatprep.mubr.bf16.mxu0 0
    %1038 = vmatmul.mubr.bf16.gmra.mrb[0].mxu0 %v820
    %v1039 = vpop.f32.mrb[0].mxu0
    %v1040 = vadd.f32 %v843, %v1039
    %v1041 = vpop.f32.mrb[0].mxu0
    %v1042 = vpop.f32.mrb[0].mxu0
    %v1043 = vadd.f32 %v843, %v1042
    %v1044 = vpop.f32.mrb[0].mxu0
    %1045 = vmatprep.mubr.bf16.mxu0 0
    %1046 = vmatmul.mubr.bf16.gmra.mrb[0].mxu0 %v821
    %v1047 = vpop.f32.mrb[0].mxu0
    %v1048 = vadd.f32 %v843, %v1047
    %v1049 = vpop.f32.mrb[0].mxu0
    %v1050 = vpop.f32.mrb[0].mxu0
    %v1051 = vadd.f32 %v843, %v1050
    %v1052 = vpop.f32.mrb[0].mxu0
    %1053 = vdwg.mxu0
    %v1054 = vmax.f32 %v928, 0.0
    %v1055 = vmax.f32 %v931, 0.0
    %v1056 = vmax.f32 %v936, 0.0
    %v1057 = vmax.f32 %v939, 0.0
    %v1058 = vmax.f32 %v944, 0.0
    %v1059 = vmax.f32 %v947, 0.0
    %v1060 = vmax.f32 %v952, 0.0
    %v1061 = vmax.f32 %v955, 0.0
    %v1062 = vmax.f32 %v960, 0.0
    %v1063 = vmax.f32 %v963, 0.0
    %v1064 = vmax.f32 %v968, 0.0
    %v1065 = vmax.f32 %v971, 0.0
    %v1066 = vmax.f32 %v976, 0.0
    %v1067 = vmax.f32 %v979, 0.0
    %v1068 = vmax.f32 %v984, 0.0
    %v1069 = vmax.f32 %v987, 0.0
    %v1070 = vmax.f32 %v992, 0.0
    %v1071 = vmax.f32 %v995, 0.0
    %v1072 = vmax.f32 %v1000, 0.0
    %v1073 = vmax.f32 %v1003, 0.0
    %v1074 = vmax.f32 %v1008, 0.0
    %v1075 = vmax.f32 %v1011, 0.0
    %v1076 = vmax.f32 %v1016, 0.0
    %v1077 = vmax.f32 %v1019, 0.0
    %v1078 = vmax.f32 %v1024, 0.0
    %v1079 = vmax.f32 %v1027, 0.0
    %v1080 = vmax.f32 %v1032, 0.0
    %v1081 = vmax.f32 %v1035, 0.0
    %v1082 = vmax.f32 %v1040, 0.0
    %v1083 = vmax.f32 %v1043, 0.0
    %v1084 = vmax.f32 %v1048, 0.0
    %v1085 = vmax.f32 %v1051, 0.0
    %v1086 = vpack.c.bf16 %v1055, %v1054
    %v1087 = vpack.c.bf16 %v1057, %v1056
    %v1088 = vpack.c.bf16 %v1059, %v1058
    %v1089 = vpack.c.bf16 %v1061, %v1060
    %v1090 = vpack.c.bf16 %v1063, %v1062
    %v1091 = vpack.c.bf16 %v1065, %v1064
    %v1092 = vpack.c.bf16 %v1067, %v1066
    %v1093 = vpack.c.bf16 %v1069, %v1068
    %v1094 = vpack.c.bf16 %v1071, %v1070
    %v1095 = vpack.c.bf16 %v1073, %v1072
    %v1096 = vpack.c.bf16 %v1075, %v1074
    %v1097 = vpack.c.bf16 %v1077, %v1076
    %v1098 = vpack.c.bf16 %v1079, %v1078
    %v1099 = vpack.c.bf16 %v1081, %v1080
    %v1100 = vpack.c.bf16 %v1083, %v1082
    %v1101 = vpack.c.bf16 %v1085, %v1084
    %v1102 = vld [vmem:[#allocation10] sm:$0xff]
    %v1103 = vld [vmem:[#allocation10 + $0x8] sm:$0xff]
    %v1104 = vld [vmem:[#allocation10 + $0x10] sm:$0xff]
    %v1105 = vld [vmem:[#allocation10 + $0x18] sm:$0xff]
    %v1106 = vld [vmem:[#allocation10 + $0x20] sm:$0xff]
    %v1107 = vld [vmem:[#allocation10 + $0x28] sm:$0xff]
    %v1108 = vld [vmem:[#allocation10 + $0x30] sm:$0xff]
    %v1109 = vld [vmem:[#allocation10 + $0x38] sm:$0xff]
    %v1110 = vld [vmem:[#allocation10 + $0x40] sm:$0xff]
    %v1111 = vld [vmem:[#allocation10 + $0x48] sm:$0xff]
    %v1112 = vld [vmem:[#allocation10 + $0x50] sm:$0xff]
    %v1113 = vld [vmem:[#allocation10 + $0x58] sm:$0xff]
    %v1114 = vld [vmem:[#allocation10 + $0x60] sm:$0xff]
    %v1115 = vld [vmem:[#allocation10 + $0x68] sm:$0xff]
    %v1116 = vld [vmem:[#allocation10 + $0x70] sm:$0xff]
    %v1117 = vld [vmem:[#allocation10 + $0x78] sm:$0xff]
    %v1118 = vld [vmem:[%s8] sm:$0x3]
    %v1120 = vlaneseq
    %v1121 = vshrl.u32 %v1120, 7
    %v1122 = vsub.s32 0, %v1121
    %v1123 = vrot.slane %v1118, %v1122
    %v1124 = vlaneseq
    %v1125 = vshrl.u32 %v1124, 7
    %v1126 = vsub.s32 1, %v1125
    %v1127 = vrot.slane %v1118, %v1126
    %v1146 = vunpack.c.l.b16 %v1102
    %v1147 = vunpack.c.h.b16 %v1102
    %v1148 = vunpack.c.l.b16 %v1103
    %v1149 = vunpack.c.h.b16 %v1103
    %v1150 = vunpack.c.l.b16 %v1104
    %v1151 = vunpack.c.h.b16 %v1104
    %v1152 = vunpack.c.l.b16 %v1105
    %v1153 = vunpack.c.h.b16 %v1105
    %v1154 = vunpack.c.l.b16 %v1106
    %v1155 = vunpack.c.h.b16 %v1106
    %v1156 = vunpack.c.l.b16 %v1107
    %v1157 = vunpack.c.h.b16 %v1107
    %v1158 = vunpack.c.l.b16 %v1108
    %v1159 = vunpack.c.h.b16 %v1108
    %v1160 = vunpack.c.l.b16 %v1109
    %v1161 = vunpack.c.h.b16 %v1109
    %v1162 = vunpack.c.l.b16 %v1110
    %v1163 = vunpack.c.h.b16 %v1110
    %v1164 = vunpack.c.l.b16 %v1111
    %v1165 = vunpack.c.h.b16 %v1111
    %v1166 = vunpack.c.l.b16 %v1112
    %v1167 = vunpack.c.h.b16 %v1112
    %v1168 = vunpack.c.l.b16 %v1113
    %v1169 = vunpack.c.h.b16 %v1113
    %v1170 = vunpack.c.l.b16 %v1114
    %v1171 = vunpack.c.h.b16 %v1114
    %v1172 = vunpack.c.l.b16 %v1115
    %v1173 = vunpack.c.h.b16 %v1115
    %v1174 = vunpack.c.l.b16 %v1116
    %v1175 = vunpack.c.h.b16 %v1116
    %v1176 = vunpack.c.l.b16 %v1117
    %v1177 = vunpack.c.h.b16 %v1117
    %v1178 = vpack.c.b16 %v1148, %v1146
    %v1179 = vpack.c.b16 %v1149, %v1147
    %v1180 = vpack.c.b16 %v1152, %v1150
    %v1181 = vpack.c.b16 %v1153, %v1151
    %v1182 = vpack.c.b16 %v1156, %v1154
    %v1183 = vpack.c.b16 %v1157, %v1155
    %v1184 = vpack.c.b16 %v1160, %v1158
    %v1185 = vpack.c.b16 %v1161, %v1159
    %v1186 = vpack.c.b16 %v1164, %v1162
    %v1187 = vpack.c.b16 %v1165, %v1163
    %v1188 = vpack.c.b16 %v1168, %v1166
    %v1189 = vpack.c.b16 %v1169, %v1167
    %v1190 = vpack.c.b16 %v1172, %v1170
    %v1191 = vpack.c.b16 %v1173, %v1171
    %v1192 = vpack.c.b16 %v1176, %v1174
    %v1193 = vpack.c.b16 %v1177, %v1175
    %1210 = vmatprep.subr.bf16.mxu0 %v1179
    %1211 = vmatpush1.bf16.msra.mxu0 %v1178
    %1212 = vmatprep.subr.bf16.mxu0 %v1181
    %1213 = vmatpush1.bf16.msra.mxu0 %v1180
    %1214 = vmatprep.subr.bf16.mxu0 %v1183
    %1215 = vmatpush1.bf16.msra.mxu0 %v1182
    %1216 = vmatprep.subr.bf16.mxu0 %v1185
    %1217 = vmatpush1.bf16.msra.mxu0 %v1184
    %1218 = vmatprep.subr.bf16.mxu0 %v1187
    %1219 = vmatpush1.bf16.msra.mxu0 %v1186
    %1220 = vmatprep.subr.bf16.mxu0 %v1189
    %1221 = vmatpush1.bf16.msra.mxu0 %v1188
    %1222 = vmatprep.subr.bf16.mxu0 %v1191
    %1223 = vmatpush1.bf16.msra.mxu0 %v1190
    %1224 = vmatprep.subr.bf16.mxu0 %v1193
    %1225 = vmatpush1.bf16.msra.mxu0 %v1192
    %1226 = vmatprep.subr.bf16.mxu0 0
    %1227 = vmatpush1.bf16.msra.mxu0 0
    %1228 = vmatprep.subr.bf16.mxu0 0
    %1229 = vmatpush1.bf16.msra.mxu0 0
    %1230 = vmatprep.subr.bf16.mxu0 0
    %1231 = vmatpush1.bf16.msra.mxu0 0
    %1232 = vmatprep.subr.bf16.mxu0 0
    %1233 = vmatpush1.bf16.msra.mxu0 0
    %1234 = vmatprep.subr.bf16.mxu0 0
    %1235 = vmatpush1.bf16.msra.mxu0 0
    %1236 = vmatprep.subr.bf16.mxu0 0
    %1237 = vmatpush1.bf16.msra.mxu0 0
    %1238 = vmatprep.subr.bf16.mxu0 0
    %1239 = vmatpush1.bf16.msra.mxu0 0
    %1240 = vmatprep.subr.bf16.mxu0 0
    %1241 = vmatpush1.bf16.msra.mxu0 0
    %1242 = vmatprep.mubr.bf16.mxu0 0
    %1243 = vmatmul.mubr.bf16.gmra.mrb[0].mxu0 %v1086
    %v1244 = vpop.f32.mrb[0].mxu0
    %v1245 = vadd.f32 %v1123, %v1244
    %v1246 = vpop.f32.mrb[0].mxu0
    %v1247 = vadd.f32 %v1127, %v1246
    %v1248 = vpop.f32.mrb[0].mxu0
    %v1249 = vadd.f32 %v1123, %v1248
    %v1250 = vpop.f32.mrb[0].mxu0
    %v1251 = vadd.f32 %v1127, %v1250
    %1252 = vmatprep.mubr.bf16.mxu0 0
    %1253 = vmatmul.mubr.bf16.gmra.mrb[0].mxu0 %v1087
    %v1254 = vpop.f32.mrb[0].mxu0
    %v1255 = vadd.f32 %v1123, %v1254
    %v1256 = vpop.f32.mrb[0].mxu0
    %v1257 = vadd.f32 %v1127, %v1256
    %v1258 = vpop.f32.mrb[0].mxu0
    %v1259 = vadd.f32 %v1123, %v1258
    %v1260 = vpop.f32.mrb[0].mxu0
    %v1261 = vadd.f32 %v1127, %v1260
    %1262 = vmatprep.mubr.bf16.mxu0 0
    %1263 = vmatmul.mubr.bf16.gmra.mrb[0].mxu0 %v1088
    %v1264 = vpop.f32.mrb[0].mxu0
    %v1265 = vadd.f32 %v1123, %v1264
    %v1266 = vpop.f32.mrb[0].mxu0
    %v1267 = vadd.f32 %v1127, %v1266
    %v1268 = vpop.f32.mrb[0].mxu0
    %v1269 = vadd.f32 %v1123, %v1268
    %v1270 = vpop.f32.mrb[0].mxu0
    %v1271 = vadd.f32 %v1127, %v1270
    %1272 = vmatprep.mubr.bf16.mxu0 0
    %1273 = vmatmul.mubr.bf16.gmra.mrb[0].mxu0 %v1089
    %v1274 = vpop.f32.mrb[0].mxu0
    %v1275 = vadd.f32 %v1123, %v1274
    %v1276 = vpop.f32.mrb[0].mxu0
    %v1277 = vadd.f32 %v1127, %v1276
    %v1278 = vpop.f32.mrb[0].mxu0
    %v1279 = vadd.f32 %v1123, %v1278
    %v1280 = vpop.f32.mrb[0].mxu0
    %v1281 = vadd.f32 %v1127, %v1280
    %1282 = vmatprep.mubr.bf16.mxu0 0
    %1283 = vmatmul.mubr.bf16.gmra.mrb[0].mxu0 %v1090
    %v1284 = vpop.f32.mrb[0].mxu0
    %v1285 = vadd.f32 %v1123, %v1284
    %v1286 = vpop.f32.mrb[0].mxu0
    %v1287 = vadd.f32 %v1127, %v1286
    %v1288 = vpop.f32.mrb[0].mxu0
    %v1289 = vadd.f32 %v1123, %v1288
    %v1290 = vpop.f32.mrb[0].mxu0
    %v1291 = vadd.f32 %v1127, %v1290
    %1292 = vmatprep.mubr.bf16.mxu0 0
    %1293 = vmatmul.mubr.bf16.gmra.mrb[0].mxu0 %v1091
    %v1294 = vpop.f32.mrb[0].mxu0
    %v1295 = vadd.f32 %v1123, %v1294
    %v1296 = vpop.f32.mrb[0].mxu0
    %v1297 = vadd.f32 %v1127, %v1296
    %v1298 = vpop.f32.mrb[0].mxu0
    %v1299 = vadd.f32 %v1123, %v1298
    %v1300 = vpop.f32.mrb[0].mxu0
    %v1301 = vadd.f32 %v1127, %v1300
    %1302 = vmatprep.mubr.bf16.mxu0 0
    %1303 = vmatmul.mubr.bf16.gmra.mrb[0].mxu0 %v1092
    %v1304 = vpop.f32.mrb[0].mxu0
    %v1305 = vadd.f32 %v1123, %v1304
    %v1306 = vpop.f32.mrb[0].mxu0
    %v1307 = vadd.f32 %v1127, %v1306
    %v1308 = vpop.f32.mrb[0].mxu0
    %v1309 = vadd.f32 %v1123, %v1308
    %v1310 = vpop.f32.mrb[0].mxu0
    %v1311 = vadd.f32 %v1127, %v1310
    %1312 = vmatprep.mubr.bf16.mxu0 0
    %1313 = vmatmul.mubr.bf16.gmra.mrb[0].mxu0 %v1093
    %v1314 = vpop.f32.mrb[0].mxu0
    %v1315 = vadd.f32 %v1123, %v1314
    %v1316 = vpop.f32.mrb[0].mxu0
    %v1317 = vadd.f32 %v1127, %v1316
    %v1318 = vpop.f32.mrb[0].mxu0
    %v1319 = vadd.f32 %v1123, %v1318
    %v1320 = vpop.f32.mrb[0].mxu0
    %v1321 = vadd.f32 %v1127, %v1320
    %1322 = vmatprep.mubr.bf16.mxu0 0
    %1323 = vmatmul.mubr.bf16.gmra.mrb[0].mxu0 %v1094
    %v1324 = vpop.f32.mrb[0].mxu0
    %v1325 = vadd.f32 %v1123, %v1324
    %v1326 = vpop.f32.mrb[0].mxu0
    %v1327 = vadd.f32 %v1127, %v1326
    %v1328 = vpop.f32.mrb[0].mxu0
    %v1329 = vadd.f32 %v1123, %v1328
    %v1330 = vpop.f32.mrb[0].mxu0
    %v1331 = vadd.f32 %v1127, %v1330
    %1332 = vmatprep.mubr.bf16.mxu0 0
    %1333 = vmatmul.mubr.bf16.gmra.mrb[0].mxu0 %v1095
    %v1334 = vpop.f32.mrb[0].mxu0
    %v1335 = vadd.f32 %v1123, %v1334
    %v1336 = vpop.f32.mrb[0].mxu0
    %v1337 = vadd.f32 %v1127, %v1336
    %v1338 = vpop.f32.mrb[0].mxu0
    %v1339 = vadd.f32 %v1123, %v1338
    %v1340 = vpop.f32.mrb[0].mxu0
    %v1341 = vadd.f32 %v1127, %v1340
    %1342 = vmatprep.mubr.bf16.mxu0 0
    %1343 = vmatmul.mubr.bf16.gmra.mrb[0].mxu0 %v1096
    %v1344 = vpop.f32.mrb[0].mxu0
    %v1345 = vadd.f32 %v1123, %v1344
    %v1346 = vpop.f32.mrb[0].mxu0
    %v1347 = vadd.f32 %v1127, %v1346
    %v1348 = vpop.f32.mrb[0].mxu0
    %v1349 = vadd.f32 %v1123, %v1348
    %v1350 = vpop.f32.mrb[0].mxu0
    %v1351 = vadd.f32 %v1127, %v1350
    %1352 = vmatprep.mubr.bf16.mxu0 0
    %1353 = vmatmul.mubr.bf16.gmra.mrb[0].mxu0 %v1097
    %v1354 = vpop.f32.mrb[0].mxu0
    %v1355 = vadd.f32 %v1123, %v1354
    %v1356 = vpop.f32.mrb[0].mxu0
    %v1357 = vadd.f32 %v1127, %v1356
    %v1358 = vpop.f32.mrb[0].mxu0
    %v1359 = vadd.f32 %v1123, %v1358
    %v1360 = vpop.f32.mrb[0].mxu0
    %v1361 = vadd.f32 %v1127, %v1360
    %1362 = vmatprep.mubr.bf16.mxu0 0
    %1363 = vmatmul.mubr.bf16.gmra.mrb[0].mxu0 %v1098
    %v1364 = vpop.f32.mrb[0].mxu0
    %v1365 = vadd.f32 %v1123, %v1364
    %v1366 = vpop.f32.mrb[0].mxu0
    %v1367 = vadd.f32 %v1127, %v1366
    %v1368 = vpop.f32.mrb[0].mxu0
    %v1369 = vadd.f32 %v1123, %v1368
    %v1370 = vpop.f32.mrb[0].mxu0
    %v1371 = vadd.f32 %v1127, %v1370
    %1372 = vmatprep.mubr.bf16.mxu0 0
    %1373 = vmatmul.mubr.bf16.gmra.mrb[0].mxu0 %v1099
    %v1374 = vpop.f32.mrb[0].mxu0
    %v1375 = vadd.f32 %v1123, %v1374
    %v1376 = vpop.f32.mrb[0].mxu0
    %v1377 = vadd.f32 %v1127, %v1376
    %v1378 = vpop.f32.mrb[0].mxu0
    %v1379 = vadd.f32 %v1123, %v1378
    %v1380 = vpop.f32.mrb[0].mxu0
    %v1381 = vadd.f32 %v1127, %v1380
    %1382 = vmatprep.mubr.bf16.mxu0 0
    %1383 = vmatmul.mubr.bf16.gmra.mrb[0].mxu0 %v1100
    %v1384 = vpop.f32.mrb[0].mxu0
    %v1385 = vadd.f32 %v1123, %v1384
    %v1386 = vpop.f32.mrb[0].mxu0
    %v1387 = vadd.f32 %v1127, %v1386
    %v1388 = vpop.f32.mrb[0].mxu0
    %v1389 = vadd.f32 %v1123, %v1388
    %v1390 = vpop.f32.mrb[0].mxu0
    %v1391 = vadd.f32 %v1127, %v1390
    %1392 = vmatprep.mubr.bf16.mxu0 0
    %1393 = vmatmul.mubr.bf16.gmra.mrb[0].mxu0 %v1101
    %v1394 = vpop.f32.mrb[0].mxu0
    %v1395 = vadd.f32 %v1123, %v1394
    %v1396 = vpop.f32.mrb[0].mxu0
    %v1397 = vadd.f32 %v1127, %v1396
    %v1398 = vpop.f32.mrb[0].mxu0
    %v1399 = vadd.f32 %v1123, %v1398
    %v1400 = vpop.f32.mrb[0].mxu0
    %v1401 = vadd.f32 %v1127, %v1400
    %1402 = vdwg.mxu0
    %v1403 = vmax.f32 %v1245, 0.0
    %v1404 = vmax.f32 %v1247, 0.0
    %v1405 = vmax.f32 %v1249, 0.0
    %v1406 = vmax.f32 %v1251, 0.0
    %v1407 = vmax.f32 %v1255, 0.0
    %v1408 = vmax.f32 %v1257, 0.0
    %v1409 = vmax.f32 %v1259, 0.0
    %v1410 = vmax.f32 %v1261, 0.0
    %v1411 = vmax.f32 %v1265, 0.0
    %v1412 = vmax.f32 %v1267, 0.0
    %v1413 = vmax.f32 %v1269, 0.0
    %v1414 = vmax.f32 %v1271, 0.0
    %v1415 = vmax.f32 %v1275, 0.0
    %v1416 = vmax.f32 %v1277, 0.0
    %v1417 = vmax.f32 %v1279, 0.0
    %v1418 = vmax.f32 %v1281, 0.0
    %v1419 = vmax.f32 %v1285, 0.0
    %v1420 = vmax.f32 %v1287, 0.0
    %v1421 = vmax.f32 %v1289, 0.0
    %v1422 = vmax.f32 %v1291, 0.0
    %v1423 = vmax.f32 %v1295, 0.0
    %v1424 = vmax.f32 %v1297, 0.0
    %v1425 = vmax.f32 %v1299, 0.0
    %v1426 = vmax.f32 %v1301, 0.0
    %v1427 = vmax.f32 %v1305, 0.0
    %v1428 = vmax.f32 %v1307, 0.0
    %v1429 = vmax.f32 %v1309, 0.0
    %v1430 = vmax.f32 %v1311, 0.0
    %v1431 = vmax.f32 %v1315, 0.0
    %v1432 = vmax.f32 %v1317, 0.0
    %v1433 = vmax.f32 %v1319, 0.0
    %v1434 = vmax.f32 %v1321, 0.0
    %v1435 = vmax.f32 %v1325, 0.0
    %v1436 = vmax.f32 %v1327, 0.0
    %v1437 = vmax.f32 %v1329, 0.0
    %v1438 = vmax.f32 %v1331, 0.0
    %v1439 = vmax.f32 %v1335, 0.0
    %v1440 = vmax.f32 %v1337, 0.0
    %v1441 = vmax.f32 %v1339, 0.0
    %v1442 = vmax.f32 %v1341, 0.0
    %v1443 = vmax.f32 %v1345, 0.0
    %v1444 = vmax.f32 %v1347, 0.0
    %v1445 = vmax.f32 %v1349, 0.0
    %v1446 = vmax.f32 %v1351, 0.0
    %v1447 = vmax.f32 %v1355, 0.0
    %v1448 = vmax.f32 %v1357, 0.0
    %v1449 = vmax.f32 %v1359, 0.0
    %v1450 = vmax.f32 %v1361, 0.0
    %v1451 = vmax.f32 %v1365, 0.0
    %v1452 = vmax.f32 %v1367, 0.0
    %v1453 = vmax.f32 %v1369, 0.0
    %v1454 = vmax.f32 %v1371, 0.0
    %v1455 = vmax.f32 %v1375, 0.0
    %v1456 = vmax.f32 %v1377, 0.0
    %v1457 = vmax.f32 %v1379, 0.0
    %v1458 = vmax.f32 %v1381, 0.0
    %v1459 = vmax.f32 %v1385, 0.0
    %v1460 = vmax.f32 %v1387, 0.0
    %v1461 = vmax.f32 %v1389, 0.0
    %v1462 = vmax.f32 %v1391, 0.0
    %v1463 = vmax.f32 %v1395, 0.0
    %v1464 = vmax.f32 %v1397, 0.0
    %v1465 = vmax.f32 %v1399, 0.0
    %v1466 = vmax.f32 %v1401, 0.0
    %1467 = vst [vmem:[#allocation11] sm:$0xff] %v1403
    %1468 = vst [vmem:[#allocation11 + $0x8] sm:$0xff] %v1404
    %1469 = vst [vmem:[#allocation11 + $0x10] sm:$0xff] %v1405
    %1470 = vst [vmem:[#allocation11 + $0x18] sm:$0xff] %v1406
    %1471 = vst [vmem:[#allocation11 + $0x20] sm:$0xff] %v1407
    %1472 = vst [vmem:[#allocation11 + $0x28] sm:$0xff] %v1408
    %1473 = vst [vmem:[#allocation11 + $0x30] sm:$0xff] %v1409
    %1474 = vst [vmem:[#allocation11 + $0x38] sm:$0xff] %v1410
    %1475 = vst [vmem:[#allocation11 + $0x40] sm:$0xff] %v1411
    %1476 = vst [vmem:[#allocation11 + $0x48] sm:$0xff] %v1412
    %1477 = vst [vmem:[#allocation11 + $0x50] sm:$0xff] %v1413
    %1478 = vst [vmem:[#allocation11 + $0x58] sm:$0xff] %v1414
    %1479 = vst [vmem:[#allocation11 + $0x60] sm:$0xff] %v1415
    %1480 = vst [vmem:[#allocation11 + $0x68] sm:$0xff] %v1416
    %1481 = vst [vmem:[#allocation11 + $0x70] sm:$0xff] %v1417
    %1482 = vst [vmem:[#allocation11 + $0x78] sm:$0xff] %v1418
    %1483 = vst [vmem:[#allocation11 + $0x80] sm:$0xff] %v1419
    %1484 = vst [vmem:[#allocation11 + $0x88] sm:$0xff] %v1420
    %1485 = vst [vmem:[#allocation11 + $0x90] sm:$0xff] %v1421
    %1486 = vst [vmem:[#allocation11 + $0x98] sm:$0xff] %v1422
    %1487 = vst [vmem:[#allocation11 + $0xa0] sm:$0xff] %v1423
    %1488 = vst [vmem:[#allocation11 + $0xa8] sm:$0xff] %v1424
    %1489 = vst [vmem:[#allocation11 + $0xb0] sm:$0xff] %v1425
    %1490 = vst [vmem:[#allocation11 + $0xb8] sm:$0xff] %v1426
    %1491 = vst [vmem:[#allocation11 + $0xc0] sm:$0xff] %v1427
    %1492 = vst [vmem:[#allocation11 + $0xc8] sm:$0xff] %v1428
    %1493 = vst [vmem:[#allocation11 + $0xd0] sm:$0xff] %v1429
    %1494 = vst [vmem:[#allocation11 + $0xd8] sm:$0xff] %v1430
    %1495 = vst [vmem:[#allocation11 + $0xe0] sm:$0xff] %v1431
    %1496 = vst [vmem:[#allocation11 + $0xe8] sm:$0xff] %v1432
    %1497 = vst [vmem:[#allocation11 + $0xf0] sm:$0xff] %v1433
    %1498 = vst [vmem:[#allocation11 + $0xf8] sm:$0xff] %v1434
    %1499 = vst [vmem:[#allocation11 + $0x100] sm:$0xff] %v1435
    %1500 = vst [vmem:[#allocation11 + $0x108] sm:$0xff] %v1436
    %1501 = vst [vmem:[#allocation11 + $0x110] sm:$0xff] %v1437
    %1502 = vst [vmem:[#allocation11 + $0x118] sm:$0xff] %v1438
    %1503 = vst [vmem:[#allocation11 + $0x120] sm:$0xff] %v1439
    %1504 = vst [vmem:[#allocation11 + $0x128] sm:$0xff] %v1440
    %1505 = vst [vmem:[#allocation11 + $0x130] sm:$0xff] %v1441
    %1506 = vst [vmem:[#allocation11 + $0x138] sm:$0xff] %v1442
    %1507 = vst [vmem:[#allocation11 + $0x140] sm:$0xff] %v1443
    %1508 = vst [vmem:[#allocation11 + $0x148] sm:$0xff] %v1444
    %1509 = vst [vmem:[#allocation11 + $0x150] sm:$0xff] %v1445
    %1510 = vst [vmem:[#allocation11 + $0x158] sm:$0xff] %v1446
    %1511 = vst [vmem:[#allocation11 + $0x160] sm:$0xff] %v1447
    %1512 = vst [vmem:[#allocation11 + $0x168] sm:$0xff] %v1448
    %1513 = vst [vmem:[#allocation11 + $0x170] sm:$0xff] %v1449
    %1514 = vst [vmem:[#allocation11 + $0x178] sm:$0xff] %v1450
    %1515 = vst [vmem:[#allocation11 + $0x180] sm:$0xff] %v1451
    %1516 = vst [vmem:[#allocation11 + $0x188] sm:$0xff] %v1452
    %1517 = vst [vmem:[#allocation11 + $0x190] sm:$0xff] %v1453
    %1518 = vst [vmem:[#allocation11 + $0x198] sm:$0xff] %v1454
    %1519 = vst [vmem:[#allocation11 + $0x1a0] sm:$0xff] %v1455
    %1520 = vst [vmem:[#allocation11 + $0x1a8] sm:$0xff] %v1456
    %1521 = vst [vmem:[#allocation11 + $0x1b0] sm:$0xff] %v1457
    %1522 = vst [vmem:[#allocation11 + $0x1b8] sm:$0xff] %v1458
    %1523 = vst [vmem:[#allocation11 + $0x1c0] sm:$0xff] %v1459
    %1524 = vst [vmem:[#allocation11 + $0x1c8] sm:$0xff] %v1460
    %1525 = vst [vmem:[#allocation11 + $0x1d0] sm:$0xff] %v1461
    %1526 = vst [vmem:[#allocation11 + $0x1d8] sm:$0xff] %v1462
    %1527 = vst [vmem:[#allocation11 + $0x1e0] sm:$0xff] %v1463
    %1528 = vst [vmem:[#allocation11 + $0x1e8] sm:$0xff] %v1464
    %1529 = vst [vmem:[#allocation11 + $0x1f0] sm:$0xff] %v1465
    %1530 = vst [vmem:[#allocation11 + $0x1f8] sm:$0xff] %v1466
    // Predicated region
    $region58: #{tpu_custom_call.1} parent=1 // pred_check
      _
    $region59: #{tpu_custom_call.1} parent=1 // pred_check_branch
      %1532 = sbr.rel (0) target = $region61
    $region60: #{tpu_custom_call.1} parent=1 // pred_region
      %s1534 = ssub.s32 8192, 8192
      %1535 = vsyncadd [#allocation4], %s1534
      %s1536 = sshll.u32 [#allocation11], 4
      %s1537 = int_to_ptr.vmem [resolvable:$true] %s1536
      %1542 = dma.vmem_to_hbm [thread:$0]  %s1537, 8192, %s9, [#allocation4], 256, 256, 16
    $region61: #{tpu_custom_call.1} parent=1 // pred_fallthru
      _
    // Predicated region
    $region62: #{tpu_custom_call.1} parent=1 // pred_check
      _
    $region63: #{tpu_custom_call.1} parent=1 // pred_check_branch
      %1544 = sbr.rel (0) target = $region65
    $region64: #{tpu_custom_call.1} parent=1 // pred_region
      %1545 = dma.done [#allocation4], 8192
    $region65: #{tpu_custom_call.1} parent=1 // pred_fallthru
      _
    %1546 = vsyncpa [#allocation3], 1
    %1547 = vsyncpa [#allocation6], 1
    %1548 = vsyncpa [#allocation9], 1
    %1549 = vsyncpa [#allocation4], 1

</llo_original>
